<compile_context>
chip_gen: v7x
topology: tpu7x:2x2x1
jax: 0.10.0
libtpu: 0.0.40
codegen_flags: <defaults>
</compile_context>

<pallas_src>
import jax
import jax.numpy as jnp
from jax.experimental import pallas as pl
from jax.experimental.pallas import tpu as pltpu


# ----------------------------- kernel ------------------------------------------------------

def mlp_kernel(x_ref, w1_ref, b1_ref, w2_ref, b2_ref, w3_ref, b3_ref, o_ref):
    # fc1 + bias + ReLU   (dropout = identity in eval mode)
    x = x_ref[...].astype(jnp.bfloat16)
    h1 = jnp.dot(x, w1_ref[...], preferred_element_type=jnp.float32)
    h1 = jnp.maximum(h1 + b1_ref[...], 0.0)
    # fc2 + bias + ReLU
    h2 = jnp.dot(h1.astype(jnp.bfloat16), w2_ref[...], preferred_element_type=jnp.float32)
    h2 = jnp.maximum(h2 + b2_ref[...], 0.0)
    # fc3 (logits, padded to a lane-dense width)
    out = jnp.dot(h2.astype(jnp.bfloat16), w3_ref[...], preferred_element_type=jnp.float32)
    o_ref[...] = (out + b3_ref[...]).astype(o_ref.dtype)


# ----------------------------- one-time parameter prep (hoisted out of forward) ------------

def prepare_params(params):
    """Cast weights to bf16 and pad fc3 to a multiple of 128 lanes ONCE.

    Call at init / checkpoint-load time; reuse the result for every forward call so the
    per-inference HBM traffic is just the (already-bf16, already-padded) weights.
    """
    w1 = jnp.asarray(params["w1"], jnp.bfloat16)
    w2 = jnp.asarray(params["w2"], jnp.bfloat16)
    w3 = jnp.asarray(params["w3"], jnp.bfloat16)
    b1 = jnp.asarray(params["b1"], jnp.float32)
    b2 = jnp.asarray(params["b2"], jnp.float32)
    b3 = jnp.asarray(params["b3"], jnp.float32)

    nc = w3.shape[1]
    nc_pad = max(128, pl.cdiv(nc, 128) * 128)
    if nc_pad != nc:
        w3 = jnp.pad(w3, ((0, 0), (0, nc_pad - nc)))
        b3 = jnp.pad(b3, ((0, 0), (0, nc_pad - nc)))

    return {
        "w1": w1, "b1": b1, "w2": w2, "b2": b2, "w3": w3, "b3": b3,
        "num_classes": nc, "num_classes_padded": nc_pad,
    }


# ----------------------------- tiling / spec helpers ----------------------------------------

# Conservative scoped-VMEM budget: fits under v5e's 16 MiB default scoped VMEM and leaves
# ample headroom under v7x's 32 MiB default (64 MiB physical) without setting vmem_limit_bytes.
_VMEM_BUDGET_BYTES = 14 * 1024 * 1024


def _pick_batch_tile(B, in_dim, nc_pad, weight_bytes):
    """Whole batch as one tile when small; otherwise the largest 512/1024-row tile that keeps
    double-buffered x/out tiles + resident weights under the scoped-VMEM budget."""
    if B <= 512:
        return B
    for bt in (1024, 512):
        tile_bytes = 2 * bt * in_dim * 4 + 2 * bt * nc_pad * 4   # double-buffered x + out
        if bt <= B and tile_bytes + 2 * weight_bytes <= _VMEM_BUDGET_BYTES:
            return bt
    return min(B, 512)


def _resident_spec(shape, single_buffer):
    """Full-array block with a constant index map (resident across the grid).

    With single_buffer=True the spec requests 1-deep pipelining so the never-used second
    pipeline copy of each weight is not allocated (VMEM headroom for bigger batch tiles)."""
    if single_buffer:
        return pl.BlockSpec(shape, lambda i: (0, 0), pipeline_mode=pl.Buffered(1))
    return pl.BlockSpec(shape, lambda i: (0, 0))


# ----------------------------- forward ------------------------------------------------------

def _run_mlp(x, prep, bt, Bp, grid, semantics, out_dtype, single_buffer_weights):
    w1, b1 = prep["w1"], prep["b1"]
    w2, b2 = prep["w2"], prep["b2"]
    w3, b3 = prep["w3"], prep["b3"]
    in_dim, h1d = w1.shape
    h2d = w2.shape[1]
    nc_pad = w3.shape[1]

    weight_bytes = (w1.size + w2.size + w3.size) * 2 + (b1.size + b2.size + b3.size) * 4
    flops = 2 * Bp * (in_dim * h1d + h1d * h2d + h2d * nc_pad)
    bytes_accessed = (weight_bytes
                      + x.size * x.dtype.itemsize
                      + Bp * nc_pad * jnp.dtype(out_dtype).itemsize)

    return pl.pallas_call(
        mlp_kernel,
        out_shape=jax.ShapeDtypeStruct((Bp, nc_pad), out_dtype),
        grid_spec=pltpu.PrefetchScalarGridSpec(
            num_scalar_prefetch=0,
            grid=grid,
            in_specs=[
                pl.BlockSpec((bt, in_dim), lambda i: (i, 0)),                     # x tile
                _resident_spec((in_dim, h1d), single_buffer_weights),             # fc1 W
                _resident_spec((1, h1d), single_buffer_weights),                  # fc1 b
                _resident_spec((h1d, h2d), single_buffer_weights),                # fc2 W
                _resident_spec((1, h2d), single_buffer_weights),                  # fc2 b
                _resident_spec((h2d, nc_pad), single_buffer_weights),             # fc3 W (padded)
                _resident_spec((1, nc_pad), single_buffer_weights),               # fc3 b (padded)
            ],
            out_specs=pl.BlockSpec((bt, nc_pad), lambda i: (i, 0)),
        ),
        compiler_params=pltpu.CompilerParams(dimension_semantics=semantics),
        cost_estimate=pl.CostEstimate(
            flops=flops, transcendentals=0, bytes_accessed=bytes_accessed),
    )(x, w1, b1, w2, b2, w3, b3)


def feature_classifier_forward(x, prep, out_dtype=jnp.float32):
    """x: [B, input_size] (f32 or bf16 accepted). prep: output of prepare_params().

    out_dtype=jnp.bfloat16 halves output HBM bytes for the large-B DMA-bound regime
    (v6e/v7x); the default f32 matches the PyTorch module's output dtype.
    """
    B, in_dim = x.shape
    nc = prep["num_classes"]
    nc_pad = prep["num_classes_padded"]
    weight_bytes = (prep["w1"].size + prep["w2"].size + prep["w3"].size) * 2 \
        + (prep["b1"].size + prep["b2"].size + prep["b3"].size) * 4

    bt = _pick_batch_tile(B, in_dim, nc_pad, weight_bytes)
    Bp = pl.cdiv(B, bt) * bt
    if Bp != B:
        x = jnp.pad(x, ((0, Bp - B), (0, 0)))
    grid = (Bp // bt,)

    # Shard the batch axis across TensorCores whenever there is more than one tile.
    semantics = ("parallel",) if grid[0] >= 2 else ("arbitrary",)

    try:
        out = _run_mlp(x, prep, bt, Bp, grid, semantics, out_dtype,
                       single_buffer_weights=True)
    except Exception:
        # Fallback if this JAX/Mosaic build does not accept Buffered(1) resident specs.
        out = _run_mlp(x, prep, bt, Bp, grid, semantics, out_dtype,
                       single_buffer_weights=False)

    return out[:B, :nc]


# ----------------------------- init + pure-JAX reference ------------------------------------

def init_params(key, input_size, hidden1, hidden2, num_classes):
    """Deterministic init mimicking nn.Linear's uniform(-1/sqrt(fan_in), 1/sqrt(fan_in))."""
    ks = jax.random.split(key, 6)

    def linear(kw, kb, fan_in, fan_out):
        bound = 1.0 / jnp.sqrt(fan_in)
        w = jax.random.uniform(kw, (fan_in, fan_out), jnp.float32, -bound, bound)
        b = jax.random.uniform(kb, (1, fan_out), jnp.float32, -bound, bound)
        return w, b

    w1, b1 = linear(ks[0], ks[1], input_size, hidden1)
    w2, b2 = linear(ks[2], ks[3], hidden1, hidden2)
    w3, b3 = linear(ks[4], ks[5], hidden2, num_classes)
    return {"w1": w1, "b1": b1, "w2": w2, "b2": b2, "w3": w3, "b3": b3}


def reference_forward_bf16(x, p):
    """Pure-JAX reference using the same bf16-weight / f32-accumulate precision contract."""
    w1 = p["w1"].astype(jnp.bfloat16)
    w2 = p["w2"].astype(jnp.bfloat16)
    w3 = p["w3"].astype(jnp.bfloat16)
    h1 = jnp.maximum(
        jnp.dot(x.astype(jnp.bfloat16), w1, preferred_element_type=jnp.float32) + p["b1"], 0.0)
    h2 = jnp.maximum(
        jnp.dot(h1.astype(jnp.bfloat16), w2, preferred_element_type=jnp.float32) + p["b2"], 0.0)
    return jnp.dot(h2.astype(jnp.bfloat16), w3, preferred_element_type=jnp.float32) + p["b3"]


# ----------------------------- demo ----------------------------------------------------------

if __name__ == "__main__":
    # Module-default layer sizes (1024 -> 512 -> 256 -> 100), small batch.
    INPUT_SIZE, HIDDEN1, HIDDEN2, NUM_CLASSES = 1024, 512, 256, 100
    BATCH = 16

    key = jax.random.PRNGKey(0)
    k_x, k_p = jax.random.split(key)
    x = jax.random.normal(k_x, (BATCH, INPUT_SIZE), jnp.float32)
    raw_params = init_params(k_p, INPUT_SIZE, HIDDEN1, HIDDEN2, NUM_CLASSES)

    # One-time weight prep (bf16 cast + lane padding) -- hoisted out of the forward path.
    prep = prepare_params(raw_params)

    out = feature_classifier_forward(x, prep)
    out = jax.block_until_ready(out)

    ref = reference_forward_bf16(x, raw_params)
    assert out.shape == (BATCH, NUM_CLASSES)
    assert jnp.allclose(out, ref, atol=1e-2, rtol=1e-2)

    print("KERNEL_OK")
</pallas_src>

<mosaic_0001>
module attributes {stable_mosaic.version = 11 : i64} {
  func.func @mlp_kernel(%arg0: i32, %arg1: memref<16x1024xf32, #tpu.memory_space<vmem>>, %arg2: memref<1024x512xbf16, #tpu.memory_space<vmem>>, %arg3: memref<1x512xf32, #tpu.memory_space<vmem>>, %arg4: memref<512x256xbf16, #tpu.memory_space<vmem>>, %arg5: memref<1x256xf32, #tpu.memory_space<vmem>>, %arg6: memref<256x128xbf16, #tpu.memory_space<vmem>>, %arg7: memref<1x128xf32, #tpu.memory_space<vmem>>, %arg8: memref<16x128xf32, #tpu.memory_space<vmem>>) attributes {dimension_semantics = [#tpu.dimension_semantics<arbitrary>], iteration_bounds = array<i64: 1>, scalar_prefetch = 0 : i64, scratch_operands = 0 : i64, tpu.core_type = #tpu.core_type<tc>, window_params = [{transform_indices = @transform_0, window_bounds = array<i64: 16, 1024>}, {pipeline_mode = #tpu.pipeline_mode<synchronous>, transform_indices = @transform_1, window_bounds = array<i64: 1024, 512>}, {pipeline_mode = #tpu.pipeline_mode<synchronous>, transform_indices = @transform_2, window_bounds = array<i64: 1, 512>}, {pipeline_mode = #tpu.pipeline_mode<synchronous>, transform_indices = @transform_3, window_bounds = array<i64: 512, 256>}, {pipeline_mode = #tpu.pipeline_mode<synchronous>, transform_indices = @transform_4, window_bounds = array<i64: 1, 256>}, {pipeline_mode = #tpu.pipeline_mode<synchronous>, transform_indices = @transform_5, window_bounds = array<i64: 256, 128>}, {pipeline_mode = #tpu.pipeline_mode<synchronous>, transform_indices = @transform_6, window_bounds = array<i64: 1, 128>}, {transform_indices = @transform_7, window_bounds = array<i64: 16, 128>}]} {
    %c0 = arith.constant 0 : index
    %c0_0 = arith.constant 0 : index
    %0 = vector.load %arg1[%c0, %c0_0] : memref<16x1024xf32, #tpu.memory_space<vmem>>, vector<16x1024xf32>
    %1 = arith.truncf %0 : vector<16x1024xf32> to vector<16x1024xbf16>
    %c0_1 = arith.constant 0 : index
    %c0_2 = arith.constant 0 : index
    %2 = vector.load %arg2[%c0_1, %c0_2] : memref<1024x512xbf16, #tpu.memory_space<vmem>>, vector<1024x512xbf16>
    %cst = arith.constant dense<0.000000e+00> : vector<16x512xf32>
    %3 = tpu.matmul %1, %2, %cst {dimension_numbers = #tpu.dot_dimension_numbers<[1], [0], [0], [1], [0, 0, 1, 1], [], []>} : vector<16x1024xbf16>, vector<1024x512xbf16>, vector<16x512xf32> -> vector<16x512xf32>
    %c0_3 = arith.constant 0 : index
    %c0_4 = arith.constant 0 : index
    %4 = vector.load %arg3[%c0_3, %c0_4] : memref<1x512xf32, #tpu.memory_space<vmem>>, vector<1x512xf32>
    %5 = vector.broadcast %4 : vector<1x512xf32> to vector<16x512xf32>
    %6 = arith.addf %3, %5 : vector<16x512xf32>
    %cst_5 = arith.constant 0.000000e+00 : f32
    %7 = vector.broadcast %cst_5 : f32 to vector<16x512xf32>
    %8 = arith.maximumf %6, %7 : vector<16x512xf32>
    %9 = arith.truncf %8 : vector<16x512xf32> to vector<16x512xbf16>
    %c0_6 = arith.constant 0 : index
    %c0_7 = arith.constant 0 : index
    %10 = vector.load %arg4[%c0_6, %c0_7] : memref<512x256xbf16, #tpu.memory_space<vmem>>, vector<512x256xbf16>
    %cst_8 = arith.constant dense<0.000000e+00> : vector<16x256xf32>
    %11 = tpu.matmul %9, %10, %cst_8 {dimension_numbers = #tpu.dot_dimension_numbers<[1], [0], [0], [1], [0, 0, 1, 1], [], []>} : vector<16x512xbf16>, vector<512x256xbf16>, vector<16x256xf32> -> vector<16x256xf32>
    %c0_9 = arith.constant 0 : index
    %c0_10 = arith.constant 0 : index
    %12 = vector.load %arg5[%c0_9, %c0_10] : memref<1x256xf32, #tpu.memory_space<vmem>>, vector<1x256xf32>
    %13 = vector.broadcast %12 : vector<1x256xf32> to vector<16x256xf32>
    %14 = arith.addf %11, %13 : vector<16x256xf32>
    %cst_11 = arith.constant 0.000000e+00 : f32
    %15 = vector.broadcast %cst_11 : f32 to vector<16x256xf32>
    %16 = arith.maximumf %14, %15 : vector<16x256xf32>
    %17 = arith.truncf %16 : vector<16x256xf32> to vector<16x256xbf16>
    %c0_12 = arith.constant 0 : index
    %c0_13 = arith.constant 0 : index
    %18 = vector.load %arg6[%c0_12, %c0_13] : memref<256x128xbf16, #tpu.memory_space<vmem>>, vector<256x128xbf16>
    %cst_14 = arith.constant dense<0.000000e+00> : vector<16x128xf32>
    %19 = tpu.matmul %17, %18, %cst_14 {dimension_numbers = #tpu.dot_dimension_numbers<[1], [0], [0], [1], [0, 0, 1, 1], [], []>} : vector<16x256xbf16>, vector<256x128xbf16>, vector<16x128xf32> -> vector<16x128xf32>
    %c0_15 = arith.constant 0 : index
    %c0_16 = arith.constant 0 : index
    %20 = vector.load %arg7[%c0_15, %c0_16] : memref<1x128xf32, #tpu.memory_space<vmem>>, vector<1x128xf32>
    %21 = vector.broadcast %20 : vector<1x128xf32> to vector<16x128xf32>
    %22 = arith.addf %19, %21 : vector<16x128xf32>
    %c0_17 = arith.constant 0 : index
    %c0_18 = arith.constant 0 : index
    %23 = vector.load %arg8[%c0_17, %c0_18] : memref<16x128xf32, #tpu.memory_space<vmem>>, vector<16x128xf32>
    tpu.vector_store %arg8[%c0_17, %c0_18], %22 {strides = array<i32>} : memref<16x128xf32, #tpu.memory_space<vmem>>, vector<16x128xf32>,
    return
  }
  func.func @transform_0(%arg0: i32) -> (i32, i32) {
    %c0_i32 = arith.constant 0 : i32
    %c0_i32_0 = arith.constant 0 : i32
    return %arg0, %c0_i32 : i32, i32
  }
  func.func @transform_1(%arg0: i32) -> (i32, i32) {
    %c0_i32 = arith.constant 0 : i32
    %c0_i32_0 = arith.constant 0 : i32
    %c0_i32_1 = arith.constant 0 : i32
    return %c0_i32, %c0_i32_0 : i32, i32
  }
  func.func @transform_2(%arg0: i32) -> (i32, i32) {
    %c0_i32 = arith.constant 0 : i32
    %c0_i32_0 = arith.constant 0 : i32
    %c0_i32_1 = arith.constant 0 : i32
    return %c0_i32, %c0_i32_0 : i32, i32
  }
  func.func @transform_3(%arg0: i32) -> (i32, i32) {
    %c0_i32 = arith.constant 0 : i32
    %c0_i32_0 = arith.constant 0 : i32
    %c0_i32_1 = arith.constant 0 : i32
    return %c0_i32, %c0_i32_0 : i32, i32
  }
  func.func @transform_4(%arg0: i32) -> (i32, i32) {
    %c0_i32 = arith.constant 0 : i32
    %c0_i32_0 = arith.constant 0 : i32
    %c0_i32_1 = arith.constant 0 : i32
    return %c0_i32, %c0_i32_0 : i32, i32
  }
  func.func @transform_5(%arg0: i32) -> (i32, i32) {
    %c0_i32 = arith.constant 0 : i32
    %c0_i32_0 = arith.constant 0 : i32
    %c0_i32_1 = arith.constant 0 : i32
    return %c0_i32, %c0_i32_0 : i32, i32
  }
  func.func @transform_6(%arg0: i32) -> (i32, i32) {
    %c0_i32 = arith.constant 0 : i32
    %c0_i32_0 = arith.constant 0 : i32
    %c0_i32_1 = arith.constant 0 : i32
    return %c0_i32, %c0_i32_0 : i32, i32
  }
  func.func @transform_7(%arg0: i32) -> (i32, i32) {
    %c0_i32 = arith.constant 0 : i32
    %c0_i32_0 = arith.constant 0 : i32
    return %arg0, %c0_i32 : i32, i32
  }
}

module attributes {stable_mosaic.version = 11 : i64} {
  func.func @mlp_kernel(%arg0: i32, %arg1: memref<16x1024xf32, #tpu.memory_space<vmem>>, %arg2: memref<1024x512xbf16, #tpu.memory_space<vmem>>, %arg3: memref<1x512xf32, #tpu.memory_space<vmem>>, %arg4: memref<512x256xbf16, #tpu.memory_space<vmem>>, %arg5: memref<1x256xf32, #tpu.memory_space<vmem>>, %arg6: memref<256x128xbf16, #tpu.memory_space<vmem>>, %arg7: memref<1x128xf32, #tpu.memory_space<vmem>>, %arg8: memref<16x128xf32, #tpu.memory_space<vmem>>) attributes {dimension_semantics = [#tpu.dimension_semantics<arbitrary>], iteration_bounds = array<i64: 1>, scalar_prefetch = 0 : i64, scratch_operands = 0 : i64, tpu.core_type = #tpu.core_type<tc>, window_params = [{transform_indices = @transform_0, window_bounds = array<i64: 16, 1024>}, {pipeline_mode = #tpu.pipeline_mode<synchronous>, transform_indices = @transform_1, window_bounds = array<i64: 1024, 512>}, {pipeline_mode = #tpu.pipeline_mode<synchronous>, transform_indices = @transform_2, window_bounds = array<i64: 1, 512>}, {pipeline_mode = #tpu.pipeline_mode<synchronous>, transform_indices = @transform_3, window_bounds = array<i64: 512, 256>}, {pipeline_mode = #tpu.pipeline_mode<synchronous>, transform_indices = @transform_4, window_bounds = array<i64: 1, 256>}, {pipeline_mode = #tpu.pipeline_mode<synchronous>, transform_indices = @transform_5, window_bounds = array<i64: 256, 128>}, {pipeline_mode = #tpu.pipeline_mode<synchronous>, transform_indices = @transform_6, window_bounds = array<i64: 1, 128>}, {transform_indices = @transform_7, window_bounds = array<i64: 16, 128>}]} {
    %c0 = arith.constant 0 : index
    %c0_0 = arith.constant 0 : index
    %0 = vector.load %arg1[%c0, %c0_0] : memref<16x1024xf32, #tpu.memory_space<vmem>>, vector<16x1024xf32>
    %1 = arith.truncf %0 : vector<16x1024xf32> to vector<16x1024xbf16>
    %c0_1 = arith.constant 0 : index
    %c0_2 = arith.constant 0 : index
    %2 = vector.load %arg2[%c0_1, %c0_2] : memref<1024x512xbf16, #tpu.memory_space<vmem>>, vector<1024x512xbf16>
    %cst = arith.constant dense<0.000000e+00> : vector<16x512xf32>
    %3 = tpu.matmul %1, %2, %cst {dimension_numbers = #tpu.dot_dimension_numbers<[1], [0], [0], [1], [0, 0, 1, 1], [], []>} : vector<16x1024xbf16>, vector<1024x512xbf16>, vector<16x512xf32> -> vector<16x512xf32>
    %c0_3 = arith.constant 0 : index
    %c0_4 = arith.constant 0 : index
    %4 = vector.load %arg3[%c0_3, %c0_4] : memref<1x512xf32, #tpu.memory_space<vmem>>, vector<1x512xf32>
    %5 = vector.broadcast %4 : vector<1x512xf32> to vector<16x512xf32>
    %6 = arith.addf %3, %5 : vector<16x512xf32>
    %cst_5 = arith.constant 0.000000e+00 : f32
    %7 = vector.broadcast %cst_5 : f32 to vector<16x512xf32>
    %8 = arith.maximumf %6, %7 : vector<16x512xf32>
    %9 = arith.truncf %8 : vector<16x512xf32> to vector<16x512xbf16>
    %c0_6 = arith.constant 0 : index
    %c0_7 = arith.constant 0 : index
    %10 = vector.load %arg4[%c0_6, %c0_7] : memref<512x256xbf16, #tpu.memory_space<vmem>>, vector<512x256xbf16>
    %cst_8 = arith.constant dense<0.000000e+00> : vector<16x256xf32>
    %11 = tpu.matmul %9, %10, %cst_8 {dimension_numbers = #tpu.dot_dimension_numbers<[1], [0], [0], [1], [0, 0, 1, 1], [], []>} : vector<16x512xbf16>, vector<512x256xbf16>, vector<16x256xf32> -> vector<16x256xf32>
    %c0_9 = arith.constant 0 : index
    %c0_10 = arith.constant 0 : index
    %12 = vector.load %arg5[%c0_9, %c0_10] : memref<1x256xf32, #tpu.memory_space<vmem>>, vector<1x256xf32>
    %13 = vector.broadcast %12 : vector<1x256xf32> to vector<16x256xf32>
    %14 = arith.addf %11, %13 : vector<16x256xf32>
    %cst_11 = arith.constant 0.000000e+00 : f32
    %15 = vector.broadcast %cst_11 : f32 to vector<16x256xf32>
    %16 = arith.maximumf %14, %15 : vector<16x256xf32>
    %17 = arith.truncf %16 : vector<16x256xf32> to vector<16x256xbf16>
    %c0_12 = arith.constant 0 : index
    %c0_13 = arith.constant 0 : index
    %18 = vector.load %arg6[%c0_12, %c0_13] : memref<256x128xbf16, #tpu.memory_space<vmem>>, vector<256x128xbf16>
    %cst_14 = arith.constant dense<0.000000e+00> : vector<16x128xf32>
    %19 = tpu.matmul %17, %18, %cst_14 {dimension_numbers = #tpu.dot_dimension_numbers<[1], [0], [0], [1], [0, 0, 1, 1], [], []>} : vector<16x256xbf16>, vector<256x128xbf16>, vector<16x128xf32> -> vector<16x128xf32>
    %c0_15 = arith.constant 0 : index
    %c0_16 = arith.constant 0 : index
    %20 = vector.load %arg7[%c0_15, %c0_16] : memref<1x128xf32, #tpu.memory_space<vmem>>, vector<1x128xf32>
    %21 = vector.broadcast %20 : vector<1x128xf32> to vector<16x128xf32>
    %22 = arith.addf %19, %21 : vector<16x128xf32>
    %c0_17 = arith.constant 0 : index
    %c0_18 = arith.constant 0 : index
    %23 = vector.load %arg8[%c0_17, %c0_18] : memref<16x128xf32, #tpu.memory_space<vmem>>, vector<16x128xf32>
    tpu.vector_store %arg8[%c0_17, %c0_18], %22 {strides = array<i32>} : memref<16x128xf32, #tpu.memory_space<vmem>>, vector<16x128xf32>,
    return
  }
  func.func @transform_0(%arg0: i32) -> (i32, i32) {
    %c0_i32 = arith.constant 0 : i32
    %c0_i32_0 = arith.constant 0 : i32
    return %arg0, %c0_i32 : i32, i32
  }
  func.func @transform_1(%arg0: i32) -> (i32, i32) {
    %c0_i32 = arith.constant 0 : i32
    %c0_i32_0 = arith.constant 0 : i32
    %c0_i32_1 = arith.constant 0 : i32
    return %c0_i32, %c0_i32_0 : i32, i32
  }
  func.func @transform_2(%arg0: i32) -> (i32, i32) {
    %c0_i32 = arith.constant 0 : i32
    %c0_i32_0 = arith.constant 0 : i32
    %c0_i32_1 = arith.constant 0 : i32
    return %c0_i32, %c0_i32_0 : i32, i32
  }
  func.func @transform_3(%arg0: i32) -> (i32, i32) {
    %c0_i32 = arith.constant 0 : i32
    %c0_i32_0 = arith.constant 0 : i32
    %c0_i32_1 = arith.constant 0 : i32
    return %c0_i32, %c0_i32_0 : i32, i32
  }
  func.func @transform_4(%arg0: i32) -> (i32, i32) {
    %c0_i32 = arith.constant 0 : i32
    %c0_i32_0 = arith.constant 0 : i32
    %c0_i32_1 = arith.constant 0 : i32
    return %c0_i32, %c0_i32_0 : i32, i32
  }
  func.func @transform_5(%arg0: i32) -> (i32, i32) {
    %c0_i32 = arith.constant 0 : i32
    %c0_i32_0 = arith.constant 0 : i32
    %c0_i32_1 = arith.constant 0 : i32
    return %c0_i32, %c0_i32_0 : i32, i32
  }
  func.func @transform_6(%arg0: i32) -> (i32, i32) {
    %c0_i32 = arith.constant 0 : i32
    %c0_i32_0 = arith.constant 0 : i32
    %c0_i32_1 = arith.constant 0 : i32
    return %c0_i32, %c0_i32_0 : i32, i32
  }
  func.func @transform_7(%arg0: i32) -> (i32, i32) {
    %c0_i32 = arith.constant 0 : i32
    %c0_i32_0 = arith.constant 0 : i32
    return %arg0, %c0_i32 : i32, i32
  }
}

</mosaic_0001>

<llo_original>
// kernel: tpu_custom_call.1
$region0: #{tpu_custom_call.1}
  #allocation0 [shape = 'u32[]', space=smem, size = 0x4, offset = 0x4, fixed_abs, tag = 'smem constant byte address 0x4 - core index']
  #allocation1 [shape = 'u32[144,128]{1,0:T(1,128)}', space=vmem, size = 0x12000, scoped, tag = 'internal scratch']
  %s0 = inlined_call_operand.hbm [shape: f32[16,1024], index: 0, kind: input, shape index: {}]
  %s1 = inlined_call_operand.hbm [shape: bf16[1024,512], index: 1, kind: input, shape index: {}]
  %s2 = inlined_call_operand.vmem [shape: f32[1,512], index: 2, kind: input, shape index: {}]
  %s3 = inlined_call_operand.hbm [shape: bf16[512,256], index: 3, kind: input, shape index: {}]
  %s4 = inlined_call_operand.vmem [shape: f32[1,256], index: 4, kind: input, shape index: {}]
  %s5 = inlined_call_operand.hbm [shape: bf16[256,128], index: 5, kind: input, shape index: {}]
  %s6 = inlined_call_operand.vmem [shape: f32[1,128], index: 6, kind: input, shape index: {}]
  %s7 = inlined_call_operand.hbm [shape: f32[16,128], index: 7, kind: output, shape index: {}]
  %s8 = sld [smem:[#allocation0]]
  $region54: #{tpu_custom_call.1} parent=0
    _
  %s10 = ssub.s32 1, %s8
  %s11 = scalar_select 0, %s10, %s8
  $region1: #{tpu_custom_call.1} parent=0
    #allocation2 [shape = 'u8[65536]{0}', space=vmem, size = 0x10000, scoped, tag = 'input window, operand 0, single buffered']
    #allocation3 [shape = 's32[1]{0}', space=sflag, size = 0x4, scoped, tag = 'scoped memory for tpu_custom_call.1']
    #allocation4 [shape = 's32[1]{0}', space=sflag, size = 0x4, scoped, tag = 'scoped memory for tpu_custom_call.1']
    #allocation5 [shape = 'u8[1048576]{0}', space=vmem, size = 0x100000, scoped, tag = 'input window, operand 1, single buffered']
    #allocation6 [shape = 's32[1]{0}', space=sflag, size = 0x4, scoped, tag = 'scoped memory for tpu_custom_call.1']
    #allocation7 [shape = 'u8[262144]{0}', space=vmem, size = 0x40000, scoped, tag = 'input window, operand 3, single buffered']
    #allocation8 [shape = 'u8[65536]{0}', space=vmem, size = 0x10000, scoped, tag = 'input window, operand 5, single buffered']
    #allocation9 [shape = 's32[1]{0}', space=sflag, size = 0x4, scoped, tag = 'scoped memory for tpu_custom_call.1']
    #allocation10 [shape = 'u8[8192]{0}', space=vmem, size = 0x2000, scoped, tag = 'output window, operand 0, single buffered']
    %12 = vsyncpa [#allocation3], 0
    %13 = vsyncpa [#allocation6], 0
    %14 = vsyncpa [#allocation9], 0
    %15 = vsyncpa [#allocation4], 0
    // Predicated region
    $region2: #{tpu_custom_call.1} parent=1 // pred_check
      _
    $region3: #{tpu_custom_call.1} parent=1 // pred_check_branch
      %17 = sbr.rel (0) target = $region5
    $region4: #{tpu_custom_call.1} parent=1 // pred_region
      %s19 = ssub.s32 2048, 2048
      %20 = vsyncadd [#allocation3], %s19
      %s21 = sshll.u32 [#allocation2], 4
      %s22 = int_to_ptr.vmem [resolvable:$true] %s21
      %27 = dma.hbm_to_vmem [thread:$0]  %s0, 2048, %s22, [#allocation3], 1024, 1024, 64
    $region5: #{tpu_custom_call.1} parent=1 // pred_fallthru
      _
    // Predicated region
    $region6: #{tpu_custom_call.1} parent=1 // pred_check
      _
    $region7: #{tpu_custom_call.1} parent=1 // pred_check_branch
      %29 = sbr.rel (0) target = $region9
    $region8: #{tpu_custom_call.1} parent=1 // pred_region
      %s31 = ssub.s32 32768, 32768
      %32 = vsyncadd [#allocation6], %s31
      %s33 = sshll.u32 [#allocation5], 4
      %s34 = int_to_ptr.vmem [resolvable:$true] %s33
      %39 = dma.hbm_to_vmem [thread:$0]  %s1, 32768, %s34, [#allocation6], 256, 256, 16
    $region9: #{tpu_custom_call.1} parent=1 // pred_fallthru
      _
    // Predicated region
    $region10: #{tpu_custom_call.1} parent=1 // pred_check
      _
    $region11: #{tpu_custom_call.1} parent=1 // pred_check_branch
      %41 = sbr.rel (0) target = $region13
    $region12: #{tpu_custom_call.1} parent=1 // pred_region
      _
    $region13: #{tpu_custom_call.1} parent=1 // pred_fallthru
      _
    // Predicated region
    $region14: #{tpu_custom_call.1} parent=1 // pred_check
      _
    $region15: #{tpu_custom_call.1} parent=1 // pred_check_branch
      %43 = sbr.rel (0) target = $region17
    $region16: #{tpu_custom_call.1} parent=1 // pred_region
      %s45 = ssub.s32 8192, 8192
      %46 = vsyncadd [#allocation6], %s45
      %s47 = sshll.u32 [#allocation7], 4
      %s48 = int_to_ptr.vmem [resolvable:$true] %s47
      %53 = dma.hbm_to_vmem [thread:$0]  %s3, 8192, %s48, [#allocation6], 128, 128, 8
    $region17: #{tpu_custom_call.1} parent=1 // pred_fallthru
      _
    // Predicated region
    $region18: #{tpu_custom_call.1} parent=1 // pred_check
      _
    $region19: #{tpu_custom_call.1} parent=1 // pred_check_branch
      %55 = sbr.rel (0) target = $region21
    $region20: #{tpu_custom_call.1} parent=1 // pred_region
      _
    $region21: #{tpu_custom_call.1} parent=1 // pred_fallthru
      _
    // Predicated region
    $region22: #{tpu_custom_call.1} parent=1 // pred_check
      _
    $region23: #{tpu_custom_call.1} parent=1 // pred_check_branch
      %57 = sbr.rel (0) target = $region25
    $region24: #{tpu_custom_call.1} parent=1 // pred_region
      %s59 = ssub.s32 2048, 2048
      %60 = vsyncadd [#allocation9], %s59
      %s61 = sshll.u32 [#allocation8], 4
      %s62 = int_to_ptr.vmem [resolvable:$true] %s61
      %67 = dma.hbm_to_vmem [thread:$0]  %s5, 2048, %s62, [#allocation9], 64, 64, 4
    $region25: #{tpu_custom_call.1} parent=1 // pred_fallthru
      _
    // Predicated region
    $region26: #{tpu_custom_call.1} parent=1 // pred_check
      _
    $region27: #{tpu_custom_call.1} parent=1 // pred_check_branch
      %69 = sbr.rel (0) target = $region29
    $region28: #{tpu_custom_call.1} parent=1 // pred_region
      _
    $region29: #{tpu_custom_call.1} parent=1 // pred_fallthru
      _
    // Predicated region
    $region30: #{tpu_custom_call.1} parent=1 // pred_check
      _
    $region31: #{tpu_custom_call.1} parent=1 // pred_check_branch
      %71 = sbr.rel (0) target = $region33
    $region32: #{tpu_custom_call.1} parent=1 // pred_region
      %72 = dma.done [#allocation3], 2048
    $region33: #{tpu_custom_call.1} parent=1 // pred_fallthru
      _
    // Predicated region
    $region34: #{tpu_custom_call.1} parent=1 // pred_check
      _
    $region35: #{tpu_custom_call.1} parent=1 // pred_check_branch
      %74 = sbr.rel (0) target = $region37
    $region36: #{tpu_custom_call.1} parent=1 // pred_region
      %75 = dma.done [#allocation6], 32768
    $region37: #{tpu_custom_call.1} parent=1 // pred_fallthru
      _
    // Predicated region
    $region38: #{tpu_custom_call.1} parent=1 // pred_check
      _
    $region39: #{tpu_custom_call.1} parent=1 // pred_check_branch
      %77 = sbr.rel (0) target = $region41
    $region40: #{tpu_custom_call.1} parent=1 // pred_region
      %78 = dma.done [#allocation6], 8192
    $region41: #{tpu_custom_call.1} parent=1 // pred_fallthru
      _
    // Predicated region
    $region42: #{tpu_custom_call.1} parent=1 // pred_check
      _
    $region43: #{tpu_custom_call.1} parent=1 // pred_check_branch
      %80 = sbr.rel (0) target = $region45
    $region44: #{tpu_custom_call.1} parent=1 // pred_region
      %81 = dma.done [#allocation9], 2048
    $region45: #{tpu_custom_call.1} parent=1 // pred_fallthru
      _
    %v83 = vld [vmem:[#allocation2] sm:$0xff]
    %v84 = vld [vmem:[#allocation2 + $0x8] sm:$0xff]
    %v85 = vld [vmem:[#allocation2 + $0x10] sm:$0xff]
    %v86 = vld [vmem:[#allocation2 + $0x18] sm:$0xff]
    %v87 = vld [vmem:[#allocation2 + $0x20] sm:$0xff]
    %v88 = vld [vmem:[#allocation2 + $0x28] sm:$0xff]
    %v89 = vld [vmem:[#allocation2 + $0x30] sm:$0xff]
    %v90 = vld [vmem:[#allocation2 + $0x38] sm:$0xff]
    %v91 = vld [vmem:[#allocation2 + $0x40] sm:$0xff]
    %v92 = vld [vmem:[#allocation2 + $0x48] sm:$0xff]
    %v93 = vld [vmem:[#allocation2 + $0x50] sm:$0xff]
    %v94 = vld [vmem:[#allocation2 + $0x58] sm:$0xff]
    %v95 = vld [vmem:[#allocation2 + $0x60] sm:$0xff]
    %v96 = vld [vmem:[#allocation2 + $0x68] sm:$0xff]
    %v97 = vld [vmem:[#allocation2 + $0x70] sm:$0xff]
    %v98 = vld [vmem:[#allocation2 + $0x78] sm:$0xff]
    %v99 = vpack.c.bf16 %v91, %v83
    %v100 = vpack.c.bf16 %v92, %v84
    %v101 = vpack.c.bf16 %v93, %v85
    %v102 = vpack.c.bf16 %v94, %v86
    %v103 = vpack.c.bf16 %v95, %v87
    %v104 = vpack.c.bf16 %v96, %v88
    %v105 = vpack.c.bf16 %v97, %v89
    %v106 = vpack.c.bf16 %v98, %v90
    %v107 = vld [vmem:[#allocation5] sm:$0xff]
    %v108 = vld [vmem:[#allocation5 + $0x8] sm:$0xff]
    %v109 = vld [vmem:[#allocation5 + $0x10] sm:$0xff]
    %v110 = vld [vmem:[#allocation5 + $0x18] sm:$0xff]
    %v111 = vld [vmem:[#allocation5 + $0x20] sm:$0xff]
    %v112 = vld [vmem:[#allocation5 + $0x28] sm:$0xff]
    %v113 = vld [vmem:[#allocation5 + $0x30] sm:$0xff]
    %v114 = vld [vmem:[#allocation5 + $0x38] sm:$0xff]
    %v115 = vld [vmem:[#allocation5 + $0x40] sm:$0xff]
    %v116 = vld [vmem:[#allocation5 + $0x48] sm:$0xff]
    %v117 = vld [vmem:[#allocation5 + $0x50] sm:$0xff]
    %v118 = vld [vmem:[#allocation5 + $0x58] sm:$0xff]
    %v119 = vld [vmem:[#allocation5 + $0x60] sm:$0xff]
    %v120 = vld [vmem:[#allocation5 + $0x68] sm:$0xff]
    %v121 = vld [vmem:[#allocation5 + $0x70] sm:$0xff]
    %v122 = vld [vmem:[#allocation5 + $0x78] sm:$0xff]
    %v123 = vld [vmem:[#allocation5 + $0x80] sm:$0xff]
    %v124 = vld [vmem:[#allocation5 + $0x88] sm:$0xff]
    %v125 = vld [vmem:[#allocation5 + $0x90] sm:$0xff]
    %v126 = vld [vmem:[#allocation5 + $0x98] sm:$0xff]
    %v127 = vld [vmem:[#allocation5 + $0xa0] sm:$0xff]
    %v128 = vld [vmem:[#allocation5 + $0xa8] sm:$0xff]
    %v129 = vld [vmem:[#allocation5 + $0xb0] sm:$0xff]
    %v130 = vld [vmem:[#allocation5 + $0xb8] sm:$0xff]
    %v131 = vld [vmem:[#allocation5 + $0xc0] sm:$0xff]
    %v132 = vld [vmem:[#allocation5 + $0xc8] sm:$0xff]
    %v133 = vld [vmem:[#allocation5 + $0xd0] sm:$0xff]
    %v134 = vld [vmem:[#allocation5 + $0xd8] sm:$0xff]
    %v135 = vld [vmem:[#allocation5 + $0xe0] sm:$0xff]
    %v136 = vld [vmem:[#allocation5 + $0xe8] sm:$0xff]
    %v137 = vld [vmem:[#allocation5 + $0xf0] sm:$0xff]
    %v138 = vld [vmem:[#allocation5 + $0xf8] sm:$0xff]
    %v139 = vld [vmem:[#allocation5 + $0x100] sm:$0xff]
    %v140 = vld [vmem:[#allocation5 + $0x108] sm:$0xff]
    %v141 = vld [vmem:[#allocation5 + $0x110] sm:$0xff]
    %v142 = vld [vmem:[#allocation5 + $0x118] sm:$0xff]
    %v143 = vld [vmem:[#allocation5 + $0x120] sm:$0xff]
    %v144 = vld [vmem:[#allocation5 + $0x128] sm:$0xff]
    %v145 = vld [vmem:[#allocation5 + $0x130] sm:$0xff]
    %v146 = vld [vmem:[#allocation5 + $0x138] sm:$0xff]
    %v147 = vld [vmem:[#allocation5 + $0x140] sm:$0xff]
    %v148 = vld [vmem:[#allocation5 + $0x148] sm:$0xff]
    %v149 = vld [vmem:[#allocation5 + $0x150] sm:$0xff]
    %v150 = vld [vmem:[#allocation5 + $0x158] sm:$0xff]
    %v151 = vld [vmem:[#allocation5 + $0x160] sm:$0xff]
    %v152 = vld [vmem:[#allocation5 + $0x168] sm:$0xff]
    %v153 = vld [vmem:[#allocation5 + $0x170] sm:$0xff]
    %v154 = vld [vmem:[#allocation5 + $0x178] sm:$0xff]
    %v155 = vld [vmem:[#allocation5 + $0x180] sm:$0xff]
    %v156 = vld [vmem:[#allocation5 + $0x188] sm:$0xff]
    %v157 = vld [vmem:[#allocation5 + $0x190] sm:$0xff]
    %v158 = vld [vmem:[#allocation5 + $0x198] sm:$0xff]
    %v159 = vld [vmem:[#allocation5 + $0x1a0] sm:$0xff]
    %v160 = vld [vmem:[#allocation5 + $0x1a8] sm:$0xff]
    %v161 = vld [vmem:[#allocation5 + $0x1b0] sm:$0xff]
    %v162 = vld [vmem:[#allocation5 + $0x1b8] sm:$0xff]
    %v163 = vld [vmem:[#allocation5 + $0x1c0] sm:$0xff]
    %v164 = vld [vmem:[#allocation5 + $0x1c8] sm:$0xff]
    %v165 = vld [vmem:[#allocation5 + $0x1d0] sm:$0xff]
    %v166 = vld [vmem:[#allocation5 + $0x1d8] sm:$0xff]
    %v167 = vld [vmem:[#allocation5 + $0x1e0] sm:$0xff]
    %v168 = vld [vmem:[#allocation5 + $0x1e8] sm:$0xff]
    %v169 = vld [vmem:[#allocation5 + $0x1f0] sm:$0xff]
    %v170 = vld [vmem:[#allocation5 + $0x1f8] sm:$0xff]
    %v171 = vld [vmem:[#allocation5 + $0x200] sm:$0xff]
    %v172 = vld [vmem:[#allocation5 + $0x208] sm:$0xff]
    %v173 = vld [vmem:[#allocation5 + $0x210] sm:$0xff]
    %v174 = vld [vmem:[#allocation5 + $0x218] sm:$0xff]
    %v175 = vld [vmem:[#allocation5 + $0x220] sm:$0xff]
    %v176 = vld [vmem:[#allocation5 + $0x228] sm:$0xff]
    %v177 = vld [vmem:[#allocation5 + $0x230] sm:$0xff]
    %v178 = vld [vmem:[#allocation5 + $0x238] sm:$0xff]
    %v179 = vld [vmem:[#allocation5 + $0x240] sm:$0xff]
    %v180 = vld [vmem:[#allocation5 + $0x248] sm:$0xff]
    %v181 = vld [vmem:[#allocation5 + $0x250] sm:$0xff]
    %v182 = vld [vmem:[#allocation5 + $0x258] sm:$0xff]
    %v183 = vld [vmem:[#allocation5 + $0x260] sm:$0xff]
    %v184 = vld [vmem:[#allocation5 + $0x268] sm:$0xff]
    %v185 = vld [vmem:[#allocation5 + $0x270] sm:$0xff]
    %v186 = vld [vmem:[#allocation5 + $0x278] sm:$0xff]
    %v187 = vld [vmem:[#allocation5 + $0x280] sm:$0xff]
    %v188 = vld [vmem:[#allocation5 + $0x288] sm:$0xff]
    %v189 = vld [vmem:[#allocation5 + $0x290] sm:$0xff]
    %v190 = vld [vmem:[#allocation5 + $0x298] sm:$0xff]
    %v191 = vld [vmem:[#allocation5 + $0x2a0] sm:$0xff]
    %v192 = vld [vmem:[#allocation5 + $0x2a8] sm:$0xff]
    %v193 = vld [vmem:[#allocation5 + $0x2b0] sm:$0xff]
    %v194 = vld [vmem:[#allocation5 + $0x2b8] sm:$0xff]
    %v195 = vld [vmem:[#allocation5 + $0x2c0] sm:$0xff]
    %v196 = vld [vmem:[#allocation5 + $0x2c8] sm:$0xff]
    %v197 = vld [vmem:[#allocation5 + $0x2d0] sm:$0xff]
    %v198 = vld [vmem:[#allocation5 + $0x2d8] sm:$0xff]
    %v199 = vld [vmem:[#allocation5 + $0x2e0] sm:$0xff]
    %v200 = vld [vmem:[#allocation5 + $0x2e8] sm:$0xff]
    %v201 = vld [vmem:[#allocation5 + $0x2f0] sm:$0xff]
    %v202 = vld [vmem:[#allocation5 + $0x2f8] sm:$0xff]
    %v203 = vld [vmem:[#allocation5 + $0x300] sm:$0xff]
    %v204 = vld [vmem:[#allocation5 + $0x308] sm:$0xff]
    %v205 = vld [vmem:[#allocation5 + $0x310] sm:$0xff]
    %v206 = vld [vmem:[#allocation5 + $0x318] sm:$0xff]
    %v207 = vld [vmem:[#allocation5 + $0x320] sm:$0xff]
    %v208 = vld [vmem:[#allocation5 + $0x328] sm:$0xff]
    %v209 = vld [vmem:[#allocation5 + $0x330] sm:$0xff]
    %v210 = vld [vmem:[#allocation5 + $0x338] sm:$0xff]
    %v211 = vld [vmem:[#allocation5 + $0x340] sm:$0xff]
    %v212 = vld [vmem:[#allocation5 + $0x348] sm:$0xff]
    %v213 = vld [vmem:[#allocation5 + $0x350] sm:$0xff]
    %v214 = vld [vmem:[#allocation5 + $0x358] sm:$0xff]
    %v215 = vld [vmem:[#allocation5 + $0x360] sm:$0xff]
    %v216 = vld [vmem:[#allocation5 + $0x368] sm:$0xff]
    %v217 = vld [vmem:[#allocation5 + $0x370] sm:$0xff]
    %v218 = vld [vmem:[#allocation5 + $0x378] sm:$0xff]
    %v219 = vld [vmem:[#allocation5 + $0x380] sm:$0xff]
    %v220 = vld [vmem:[#allocation5 + $0x388] sm:$0xff]
    %v221 = vld [vmem:[#allocation5 + $0x390] sm:$0xff]
    %v222 = vld [vmem:[#allocation5 + $0x398] sm:$0xff]
    %v223 = vld [vmem:[#allocation5 + $0x3a0] sm:$0xff]
    %v224 = vld [vmem:[#allocation5 + $0x3a8] sm:$0xff]
    %v225 = vld [vmem:[#allocation5 + $0x3b0] sm:$0xff]
    %v226 = vld [vmem:[#allocation5 + $0x3b8] sm:$0xff]
    %v227 = vld [vmem:[#allocation5 + $0x3c0] sm:$0xff]
    %v228 = vld [vmem:[#allocation5 + $0x3c8] sm:$0xff]
    %v229 = vld [vmem:[#allocation5 + $0x3d0] sm:$0xff]
    %v230 = vld [vmem:[#allocation5 + $0x3d8] sm:$0xff]
    %v231 = vld [vmem:[#allocation5 + $0x3e0] sm:$0xff]
    %v232 = vld [vmem:[#allocation5 + $0x3e8] sm:$0xff]
    %v233 = vld [vmem:[#allocation5 + $0x3f0] sm:$0xff]
    %v234 = vld [vmem:[#allocation5 + $0x3f8] sm:$0xff]
    %v235 = vld [vmem:[#allocation5 + $0x400] sm:$0xff]
    %v236 = vld [vmem:[#allocation5 + $0x408] sm:$0xff]
    %v237 = vld [vmem:[#allocation5 + $0x410] sm:$0xff]
    %v238 = vld [vmem:[#allocation5 + $0x418] sm:$0xff]
    %v239 = vld [vmem:[#allocation5 + $0x420] sm:$0xff]
    %v240 = vld [vmem:[#allocation5 + $0x428] sm:$0xff]
    %v241 = vld [vmem:[#allocation5 + $0x430] sm:$0xff]
    %v242 = vld [vmem:[#allocation5 + $0x438] sm:$0xff]
    %v243 = vld [vmem:[#allocation5 + $0x440] sm:$0xff]
    %v244 = vld [vmem:[#allocation5 + $0x448] sm:$0xff]
    %v245 = vld [vmem:[#allocation5 + $0x450] sm:$0xff]
    %v246 = vld [vmem:[#allocation5 + $0x458] sm:$0xff]
    %v247 = vld [vmem:[#allocation5 + $0x460] sm:$0xff]
    %v248 = vld [vmem:[#allocation5 + $0x468] sm:$0xff]
    %v249 = vld [vmem:[#allocation5 + $0x470] sm:$0xff]
    %v250 = vld [vmem:[#allocation5 + $0x478] sm:$0xff]
    %v251 = vld [vmem:[#allocation5 + $0x480] sm:$0xff]
    %v252 = vld [vmem:[#allocation5 + $0x488] sm:$0xff]
    %v253 = vld [vmem:[#allocation5 + $0x490] sm:$0xff]
    %v254 = vld [vmem:[#allocation5 + $0x498] sm:$0xff]
    %v255 = vld [vmem:[#allocation5 + $0x4a0] sm:$0xff]
    %v256 = vld [vmem:[#allocation5 + $0x4a8] sm:$0xff]
    %v257 = vld [vmem:[#allocation5 + $0x4b0] sm:$0xff]
    %v258 = vld [vmem:[#allocation5 + $0x4b8] sm:$0xff]
    %v259 = vld [vmem:[#allocation5 + $0x4c0] sm:$0xff]
    %v260 = vld [vmem:[#allocation5 + $0x4c8] sm:$0xff]
    %v261 = vld [vmem:[#allocation5 + $0x4d0] sm:$0xff]
    %v262 = vld [vmem:[#allocation5 + $0x4d8] sm:$0xff]
    %v263 = vld [vmem:[#allocation5 + $0x4e0] sm:$0xff]
    %v264 = vld [vmem:[#allocation5 + $0x4e8] sm:$0xff]
    %v265 = vld [vmem:[#allocation5 + $0x4f0] sm:$0xff]
    %v266 = vld [vmem:[#allocation5 + $0x4f8] sm:$0xff]
    %v267 = vld [vmem:[#allocation5 + $0x500] sm:$0xff]
    %v268 = vld [vmem:[#allocation5 + $0x508] sm:$0xff]
    %v269 = vld [vmem:[#allocation5 + $0x510] sm:$0xff]
    %v270 = vld [vmem:[#allocation5 + $0x518] sm:$0xff]
    %v271 = vld [vmem:[#allocation5 + $0x520] sm:$0xff]
    %v272 = vld [vmem:[#allocation5 + $0x528] sm:$0xff]
    %v273 = vld [vmem:[#allocation5 + $0x530] sm:$0xff]
    %v274 = vld [vmem:[#allocation5 + $0x538] sm:$0xff]
    %v275 = vld [vmem:[#allocation5 + $0x540] sm:$0xff]
    %v276 = vld [vmem:[#allocation5 + $0x548] sm:$0xff]
    %v277 = vld [vmem:[#allocation5 + $0x550] sm:$0xff]
    %v278 = vld [vmem:[#allocation5 + $0x558] sm:$0xff]
    %v279 = vld [vmem:[#allocation5 + $0x560] sm:$0xff]
    %v280 = vld [vmem:[#allocation5 + $0x568] sm:$0xff]
    %v281 = vld [vmem:[#allocation5 + $0x570] sm:$0xff]
    %v282 = vld [vmem:[#allocation5 + $0x578] sm:$0xff]
    %v283 = vld [vmem:[#allocation5 + $0x580] sm:$0xff]
    %v284 = vld [vmem:[#allocation5 + $0x588] sm:$0xff]
    %v285 = vld [vmem:[#allocation5 + $0x590] sm:$0xff]
    %v286 = vld [vmem:[#allocation5 + $0x598] sm:$0xff]
    %v287 = vld [vmem:[#allocation5 + $0x5a0] sm:$0xff]
    %v288 = vld [vmem:[#allocation5 + $0x5a8] sm:$0xff]
    %v289 = vld [vmem:[#allocation5 + $0x5b0] sm:$0xff]
    %v290 = vld [vmem:[#allocation5 + $0x5b8] sm:$0xff]
    %v291 = vld [vmem:[#allocation5 + $0x5c0] sm:$0xff]
    %v292 = vld [vmem:[#allocation5 + $0x5c8] sm:$0xff]
    %v293 = vld [vmem:[#allocation5 + $0x5d0] sm:$0xff]
    %v294 = vld [vmem:[#allocation5 + $0x5d8] sm:$0xff]
    %v295 = vld [vmem:[#allocation5 + $0x5e0] sm:$0xff]
    %v296 = vld [vmem:[#allocation5 + $0x5e8] sm:$0xff]
    %v297 = vld [vmem:[#allocation5 + $0x5f0] sm:$0xff]
    %v298 = vld [vmem:[#allocation5 + $0x5f8] sm:$0xff]
    %v299 = vld [vmem:[#allocation5 + $0x600] sm:$0xff]
    %v300 = vld [vmem:[#allocation5 + $0x608] sm:$0xff]
    %v301 = vld [vmem:[#allocation5 + $0x610] sm:$0xff]
    %v302 = vld [vmem:[#allocation5 + $0x618] sm:$0xff]
    %v303 = vld [vmem:[#allocation5 + $0x620] sm:$0xff]
    %v304 = vld [vmem:[#allocation5 + $0x628] sm:$0xff]
    %v305 = vld [vmem:[#allocation5 + $0x630] sm:$0xff]
    %v306 = vld [vmem:[#allocation5 + $0x638] sm:$0xff]
    %v307 = vld [vmem:[#allocation5 + $0x640] sm:$0xff]
    %v308 = vld [vmem:[#allocation5 + $0x648] sm:$0xff]
    %v309 = vld [vmem:[#allocation5 + $0x650] sm:$0xff]
    %v310 = vld [vmem:[#allocation5 + $0x658] sm:$0xff]
    %v311 = vld [vmem:[#allocation5 + $0x660] sm:$0xff]
    %v312 = vld [vmem:[#allocation5 + $0x668] sm:$0xff]
    %v313 = vld [vmem:[#allocation5 + $0x670] sm:$0xff]
    %v314 = vld [vmem:[#allocation5 + $0x678] sm:$0xff]
    %v315 = vld [vmem:[#allocation5 + $0x680] sm:$0xff]
    %v316 = vld [vmem:[#allocation5 + $0x688] sm:$0xff]
    %v317 = vld [vmem:[#allocation5 + $0x690] sm:$0xff]
    %v318 = vld [vmem:[#allocation5 + $0x698] sm:$0xff]
    %v319 = vld [vmem:[#allocation5 + $0x6a0] sm:$0xff]
    %v320 = vld [vmem:[#allocation5 + $0x6a8] sm:$0xff]
    %v321 = vld [vmem:[#allocation5 + $0x6b0] sm:$0xff]
    %v322 = vld [vmem:[#allocation5 + $0x6b8] sm:$0xff]
    %v323 = vld [vmem:[#allocation5 + $0x6c0] sm:$0xff]
    %v324 = vld [vmem:[#allocation5 + $0x6c8] sm:$0xff]
    %v325 = vld [vmem:[#allocation5 + $0x6d0] sm:$0xff]
    %v326 = vld [vmem:[#allocation5 + $0x6d8] sm:$0xff]
    %v327 = vld [vmem:[#allocation5 + $0x6e0] sm:$0xff]
    %v328 = vld [vmem:[#allocation5 + $0x6e8] sm:$0xff]
    %v329 = vld [vmem:[#allocation5 + $0x6f0] sm:$0xff]
    %v330 = vld [vmem:[#allocation5 + $0x6f8] sm:$0xff]
    %v331 = vld [vmem:[#allocation5 + $0x700] sm:$0xff]
    %v332 = vld [vmem:[#allocation5 + $0x708] sm:$0xff]
    %v333 = vld [vmem:[#allocation5 + $0x710] sm:$0xff]
    %v334 = vld [vmem:[#allocation5 + $0x718] sm:$0xff]
    %v335 = vld [vmem:[#allocation5 + $0x720] sm:$0xff]
    %v336 = vld [vmem:[#allocation5 + $0x728] sm:$0xff]
    %v337 = vld [vmem:[#allocation5 + $0x730] sm:$0xff]
    %v338 = vld [vmem:[#allocation5 + $0x738] sm:$0xff]
    %v339 = vld [vmem:[#allocation5 + $0x740] sm:$0xff]
    %v340 = vld [vmem:[#allocation5 + $0x748] sm:$0xff]
    %v341 = vld [vmem:[#allocation5 + $0x750] sm:$0xff]
    %v342 = vld [vmem:[#allocation5 + $0x758] sm:$0xff]
    %v343 = vld [vmem:[#allocation5 + $0x760] sm:$0xff]
    %v344 = vld [vmem:[#allocation5 + $0x768] sm:$0xff]
    %v345 = vld [vmem:[#allocation5 + $0x770] sm:$0xff]
    %v346 = vld [vmem:[#allocation5 + $0x778] sm:$0xff]
    %v347 = vld [vmem:[#allocation5 + $0x780] sm:$0xff]
    %v348 = vld [vmem:[#allocation5 + $0x788] sm:$0xff]
    %v349 = vld [vmem:[#allocation5 + $0x790] sm:$0xff]
    %v350 = vld [vmem:[#allocation5 + $0x798] sm:$0xff]
    %v351 = vld [vmem:[#allocation5 + $0x7a0] sm:$0xff]
    %v352 = vld [vmem:[#allocation5 + $0x7a8] sm:$0xff]
    %v353 = vld [vmem:[#allocation5 + $0x7b0] sm:$0xff]
    %v354 = vld [vmem:[#allocation5 + $0x7b8] sm:$0xff]
    %v355 = vld [vmem:[#allocation5 + $0x7c0] sm:$0xff]
    %v356 = vld [vmem:[#allocation5 + $0x7c8] sm:$0xff]
    %v357 = vld [vmem:[#allocation5 + $0x7d0] sm:$0xff]
    %v358 = vld [vmem:[#allocation5 + $0x7d8] sm:$0xff]
    %v359 = vld [vmem:[#allocation5 + $0x7e0] sm:$0xff]
    %v360 = vld [vmem:[#allocation5 + $0x7e8] sm:$0xff]
    %v361 = vld [vmem:[#allocation5 + $0x7f0] sm:$0xff]
    %v362 = vld [vmem:[#allocation5 + $0x7f8] sm:$0xff]
    %v363 = vld [vmem:[%s2] sm:$0xf]
    %v365 = vlaneseq
    %v366 = vshrl.u32 %v365, 7
    %v367 = vsub.s32 0, %v366
    %v368 = vrot.slane %v363, %v367
    %v369 = vlaneseq
    %v370 = vshrl.u32 %v369, 7
    %v371 = vsub.s32 1, %v370
    %v372 = vrot.slane %v363, %v371
    %v373 = vlaneseq
    %v374 = vshrl.u32 %v373, 7
    %v375 = vsub.s32 2, %v374
    %v376 = vrot.slane %v363, %v375
    %v377 = vlaneseq
    %v378 = vshrl.u32 %v377, 7
    %v379 = vsub.s32 3, %v378
    %v380 = vrot.slane %v363, %v379
    %v641 = vunpack.c.l.b16 %v107
    %v642 = vunpack.c.h.b16 %v107
    %v643 = vunpack.c.l.b16 %v108
    %v644 = vunpack.c.h.b16 %v108
    %v645 = vunpack.c.l.b16 %v109
    %v646 = vunpack.c.h.b16 %v109
    %v647 = vunpack.c.l.b16 %v110
    %v648 = vunpack.c.h.b16 %v110
    %v649 = vunpack.c.l.b16 %v111
    %v650 = vunpack.c.h.b16 %v111
    %v651 = vunpack.c.l.b16 %v112
    %v652 = vunpack.c.h.b16 %v112
    %v653 = vunpack.c.l.b16 %v113
    %v654 = vunpack.c.h.b16 %v113
    %v655 = vunpack.c.l.b16 %v114
    %v656 = vunpack.c.h.b16 %v114
    %v657 = vunpack.c.l.b16 %v115
    %v658 = vunpack.c.h.b16 %v115
    %v659 = vunpack.c.l.b16 %v116
    %v660 = vunpack.c.h.b16 %v116
    %v661 = vunpack.c.l.b16 %v117
    %v662 = vunpack.c.h.b16 %v117
    %v663 = vunpack.c.l.b16 %v118
    %v664 = vunpack.c.h.b16 %v118
    %v665 = vunpack.c.l.b16 %v119
    %v666 = vunpack.c.h.b16 %v119
    %v667 = vunpack.c.l.b16 %v120
    %v668 = vunpack.c.h.b16 %v120
    %v669 = vunpack.c.l.b16 %v121
    %v670 = vunpack.c.h.b16 %v121
    %v671 = vunpack.c.l.b16 %v122
    %v672 = vunpack.c.h.b16 %v122
    %v673 = vunpack.c.l.b16 %v123
    %v674 = vunpack.c.h.b16 %v123
    %v675 = vunpack.c.l.b16 %v124
    %v676 = vunpack.c.h.b16 %v124
    %v677 = vunpack.c.l.b16 %v125
    %v678 = vunpack.c.h.b16 %v125
    %v679 = vunpack.c.l.b16 %v126
    %v680 = vunpack.c.h.b16 %v126
    %v681 = vunpack.c.l.b16 %v127
    %v682 = vunpack.c.h.b16 %v127
    %v683 = vunpack.c.l.b16 %v128
    %v684 = vunpack.c.h.b16 %v128
    %v685 = vunpack.c.l.b16 %v129
    %v686 = vunpack.c.h.b16 %v129
    %v687 = vunpack.c.l.b16 %v130
    %v688 = vunpack.c.h.b16 %v130
    %v689 = vunpack.c.l.b16 %v131
    %v690 = vunpack.c.h.b16 %v131
    %v691 = vunpack.c.l.b16 %v132
    %v692 = vunpack.c.h.b16 %v132
    %v693 = vunpack.c.l.b16 %v133
    %v694 = vunpack.c.h.b16 %v133
    %v695 = vunpack.c.l.b16 %v134
    %v696 = vunpack.c.h.b16 %v134
    %v697 = vunpack.c.l.b16 %v135
    %v698 = vunpack.c.h.b16 %v135
    %v699 = vunpack.c.l.b16 %v136
    %v700 = vunpack.c.h.b16 %v136
    %v701 = vunpack.c.l.b16 %v137
    %v702 = vunpack.c.h.b16 %v137
    %v703 = vunpack.c.l.b16 %v138
    %v704 = vunpack.c.h.b16 %v138
    %v705 = vunpack.c.l.b16 %v139
    %v706 = vunpack.c.h.b16 %v139
    %v707 = vunpack.c.l.b16 %v140
    %v708 = vunpack.c.h.b16 %v140
    %v709 = vunpack.c.l.b16 %v141
    %v710 = vunpack.c.h.b16 %v141
    %v711 = vunpack.c.l.b16 %v142
    %v712 = vunpack.c.h.b16 %v142
    %v713 = vunpack.c.l.b16 %v143
    %v714 = vunpack.c.h.b16 %v143
    %v715 = vunpack.c.l.b16 %v144
    %v716 = vunpack.c.h.b16 %v144
    %v717 = vunpack.c.l.b16 %v145
    %v718 = vunpack.c.h.b16 %v145
    %v719 = vunpack.c.l.b16 %v146
    %v720 = vunpack.c.h.b16 %v146
    %v721 = vunpack.c.l.b16 %v147
    %v722 = vunpack.c.h.b16 %v147
    %v723 = vunpack.c.l.b16 %v148
    %v724 = vunpack.c.h.b16 %v148
    %v725 = vunpack.c.l.b16 %v149
    %v726 = vunpack.c.h.b16 %v149
    %v727 = vunpack.c.l.b16 %v150
    %v728 = vunpack.c.h.b16 %v150
    %v729 = vunpack.c.l.b16 %v151
    %v730 = vunpack.c.h.b16 %v151
    %v731 = vunpack.c.l.b16 %v152
    %v732 = vunpack.c.h.b16 %v152
    %v733 = vunpack.c.l.b16 %v153
    %v734 = vunpack.c.h.b16 %v153
    %v735 = vunpack.c.l.b16 %v154
    %v736 = vunpack.c.h.b16 %v154
    %v737 = vunpack.c.l.b16 %v155
    %v738 = vunpack.c.h.b16 %v155
    %v739 = vunpack.c.l.b16 %v156
    %v740 = vunpack.c.h.b16 %v156
    %v741 = vunpack.c.l.b16 %v157
    %v742 = vunpack.c.h.b16 %v157
    %v743 = vunpack.c.l.b16 %v158
    %v744 = vunpack.c.h.b16 %v158
    %v745 = vunpack.c.l.b16 %v159
    %v746 = vunpack.c.h.b16 %v159
    %v747 = vunpack.c.l.b16 %v160
    %v748 = vunpack.c.h.b16 %v160
    %v749 = vunpack.c.l.b16 %v161
    %v750 = vunpack.c.h.b16 %v161
    %v751 = vunpack.c.l.b16 %v162
    %v752 = vunpack.c.h.b16 %v162
    %v753 = vunpack.c.l.b16 %v163
    %v754 = vunpack.c.h.b16 %v163
    %v755 = vunpack.c.l.b16 %v164
    %v756 = vunpack.c.h.b16 %v164
    %v757 = vunpack.c.l.b16 %v165
    %v758 = vunpack.c.h.b16 %v165
    %v759 = vunpack.c.l.b16 %v166
    %v760 = vunpack.c.h.b16 %v166
    %v761 = vunpack.c.l.b16 %v167
    %v762 = vunpack.c.h.b16 %v167
    %v763 = vunpack.c.l.b16 %v168
    %v764 = vunpack.c.h.b16 %v168
    %v765 = vunpack.c.l.b16 %v169
    %v766 = vunpack.c.h.b16 %v169
    %v767 = vunpack.c.l.b16 %v170
    %v768 = vunpack.c.h.b16 %v170
    %v769 = vunpack.c.l.b16 %v171
    %v770 = vunpack.c.h.b16 %v171
    %v771 = vunpack.c.l.b16 %v172
    %v772 = vunpack.c.h.b16 %v172
    %v773 = vunpack.c.l.b16 %v173
    %v774 = vunpack.c.h.b16 %v173
    %v775 = vunpack.c.l.b16 %v174
    %v776 = vunpack.c.h.b16 %v174
    %v777 = vunpack.c.l.b16 %v175
    %v778 = vunpack.c.h.b16 %v175
    %v779 = vunpack.c.l.b16 %v176
    %v780 = vunpack.c.h.b16 %v176
    %v781 = vunpack.c.l.b16 %v177
    %v782 = vunpack.c.h.b16 %v177
    %v783 = vunpack.c.l.b16 %v178
    %v784 = vunpack.c.h.b16 %v178
    %v785 = vunpack.c.l.b16 %v179
    %v786 = vunpack.c.h.b16 %v179
    %v787 = vunpack.c.l.b16 %v180
    %v788 = vunpack.c.h.b16 %v180
    %v789 = vunpack.c.l.b16 %v181
    %v790 = vunpack.c.h.b16 %v181
    %v791 = vunpack.c.l.b16 %v182
    %v792 = vunpack.c.h.b16 %v182
    %v793 = vunpack.c.l.b16 %v183
    %v794 = vunpack.c.h.b16 %v183
    %v795 = vunpack.c.l.b16 %v184
    %v796 = vunpack.c.h.b16 %v184
    %v797 = vunpack.c.l.b16 %v185
    %v798 = vunpack.c.h.b16 %v185
    %v799 = vunpack.c.l.b16 %v186
    %v800 = vunpack.c.h.b16 %v186
    %v801 = vunpack.c.l.b16 %v187
    %v802 = vunpack.c.h.b16 %v187
    %v803 = vunpack.c.l.b16 %v188
    %v804 = vunpack.c.h.b16 %v188
    %v805 = vunpack.c.l.b16 %v189
    %v806 = vunpack.c.h.b16 %v189
    %v807 = vunpack.c.l.b16 %v190
    %v808 = vunpack.c.h.b16 %v190
    %v809 = vunpack.c.l.b16 %v191
    %v810 = vunpack.c.h.b16 %v191
    %v811 = vunpack.c.l.b16 %v192
    %v812 = vunpack.c.h.b16 %v192
    %v813 = vunpack.c.l.b16 %v193
    %v814 = vunpack.c.h.b16 %v193
    %v815 = vunpack.c.l.b16 %v194
    %v816 = vunpack.c.h.b16 %v194
    %v817 = vunpack.c.l.b16 %v195
    %v818 = vunpack.c.h.b16 %v195
    %v819 = vunpack.c.l.b16 %v196
    %v820 = vunpack.c.h.b16 %v196
    %v821 = vunpack.c.l.b16 %v197
    %v822 = vunpack.c.h.b16 %v197
    %v823 = vunpack.c.l.b16 %v198
    %v824 = vunpack.c.h.b16 %v198
    %v825 = vunpack.c.l.b16 %v199
    %v826 = vunpack.c.h.b16 %v199
    %v827 = vunpack.c.l.b16 %v200
    %v828 = vunpack.c.h.b16 %v200
    %v829 = vunpack.c.l.b16 %v201
    %v830 = vunpack.c.h.b16 %v201
    %v831 = vunpack.c.l.b16 %v202
    %v832 = vunpack.c.h.b16 %v202
    %v833 = vunpack.c.l.b16 %v203
    %v834 = vunpack.c.h.b16 %v203
    %v835 = vunpack.c.l.b16 %v204
    %v836 = vunpack.c.h.b16 %v204
    %v837 = vunpack.c.l.b16 %v205
    %v838 = vunpack.c.h.b16 %v205
    %v839 = vunpack.c.l.b16 %v206
    %v840 = vunpack.c.h.b16 %v206
    %v841 = vunpack.c.l.b16 %v207
    %v842 = vunpack.c.h.b16 %v207
    %v843 = vunpack.c.l.b16 %v208
    %v844 = vunpack.c.h.b16 %v208
    %v845 = vunpack.c.l.b16 %v209
    %v846 = vunpack.c.h.b16 %v209
    %v847 = vunpack.c.l.b16 %v210
    %v848 = vunpack.c.h.b16 %v210
    %v849 = vunpack.c.l.b16 %v211
    %v850 = vunpack.c.h.b16 %v211
    %v851 = vunpack.c.l.b16 %v212
    %v852 = vunpack.c.h.b16 %v212
    %v853 = vunpack.c.l.b16 %v213
    %v854 = vunpack.c.h.b16 %v213
    %v855 = vunpack.c.l.b16 %v214
    %v856 = vunpack.c.h.b16 %v214
    %v857 = vunpack.c.l.b16 %v215
    %v858 = vunpack.c.h.b16 %v215
    %v859 = vunpack.c.l.b16 %v216
    %v860 = vunpack.c.h.b16 %v216
    %v861 = vunpack.c.l.b16 %v217
    %v862 = vunpack.c.h.b16 %v217
    %v863 = vunpack.c.l.b16 %v218
    %v864 = vunpack.c.h.b16 %v218
    %v865 = vunpack.c.l.b16 %v219
    %v866 = vunpack.c.h.b16 %v219
    %v867 = vunpack.c.l.b16 %v220
    %v868 = vunpack.c.h.b16 %v220
    %v869 = vunpack.c.l.b16 %v221
    %v870 = vunpack.c.h.b16 %v221
    %v871 = vunpack.c.l.b16 %v222
    %v872 = vunpack.c.h.b16 %v222
    %v873 = vunpack.c.l.b16 %v223
    %v874 = vunpack.c.h.b16 %v223
    %v875 = vunpack.c.l.b16 %v224
    %v876 = vunpack.c.h.b16 %v224
    %v877 = vunpack.c.l.b16 %v225
    %v878 = vunpack.c.h.b16 %v225
    %v879 = vunpack.c.l.b16 %v226
    %v880 = vunpack.c.h.b16 %v226
    %v881 = vunpack.c.l.b16 %v227
    %v882 = vunpack.c.h.b16 %v227
    %v883 = vunpack.c.l.b16 %v228
    %v884 = vunpack.c.h.b16 %v228
    %v885 = vunpack.c.l.b16 %v229
    %v886 = vunpack.c.h.b16 %v229
    %v887 = vunpack.c.l.b16 %v230
    %v888 = vunpack.c.h.b16 %v230
    %v889 = vunpack.c.l.b16 %v231
    %v890 = vunpack.c.h.b16 %v231
    %v891 = vunpack.c.l.b16 %v232
    %v892 = vunpack.c.h.b16 %v232
    %v893 = vunpack.c.l.b16 %v233
    %v894 = vunpack.c.h.b16 %v233
    %v895 = vunpack.c.l.b16 %v234
    %v896 = vunpack.c.h.b16 %v234
    %v897 = vunpack.c.l.b16 %v235
    %v898 = vunpack.c.h.b16 %v235
    %v899 = vunpack.c.l.b16 %v236
    %v900 = vunpack.c.h.b16 %v236
    %v901 = vunpack.c.l.b16 %v237
    %v902 = vunpack.c.h.b16 %v237
    %v903 = vunpack.c.l.b16 %v238
    %v904 = vunpack.c.h.b16 %v238
    %v905 = vunpack.c.l.b16 %v239
    %v906 = vunpack.c.h.b16 %v239
    %v907 = vunpack.c.l.b16 %v240
    %v908 = vunpack.c.h.b16 %v240
    %v909 = vunpack.c.l.b16 %v241
    %v910 = vunpack.c.h.b16 %v241
    %v911 = vunpack.c.l.b16 %v242
    %v912 = vunpack.c.h.b16 %v242
    %v913 = vunpack.c.l.b16 %v243
    %v914 = vunpack.c.h.b16 %v243
    %v915 = vunpack.c.l.b16 %v244
    %v916 = vunpack.c.h.b16 %v244
    %v917 = vunpack.c.l.b16 %v245
    %v918 = vunpack.c.h.b16 %v245
    %v919 = vunpack.c.l.b16 %v246
    %v920 = vunpack.c.h.b16 %v246
    %v921 = vunpack.c.l.b16 %v247
    %v922 = vunpack.c.h.b16 %v247
    %v923 = vunpack.c.l.b16 %v248
    %v924 = vunpack.c.h.b16 %v248
    %v925 = vunpack.c.l.b16 %v249
    %v926 = vunpack.c.h.b16 %v249
    %v927 = vunpack.c.l.b16 %v250
    %v928 = vunpack.c.h.b16 %v250
    %v929 = vunpack.c.l.b16 %v251
    %v930 = vunpack.c.h.b16 %v251
    %v931 = vunpack.c.l.b16 %v252
    %v932 = vunpack.c.h.b16 %v252
    %v933 = vunpack.c.l.b16 %v253
    %v934 = vunpack.c.h.b16 %v253
    %v935 = vunpack.c.l.b16 %v254
    %v936 = vunpack.c.h.b16 %v254
    %v937 = vunpack.c.l.b16 %v255
    %v938 = vunpack.c.h.b16 %v255
    %v939 = vunpack.c.l.b16 %v256
    %v940 = vunpack.c.h.b16 %v256
    %v941 = vunpack.c.l.b16 %v257
    %v942 = vunpack.c.h.b16 %v257
    %v943 = vunpack.c.l.b16 %v258
    %v944 = vunpack.c.h.b16 %v258
    %v945 = vunpack.c.l.b16 %v259
    %v946 = vunpack.c.h.b16 %v259
    %v947 = vunpack.c.l.b16 %v260
    %v948 = vunpack.c.h.b16 %v260
    %v949 = vunpack.c.l.b16 %v261
    %v950 = vunpack.c.h.b16 %v261
    %v951 = vunpack.c.l.b16 %v262
    %v952 = vunpack.c.h.b16 %v262
    %v953 = vunpack.c.l.b16 %v263
    %v954 = vunpack.c.h.b16 %v263
    %v955 = vunpack.c.l.b16 %v264
    %v956 = vunpack.c.h.b16 %v264
    %v957 = vunpack.c.l.b16 %v265
    %v958 = vunpack.c.h.b16 %v265
    %v959 = vunpack.c.l.b16 %v266
    %v960 = vunpack.c.h.b16 %v266
    %v961 = vunpack.c.l.b16 %v267
    %v962 = vunpack.c.h.b16 %v267
    %v963 = vunpack.c.l.b16 %v268
    %v964 = vunpack.c.h.b16 %v268
    %v965 = vunpack.c.l.b16 %v269
    %v966 = vunpack.c.h.b16 %v269
    %v967 = vunpack.c.l.b16 %v270
    %v968 = vunpack.c.h.b16 %v270
    %v969 = vunpack.c.l.b16 %v271
    %v970 = vunpack.c.h.b16 %v271
    %v971 = vunpack.c.l.b16 %v272
    %v972 = vunpack.c.h.b16 %v272
    %v973 = vunpack.c.l.b16 %v273
    %v974 = vunpack.c.h.b16 %v273
    %v975 = vunpack.c.l.b16 %v274
    %v976 = vunpack.c.h.b16 %v274
    %v977 = vunpack.c.l.b16 %v275
    %v978 = vunpack.c.h.b16 %v275
    %v979 = vunpack.c.l.b16 %v276
    %v980 = vunpack.c.h.b16 %v276
    %v981 = vunpack.c.l.b16 %v277
    %v982 = vunpack.c.h.b16 %v277
    %v983 = vunpack.c.l.b16 %v278
    %v984 = vunpack.c.h.b16 %v278
    %v985 = vunpack.c.l.b16 %v279
    %v986 = vunpack.c.h.b16 %v279
    %v987 = vunpack.c.l.b16 %v280
    %v988 = vunpack.c.h.b16 %v280
    %v989 = vunpack.c.l.b16 %v281
    %v990 = vunpack.c.h.b16 %v281
    %v991 = vunpack.c.l.b16 %v282
    %v992 = vunpack.c.h.b16 %v282
    %v993 = vunpack.c.l.b16 %v283
    %v994 = vunpack.c.h.b16 %v283
    %v995 = vunpack.c.l.b16 %v284
    %v996 = vunpack.c.h.b16 %v284
    %v997 = vunpack.c.l.b16 %v285
    %v998 = vunpack.c.h.b16 %v285
    %v999 = vunpack.c.l.b16 %v286
    %v1000 = vunpack.c.h.b16 %v286
    %v1001 = vunpack.c.l.b16 %v287
    %v1002 = vunpack.c.h.b16 %v287
    %v1003 = vunpack.c.l.b16 %v288
    %v1004 = vunpack.c.h.b16 %v288
    %v1005 = vunpack.c.l.b16 %v289
    %v1006 = vunpack.c.h.b16 %v289
    %v1007 = vunpack.c.l.b16 %v290
    %v1008 = vunpack.c.h.b16 %v290
    %v1009 = vunpack.c.l.b16 %v291
    %v1010 = vunpack.c.h.b16 %v291
    %v1011 = vunpack.c.l.b16 %v292
    %v1012 = vunpack.c.h.b16 %v292
    %v1013 = vunpack.c.l.b16 %v293
    %v1014 = vunpack.c.h.b16 %v293
    %v1015 = vunpack.c.l.b16 %v294
    %v1016 = vunpack.c.h.b16 %v294
    %v1017 = vunpack.c.l.b16 %v295
    %v1018 = vunpack.c.h.b16 %v295
    %v1019 = vunpack.c.l.b16 %v296
    %v1020 = vunpack.c.h.b16 %v296
    %v1021 = vunpack.c.l.b16 %v297
    %v1022 = vunpack.c.h.b16 %v297
    %v1023 = vunpack.c.l.b16 %v298
    %v1024 = vunpack.c.h.b16 %v298
    %v1025 = vunpack.c.l.b16 %v299
    %v1026 = vunpack.c.h.b16 %v299
    %v1027 = vunpack.c.l.b16 %v300
    %v1028 = vunpack.c.h.b16 %v300
    %v1029 = vunpack.c.l.b16 %v301
    %v1030 = vunpack.c.h.b16 %v301
    %v1031 = vunpack.c.l.b16 %v302
    %v1032 = vunpack.c.h.b16 %v302
    %v1033 = vunpack.c.l.b16 %v303
    %v1034 = vunpack.c.h.b16 %v303
    %v1035 = vunpack.c.l.b16 %v304
    %v1036 = vunpack.c.h.b16 %v304
    %v1037 = vunpack.c.l.b16 %v305
    %v1038 = vunpack.c.h.b16 %v305
    %v1039 = vunpack.c.l.b16 %v306
    %v1040 = vunpack.c.h.b16 %v306
    %v1041 = vunpack.c.l.b16 %v307
    %v1042 = vunpack.c.h.b16 %v307
    %v1043 = vunpack.c.l.b16 %v308
    %v1044 = vunpack.c.h.b16 %v308
    %v1045 = vunpack.c.l.b16 %v309
    %v1046 = vunpack.c.h.b16 %v309
    %v1047 = vunpack.c.l.b16 %v310
    %v1048 = vunpack.c.h.b16 %v310
    %v1049 = vunpack.c.l.b16 %v311
    %v1050 = vunpack.c.h.b16 %v311
    %v1051 = vunpack.c.l.b16 %v312
    %v1052 = vunpack.c.h.b16 %v312
    %v1053 = vunpack.c.l.b16 %v313
    %v1054 = vunpack.c.h.b16 %v313
    %v1055 = vunpack.c.l.b16 %v314
    %v1056 = vunpack.c.h.b16 %v314
    %v1057 = vunpack.c.l.b16 %v315
    %v1058 = vunpack.c.h.b16 %v315
    %v1059 = vunpack.c.l.b16 %v316
    %v1060 = vunpack.c.h.b16 %v316
    %v1061 = vunpack.c.l.b16 %v317
    %v1062 = vunpack.c.h.b16 %v317
    %v1063 = vunpack.c.l.b16 %v318
    %v1064 = vunpack.c.h.b16 %v318
    %v1065 = vunpack.c.l.b16 %v319
    %v1066 = vunpack.c.h.b16 %v319
    %v1067 = vunpack.c.l.b16 %v320
    %v1068 = vunpack.c.h.b16 %v320
    %v1069 = vunpack.c.l.b16 %v321
    %v1070 = vunpack.c.h.b16 %v321
    %v1071 = vunpack.c.l.b16 %v322
    %v1072 = vunpack.c.h.b16 %v322
    %v1073 = vunpack.c.l.b16 %v323
    %v1074 = vunpack.c.h.b16 %v323
    %v1075 = vunpack.c.l.b16 %v324
    %v1076 = vunpack.c.h.b16 %v324
    %v1077 = vunpack.c.l.b16 %v325
    %v1078 = vunpack.c.h.b16 %v325
    %v1079 = vunpack.c.l.b16 %v326
    %v1080 = vunpack.c.h.b16 %v326
    %v1081 = vunpack.c.l.b16 %v327
    %v1082 = vunpack.c.h.b16 %v327
    %v1083 = vunpack.c.l.b16 %v328
    %v1084 = vunpack.c.h.b16 %v328
    %v1085 = vunpack.c.l.b16 %v329
    %v1086 = vunpack.c.h.b16 %v329
    %v1087 = vunpack.c.l.b16 %v330
    %v1088 = vunpack.c.h.b16 %v330
    %v1089 = vunpack.c.l.b16 %v331
    %v1090 = vunpack.c.h.b16 %v331
    %v1091 = vunpack.c.l.b16 %v332
    %v1092 = vunpack.c.h.b16 %v332
    %v1093 = vunpack.c.l.b16 %v333
    %v1094 = vunpack.c.h.b16 %v333
    %v1095 = vunpack.c.l.b16 %v334
    %v1096 = vunpack.c.h.b16 %v334
    %v1097 = vunpack.c.l.b16 %v335
    %v1098 = vunpack.c.h.b16 %v335
    %v1099 = vunpack.c.l.b16 %v336
    %v1100 = vunpack.c.h.b16 %v336
    %v1101 = vunpack.c.l.b16 %v337
    %v1102 = vunpack.c.h.b16 %v337
    %v1103 = vunpack.c.l.b16 %v338
    %v1104 = vunpack.c.h.b16 %v338
    %v1105 = vunpack.c.l.b16 %v339
    %v1106 = vunpack.c.h.b16 %v339
    %v1107 = vunpack.c.l.b16 %v340
    %v1108 = vunpack.c.h.b16 %v340
    %v1109 = vunpack.c.l.b16 %v341
    %v1110 = vunpack.c.h.b16 %v341
    %v1111 = vunpack.c.l.b16 %v342
    %v1112 = vunpack.c.h.b16 %v342
    %v1113 = vunpack.c.l.b16 %v343
    %v1114 = vunpack.c.h.b16 %v343
    %v1115 = vunpack.c.l.b16 %v344
    %v1116 = vunpack.c.h.b16 %v344
    %v1117 = vunpack.c.l.b16 %v345
    %v1118 = vunpack.c.h.b16 %v345
    %v1119 = vunpack.c.l.b16 %v346
    %v1120 = vunpack.c.h.b16 %v346
    %v1121 = vunpack.c.l.b16 %v347
    %v1122 = vunpack.c.h.b16 %v347
    %v1123 = vunpack.c.l.b16 %v348
    %v1124 = vunpack.c.h.b16 %v348
    %v1125 = vunpack.c.l.b16 %v349
    %v1126 = vunpack.c.h.b16 %v349
    %v1127 = vunpack.c.l.b16 %v350
    %v1128 = vunpack.c.h.b16 %v350
    %v1129 = vunpack.c.l.b16 %v351
    %v1130 = vunpack.c.h.b16 %v351
    %v1131 = vunpack.c.l.b16 %v352
    %v1132 = vunpack.c.h.b16 %v352
    %v1133 = vunpack.c.l.b16 %v353
    %v1134 = vunpack.c.h.b16 %v353
    %v1135 = vunpack.c.l.b16 %v354
    %v1136 = vunpack.c.h.b16 %v354
    %v1137 = vunpack.c.l.b16 %v355
    %v1138 = vunpack.c.h.b16 %v355
    %v1139 = vunpack.c.l.b16 %v356
    %v1140 = vunpack.c.h.b16 %v356
    %v1141 = vunpack.c.l.b16 %v357
    %v1142 = vunpack.c.h.b16 %v357
    %v1143 = vunpack.c.l.b16 %v358
    %v1144 = vunpack.c.h.b16 %v358
    %v1145 = vunpack.c.l.b16 %v359
    %v1146 = vunpack.c.h.b16 %v359
    %v1147 = vunpack.c.l.b16 %v360
    %v1148 = vunpack.c.h.b16 %v360
    %v1149 = vunpack.c.l.b16 %v361
    %v1150 = vunpack.c.h.b16 %v361
    %v1151 = vunpack.c.l.b16 %v362
    %v1152 = vunpack.c.h.b16 %v362
    %v1153 = vpack.c.b16 %v645, %v641
    %v1154 = vpack.c.b16 %v646, %v642
    %v1155 = vpack.c.b16 %v647, %v643
    %v1156 = vpack.c.b16 %v648, %v644
    %v1157 = vpack.c.b16 %v653, %v649
    %v1158 = vpack.c.b16 %v654, %v650
    %v1159 = vpack.c.b16 %v655, %v651
    %v1160 = vpack.c.b16 %v656, %v652
    %v1161 = vpack.c.b16 %v661, %v657
    %v1162 = vpack.c.b16 %v662, %v658
    %v1163 = vpack.c.b16 %v663, %v659
    %v1164 = vpack.c.b16 %v664, %v660
    %v1165 = vpack.c.b16 %v669, %v665
    %v1166 = vpack.c.b16 %v670, %v666
    %v1167 = vpack.c.b16 %v671, %v667
    %v1168 = vpack.c.b16 %v672, %v668
    %v1169 = vpack.c.b16 %v677, %v673
    %v1170 = vpack.c.b16 %v678, %v674
    %v1171 = vpack.c.b16 %v679, %v675
    %v1172 = vpack.c.b16 %v680, %v676
    %v1173 = vpack.c.b16 %v685, %v681
    %v1174 = vpack.c.b16 %v686, %v682
    %v1175 = vpack.c.b16 %v687, %v683
    %v1176 = vpack.c.b16 %v688, %v684
    %v1177 = vpack.c.b16 %v693, %v689
    %v1178 = vpack.c.b16 %v694, %v690
    %v1179 = vpack.c.b16 %v695, %v691
    %v1180 = vpack.c.b16 %v696, %v692
    %v1181 = vpack.c.b16 %v701, %v697
    %v1182 = vpack.c.b16 %v702, %v698
    %v1183 = vpack.c.b16 %v703, %v699
    %v1184 = vpack.c.b16 %v704, %v700
    %v1185 = vpack.c.b16 %v709, %v705
    %v1186 = vpack.c.b16 %v710, %v706
    %v1187 = vpack.c.b16 %v711, %v707
    %v1188 = vpack.c.b16 %v712, %v708
    %v1189 = vpack.c.b16 %v717, %v713
    %v1190 = vpack.c.b16 %v718, %v714
    %v1191 = vpack.c.b16 %v719, %v715
    %v1192 = vpack.c.b16 %v720, %v716
    %v1193 = vpack.c.b16 %v725, %v721
    %v1194 = vpack.c.b16 %v726, %v722
    %v1195 = vpack.c.b16 %v727, %v723
    %v1196 = vpack.c.b16 %v728, %v724
    %v1197 = vpack.c.b16 %v733, %v729
    %v1198 = vpack.c.b16 %v734, %v730
    %v1199 = vpack.c.b16 %v735, %v731
    %v1200 = vpack.c.b16 %v736, %v732
    %v1201 = vpack.c.b16 %v741, %v737
    %v1202 = vpack.c.b16 %v742, %v738
    %v1203 = vpack.c.b16 %v743, %v739
    %v1204 = vpack.c.b16 %v744, %v740
    %v1205 = vpack.c.b16 %v749, %v745
    %v1206 = vpack.c.b16 %v750, %v746
    %v1207 = vpack.c.b16 %v751, %v747
    %v1208 = vpack.c.b16 %v752, %v748
    %v1209 = vpack.c.b16 %v757, %v753
    %v1210 = vpack.c.b16 %v758, %v754
    %v1211 = vpack.c.b16 %v759, %v755
    %v1212 = vpack.c.b16 %v760, %v756
    %v1213 = vpack.c.b16 %v765, %v761
    %v1214 = vpack.c.b16 %v766, %v762
    %v1215 = vpack.c.b16 %v767, %v763
    %v1216 = vpack.c.b16 %v768, %v764
    %v1217 = vpack.c.b16 %v773, %v769
    %v1218 = vpack.c.b16 %v774, %v770
    %v1219 = vpack.c.b16 %v775, %v771
    %v1220 = vpack.c.b16 %v776, %v772
    %v1221 = vpack.c.b16 %v781, %v777
    %v1222 = vpack.c.b16 %v782, %v778
    %v1223 = vpack.c.b16 %v783, %v779
    %v1224 = vpack.c.b16 %v784, %v780
    %v1225 = vpack.c.b16 %v789, %v785
    %v1226 = vpack.c.b16 %v790, %v786
    %v1227 = vpack.c.b16 %v791, %v787
    %v1228 = vpack.c.b16 %v792, %v788
    %v1229 = vpack.c.b16 %v797, %v793
    %v1230 = vpack.c.b16 %v798, %v794
    %v1231 = vpack.c.b16 %v799, %v795
    %v1232 = vpack.c.b16 %v800, %v796
    %v1233 = vpack.c.b16 %v805, %v801
    %v1234 = vpack.c.b16 %v806, %v802
    %v1235 = vpack.c.b16 %v807, %v803
    %v1236 = vpack.c.b16 %v808, %v804
    %v1237 = vpack.c.b16 %v813, %v809
    %v1238 = vpack.c.b16 %v814, %v810
    %v1239 = vpack.c.b16 %v815, %v811
    %v1240 = vpack.c.b16 %v816, %v812
    %v1241 = vpack.c.b16 %v821, %v817
    %v1242 = vpack.c.b16 %v822, %v818
    %v1243 = vpack.c.b16 %v823, %v819
    %v1244 = vpack.c.b16 %v824, %v820
    %v1245 = vpack.c.b16 %v829, %v825
    %v1246 = vpack.c.b16 %v830, %v826
    %v1247 = vpack.c.b16 %v831, %v827
    %v1248 = vpack.c.b16 %v832, %v828
    %v1249 = vpack.c.b16 %v837, %v833
    %v1250 = vpack.c.b16 %v838, %v834
    %v1251 = vpack.c.b16 %v839, %v835
    %v1252 = vpack.c.b16 %v840, %v836
    %v1253 = vpack.c.b16 %v845, %v841
    %v1254 = vpack.c.b16 %v846, %v842
    %v1255 = vpack.c.b16 %v847, %v843
    %v1256 = vpack.c.b16 %v848, %v844
    %v1257 = vpack.c.b16 %v853, %v849
    %v1258 = vpack.c.b16 %v854, %v850
    %v1259 = vpack.c.b16 %v855, %v851
    %v1260 = vpack.c.b16 %v856, %v852
    %v1261 = vpack.c.b16 %v861, %v857
    %v1262 = vpack.c.b16 %v862, %v858
    %v1263 = vpack.c.b16 %v863, %v859
    %v1264 = vpack.c.b16 %v864, %v860
    %v1265 = vpack.c.b16 %v869, %v865
    %v1266 = vpack.c.b16 %v870, %v866
    %v1267 = vpack.c.b16 %v871, %v867
    %v1268 = vpack.c.b16 %v872, %v868
    %v1269 = vpack.c.b16 %v877, %v873
    %v1270 = vpack.c.b16 %v878, %v874
    %v1271 = vpack.c.b16 %v879, %v875
    %v1272 = vpack.c.b16 %v880, %v876
    %v1273 = vpack.c.b16 %v885, %v881
    %v1274 = vpack.c.b16 %v886, %v882
    %v1275 = vpack.c.b16 %v887, %v883
    %v1276 = vpack.c.b16 %v888, %v884
    %v1277 = vpack.c.b16 %v893, %v889
    %v1278 = vpack.c.b16 %v894, %v890
    %v1279 = vpack.c.b16 %v895, %v891
    %v1280 = vpack.c.b16 %v896, %v892
    %v1281 = vpack.c.b16 %v901, %v897
    %v1282 = vpack.c.b16 %v902, %v898
    %v1283 = vpack.c.b16 %v903, %v899
    %v1284 = vpack.c.b16 %v904, %v900
    %v1285 = vpack.c.b16 %v909, %v905
    %v1286 = vpack.c.b16 %v910, %v906
    %v1287 = vpack.c.b16 %v911, %v907
    %v1288 = vpack.c.b16 %v912, %v908
    %v1289 = vpack.c.b16 %v917, %v913
    %v1290 = vpack.c.b16 %v918, %v914
    %v1291 = vpack.c.b16 %v919, %v915
    %v1292 = vpack.c.b16 %v920, %v916
    %v1293 = vpack.c.b16 %v925, %v921
    %v1294 = vpack.c.b16 %v926, %v922
    %v1295 = vpack.c.b16 %v927, %v923
    %v1296 = vpack.c.b16 %v928, %v924
    %v1297 = vpack.c.b16 %v933, %v929
    %v1298 = vpack.c.b16 %v934, %v930
    %v1299 = vpack.c.b16 %v935, %v931
    %v1300 = vpack.c.b16 %v936, %v932
    %v1301 = vpack.c.b16 %v941, %v937
    %v1302 = vpack.c.b16 %v942, %v938
    %v1303 = vpack.c.b16 %v943, %v939
    %v1304 = vpack.c.b16 %v944, %v940
    %v1305 = vpack.c.b16 %v949, %v945
    %v1306 = vpack.c.b16 %v950, %v946
    %v1307 = vpack.c.b16 %v951, %v947
    %v1308 = vpack.c.b16 %v952, %v948
    %v1309 = vpack.c.b16 %v957, %v953
    %v1310 = vpack.c.b16 %v958, %v954
    %v1311 = vpack.c.b16 %v959, %v955
    %v1312 = vpack.c.b16 %v960, %v956
    %v1313 = vpack.c.b16 %v965, %v961
    %v1314 = vpack.c.b16 %v966, %v962
    %v1315 = vpack.c.b16 %v967, %v963
    %v1316 = vpack.c.b16 %v968, %v964
    %v1317 = vpack.c.b16 %v973, %v969
    %v1318 = vpack.c.b16 %v974, %v970
    %v1319 = vpack.c.b16 %v975, %v971
    %v1320 = vpack.c.b16 %v976, %v972
    %v1321 = vpack.c.b16 %v981, %v977
    %v1322 = vpack.c.b16 %v982, %v978
    %v1323 = vpack.c.b16 %v983, %v979
    %v1324 = vpack.c.b16 %v984, %v980
    %v1325 = vpack.c.b16 %v989, %v985
    %v1326 = vpack.c.b16 %v990, %v986
    %v1327 = vpack.c.b16 %v991, %v987
    %v1328 = vpack.c.b16 %v992, %v988
    %v1329 = vpack.c.b16 %v997, %v993
    %v1330 = vpack.c.b16 %v998, %v994
    %v1331 = vpack.c.b16 %v999, %v995
    %v1332 = vpack.c.b16 %v1000, %v996
    %v1333 = vpack.c.b16 %v1005, %v1001
    %v1334 = vpack.c.b16 %v1006, %v1002
    %v1335 = vpack.c.b16 %v1007, %v1003
    %v1336 = vpack.c.b16 %v1008, %v1004
    %v1337 = vpack.c.b16 %v1013, %v1009
    %v1338 = vpack.c.b16 %v1014, %v1010
    %v1339 = vpack.c.b16 %v1015, %v1011
    %v1340 = vpack.c.b16 %v1016, %v1012
    %v1341 = vpack.c.b16 %v1021, %v1017
    %v1342 = vpack.c.b16 %v1022, %v1018
    %v1343 = vpack.c.b16 %v1023, %v1019
    %v1344 = vpack.c.b16 %v1024, %v1020
    %v1345 = vpack.c.b16 %v1029, %v1025
    %v1346 = vpack.c.b16 %v1030, %v1026
    %v1347 = vpack.c.b16 %v1031, %v1027
    %v1348 = vpack.c.b16 %v1032, %v1028
    %v1349 = vpack.c.b16 %v1037, %v1033
    %v1350 = vpack.c.b16 %v1038, %v1034
    %v1351 = vpack.c.b16 %v1039, %v1035
    %v1352 = vpack.c.b16 %v1040, %v1036
    %v1353 = vpack.c.b16 %v1045, %v1041
    %v1354 = vpack.c.b16 %v1046, %v1042
    %v1355 = vpack.c.b16 %v1047, %v1043
    %v1356 = vpack.c.b16 %v1048, %v1044
    %v1357 = vpack.c.b16 %v1053, %v1049
    %v1358 = vpack.c.b16 %v1054, %v1050
    %v1359 = vpack.c.b16 %v1055, %v1051
    %v1360 = vpack.c.b16 %v1056, %v1052
    %v1361 = vpack.c.b16 %v1061, %v1057
    %v1362 = vpack.c.b16 %v1062, %v1058
    %v1363 = vpack.c.b16 %v1063, %v1059
    %v1364 = vpack.c.b16 %v1064, %v1060
    %v1365 = vpack.c.b16 %v1069, %v1065
    %v1366 = vpack.c.b16 %v1070, %v1066
    %v1367 = vpack.c.b16 %v1071, %v1067
    %v1368 = vpack.c.b16 %v1072, %v1068
    %v1369 = vpack.c.b16 %v1077, %v1073
    %v1370 = vpack.c.b16 %v1078, %v1074
    %v1371 = vpack.c.b16 %v1079, %v1075
    %v1372 = vpack.c.b16 %v1080, %v1076
    %v1373 = vpack.c.b16 %v1085, %v1081
    %v1374 = vpack.c.b16 %v1086, %v1082
    %v1375 = vpack.c.b16 %v1087, %v1083
    %v1376 = vpack.c.b16 %v1088, %v1084
    %v1377 = vpack.c.b16 %v1093, %v1089
    %v1378 = vpack.c.b16 %v1094, %v1090
    %v1379 = vpack.c.b16 %v1095, %v1091
    %v1380 = vpack.c.b16 %v1096, %v1092
    %v1381 = vpack.c.b16 %v1101, %v1097
    %v1382 = vpack.c.b16 %v1102, %v1098
    %v1383 = vpack.c.b16 %v1103, %v1099
    %v1384 = vpack.c.b16 %v1104, %v1100
    %v1385 = vpack.c.b16 %v1109, %v1105
    %v1386 = vpack.c.b16 %v1110, %v1106
    %v1387 = vpack.c.b16 %v1111, %v1107
    %v1388 = vpack.c.b16 %v1112, %v1108
    %v1389 = vpack.c.b16 %v1117, %v1113
    %v1390 = vpack.c.b16 %v1118, %v1114
    %v1391 = vpack.c.b16 %v1119, %v1115
    %v1392 = vpack.c.b16 %v1120, %v1116
    %v1393 = vpack.c.b16 %v1125, %v1121
    %v1394 = vpack.c.b16 %v1126, %v1122
    %v1395 = vpack.c.b16 %v1127, %v1123
    %v1396 = vpack.c.b16 %v1128, %v1124
    %v1397 = vpack.c.b16 %v1133, %v1129
    %v1398 = vpack.c.b16 %v1134, %v1130
    %v1399 = vpack.c.b16 %v1135, %v1131
    %v1400 = vpack.c.b16 %v1136, %v1132
    %v1401 = vpack.c.b16 %v1141, %v1137
    %v1402 = vpack.c.b16 %v1142, %v1138
    %v1403 = vpack.c.b16 %v1143, %v1139
    %v1404 = vpack.c.b16 %v1144, %v1140
    %v1405 = vpack.c.b16 %v1149, %v1145
    %v1406 = vpack.c.b16 %v1150, %v1146
    %v1407 = vpack.c.b16 %v1151, %v1147
    %v1408 = vpack.c.b16 %v1152, %v1148
    %1665 = vmatprep.subr.bf16.mxu0 %v1154
    %1666 = vmatpush1.bf16.msra.mxu0 %v1153
    %1667 = vmatprep.subr.bf16.mxu0 %v1158
    %1668 = vmatpush1.bf16.msra.mxu0 %v1157
    %1669 = vmatprep.subr.bf16.mxu0 %v1162
    %1670 = vmatpush1.bf16.msra.mxu0 %v1161
    %1671 = vmatprep.subr.bf16.mxu0 %v1166
    %1672 = vmatpush1.bf16.msra.mxu0 %v1165
    %1673 = vmatprep.subr.bf16.mxu0 %v1170
    %1674 = vmatpush1.bf16.msra.mxu0 %v1169
    %1675 = vmatprep.subr.bf16.mxu0 %v1174
    %1676 = vmatpush1.bf16.msra.mxu0 %v1173
    %1677 = vmatprep.subr.bf16.mxu0 %v1178
    %1678 = vmatpush1.bf16.msra.mxu0 %v1177
    %1679 = vmatprep.subr.bf16.mxu0 %v1182
    %1680 = vmatpush1.bf16.msra.mxu0 %v1181
    %1681 = vmatprep.subr.bf16.mxu0 %v1186
    %1682 = vmatpush1.bf16.msra.mxu0 %v1185
    %1683 = vmatprep.subr.bf16.mxu0 %v1190
    %1684 = vmatpush1.bf16.msra.mxu0 %v1189
    %1685 = vmatprep.subr.bf16.mxu0 %v1194
    %1686 = vmatpush1.bf16.msra.mxu0 %v1193
    %1687 = vmatprep.subr.bf16.mxu0 %v1198
    %1688 = vmatpush1.bf16.msra.mxu0 %v1197
    %1689 = vmatprep.subr.bf16.mxu0 %v1202
    %1690 = vmatpush1.bf16.msra.mxu0 %v1201
    %1691 = vmatprep.subr.bf16.mxu0 %v1206
    %1692 = vmatpush1.bf16.msra.mxu0 %v1205
    %1693 = vmatprep.subr.bf16.mxu0 %v1210
    %1694 = vmatpush1.bf16.msra.mxu0 %v1209
    %1695 = vmatprep.subr.bf16.mxu0 %v1214
    %1696 = vmatpush1.bf16.msra.mxu0 %v1213
    %1697 = vmatprep.mubr.bf16.mxu0 %v100
    %1698 = vmatmul.mubr.bf16.gmra.mrb[0].mxu0 %v99
    %v1699 = vpop.f32.mrb[0].mxu0
    %v1700 = vadd.f32 %v368, %v1699
    %v1701 = vpop.f32.mrb[0].mxu0
    %v1702 = vadd.f32 %v372, %v1701
    %v1703 = vpop.f32.mrb[0].mxu0
    %v1704 = vadd.f32 %v368, %v1703
    %v1705 = vpop.f32.mrb[0].mxu0
    %v1706 = vadd.f32 %v372, %v1705
    %1707 = vdwg.mxu0
    %1708 = vmatprep.subr.bf16.mxu0 %v1218
    %1709 = vmatpush1.bf16.msra.mxu0 %v1217
    %1710 = vmatprep.subr.bf16.mxu0 %v1222
    %1711 = vmatpush1.bf16.msra.mxu0 %v1221
    %1712 = vmatprep.subr.bf16.mxu0 %v1226
    %1713 = vmatpush1.bf16.msra.mxu0 %v1225
    %1714 = vmatprep.subr.bf16.mxu0 %v1230
    %1715 = vmatpush1.bf16.msra.mxu0 %v1229
    %1716 = vmatprep.subr.bf16.mxu0 %v1234
    %1717 = vmatpush1.bf16.msra.mxu0 %v1233
    %1718 = vmatprep.subr.bf16.mxu0 %v1238
    %1719 = vmatpush1.bf16.msra.mxu0 %v1237
    %1720 = vmatprep.subr.bf16.mxu0 %v1242
    %1721 = vmatpush1.bf16.msra.mxu0 %v1241
    %1722 = vmatprep.subr.bf16.mxu0 %v1246
    %1723 = vmatpush1.bf16.msra.mxu0 %v1245
    %1724 = vmatprep.subr.bf16.mxu0 %v1250
    %1725 = vmatpush1.bf16.msra.mxu0 %v1249
    %1726 = vmatprep.subr.bf16.mxu0 %v1254
    %1727 = vmatpush1.bf16.msra.mxu0 %v1253
    %1728 = vmatprep.subr.bf16.mxu0 %v1258
    %1729 = vmatpush1.bf16.msra.mxu0 %v1257
    %1730 = vmatprep.subr.bf16.mxu0 %v1262
    %1731 = vmatpush1.bf16.msra.mxu0 %v1261
    %1732 = vmatprep.subr.bf16.mxu0 %v1266
    %1733 = vmatpush1.bf16.msra.mxu0 %v1265
    %1734 = vmatprep.subr.bf16.mxu0 %v1270
    %1735 = vmatpush1.bf16.msra.mxu0 %v1269
    %1736 = vmatprep.subr.bf16.mxu0 %v1274
    %1737 = vmatpush1.bf16.msra.mxu0 %v1273
    %1738 = vmatprep.subr.bf16.mxu0 %v1278
    %1739 = vmatpush1.bf16.msra.mxu0 %v1277
    %1740 = vmatprep.mubr.bf16.mxu0 %v102
    %1741 = vmatmul.mubr.bf16.gmra.mrb[0].mxu0 %v101
    %v1742 = vpop.f32.mrb[0].mxu0
    %v1743 = vadd.f32 %v1700, %v1742
    %v1744 = vpop.f32.mrb[0].mxu0
    %v1745 = vadd.f32 %v1702, %v1744
    %v1746 = vpop.f32.mrb[0].mxu0
    %v1747 = vadd.f32 %v1704, %v1746
    %v1748 = vpop.f32.mrb[0].mxu0
    %v1749 = vadd.f32 %v1706, %v1748
    %1750 = vdwg.mxu0
    %1751 = vmatprep.subr.bf16.mxu0 %v1282
    %1752 = vmatpush1.bf16.msra.mxu0 %v1281
    %1753 = vmatprep.subr.bf16.mxu0 %v1286
    %1754 = vmatpush1.bf16.msra.mxu0 %v1285
    %1755 = vmatprep.subr.bf16.mxu0 %v1290
    %1756 = vmatpush1.bf16.msra.mxu0 %v1289
    %1757 = vmatprep.subr.bf16.mxu0 %v1294
    %1758 = vmatpush1.bf16.msra.mxu0 %v1293
    %1759 = vmatprep.subr.bf16.mxu0 %v1298
    %1760 = vmatpush1.bf16.msra.mxu0 %v1297
    %1761 = vmatprep.subr.bf16.mxu0 %v1302
    %1762 = vmatpush1.bf16.msra.mxu0 %v1301
    %1763 = vmatprep.subr.bf16.mxu0 %v1306
    %1764 = vmatpush1.bf16.msra.mxu0 %v1305
    %1765 = vmatprep.subr.bf16.mxu0 %v1310
    %1766 = vmatpush1.bf16.msra.mxu0 %v1309
    %1767 = vmatprep.subr.bf16.mxu0 %v1314
    %1768 = vmatpush1.bf16.msra.mxu0 %v1313
    %1769 = vmatprep.subr.bf16.mxu0 %v1318
    %1770 = vmatpush1.bf16.msra.mxu0 %v1317
    %1771 = vmatprep.subr.bf16.mxu0 %v1322
    %1772 = vmatpush1.bf16.msra.mxu0 %v1321
    %1773 = vmatprep.subr.bf16.mxu0 %v1326
    %1774 = vmatpush1.bf16.msra.mxu0 %v1325
    %1775 = vmatprep.subr.bf16.mxu0 %v1330
    %1776 = vmatpush1.bf16.msra.mxu0 %v1329
    %1777 = vmatprep.subr.bf16.mxu0 %v1334
    %1778 = vmatpush1.bf16.msra.mxu0 %v1333
    %1779 = vmatprep.subr.bf16.mxu0 %v1338
    %1780 = vmatpush1.bf16.msra.mxu0 %v1337
    %1781 = vmatprep.subr.bf16.mxu0 %v1342
    %1782 = vmatpush1.bf16.msra.mxu0 %v1341
    %1783 = vmatprep.mubr.bf16.mxu0 %v104
    %1784 = vmatmul.mubr.bf16.gmra.mrb[0].mxu0 %v103
    %v1785 = vpop.f32.mrb[0].mxu0
    %v1786 = vadd.f32 %v1743, %v1785
    %v1787 = vpop.f32.mrb[0].mxu0
    %v1788 = vadd.f32 %v1745, %v1787
    %v1789 = vpop.f32.mrb[0].mxu0
    %v1790 = vadd.f32 %v1747, %v1789
    %v1791 = vpop.f32.mrb[0].mxu0
    %v1792 = vadd.f32 %v1749, %v1791
    %1793 = vdwg.mxu0
    %1794 = vmatprep.subr.bf16.mxu0 %v1346
    %1795 = vmatpush1.bf16.msra.mxu0 %v1345
    %1796 = vmatprep.subr.bf16.mxu0 %v1350
    %1797 = vmatpush1.bf16.msra.mxu0 %v1349
    %1798 = vmatprep.subr.bf16.mxu0 %v1354
    %1799 = vmatpush1.bf16.msra.mxu0 %v1353
    %1800 = vmatprep.subr.bf16.mxu0 %v1358
    %1801 = vmatpush1.bf16.msra.mxu0 %v1357
    %1802 = vmatprep.subr.bf16.mxu0 %v1362
    %1803 = vmatpush1.bf16.msra.mxu0 %v1361
    %1804 = vmatprep.subr.bf16.mxu0 %v1366
    %1805 = vmatpush1.bf16.msra.mxu0 %v1365
    %1806 = vmatprep.subr.bf16.mxu0 %v1370
    %1807 = vmatpush1.bf16.msra.mxu0 %v1369
    %1808 = vmatprep.subr.bf16.mxu0 %v1374
    %1809 = vmatpush1.bf16.msra.mxu0 %v1373
    %1810 = vmatprep.subr.bf16.mxu0 %v1378
    %1811 = vmatpush1.bf16.msra.mxu0 %v1377
    %1812 = vmatprep.subr.bf16.mxu0 %v1382
    %1813 = vmatpush1.bf16.msra.mxu0 %v1381
    %1814 = vmatprep.subr.bf16.mxu0 %v1386
    %1815 = vmatpush1.bf16.msra.mxu0 %v1385
    %1816 = vmatprep.subr.bf16.mxu0 %v1390
    %1817 = vmatpush1.bf16.msra.mxu0 %v1389
    %1818 = vmatprep.subr.bf16.mxu0 %v1394
    %1819 = vmatpush1.bf16.msra.mxu0 %v1393
    %1820 = vmatprep.subr.bf16.mxu0 %v1398
    %1821 = vmatpush1.bf16.msra.mxu0 %v1397
    %1822 = vmatprep.subr.bf16.mxu0 %v1402
    %1823 = vmatpush1.bf16.msra.mxu0 %v1401
    %1824 = vmatprep.subr.bf16.mxu0 %v1406
    %1825 = vmatpush1.bf16.msra.mxu0 %v1405
    %1826 = vmatprep.mubr.bf16.mxu0 %v106
    %1827 = vmatmul.mubr.bf16.gmra.mrb[0].mxu0 %v105
    %v1828 = vpop.f32.mrb[0].mxu0
    %v1829 = vadd.f32 %v1786, %v1828
    %v1830 = vpop.f32.mrb[0].mxu0
    %v1831 = vadd.f32 %v1788, %v1830
    %v1832 = vpop.f32.mrb[0].mxu0
    %v1833 = vadd.f32 %v1790, %v1832
    %v1834 = vpop.f32.mrb[0].mxu0
    %v1835 = vadd.f32 %v1792, %v1834
    %1836 = vdwg.mxu0
    %1837 = vmatprep.subr.bf16.mxu0 %v1156
    %1838 = vmatpush1.bf16.msra.mxu0 %v1155
    %1839 = vmatprep.subr.bf16.mxu0 %v1160
    %1840 = vmatpush1.bf16.msra.mxu0 %v1159
    %1841 = vmatprep.subr.bf16.mxu0 %v1164
    %1842 = vmatpush1.bf16.msra.mxu0 %v1163
    %1843 = vmatprep.subr.bf16.mxu0 %v1168
    %1844 = vmatpush1.bf16.msra.mxu0 %v1167
    %1845 = vmatprep.subr.bf16.mxu0 %v1172
    %1846 = vmatpush1.bf16.msra.mxu0 %v1171
    %1847 = vmatprep.subr.bf16.mxu0 %v1176
    %1848 = vmatpush1.bf16.msra.mxu0 %v1175
    %1849 = vmatprep.subr.bf16.mxu0 %v1180
    %1850 = vmatpush1.bf16.msra.mxu0 %v1179
    %1851 = vmatprep.subr.bf16.mxu0 %v1184
    %1852 = vmatpush1.bf16.msra.mxu0 %v1183
    %1853 = vmatprep.subr.bf16.mxu0 %v1188
    %1854 = vmatpush1.bf16.msra.mxu0 %v1187
    %1855 = vmatprep.subr.bf16.mxu0 %v1192
    %1856 = vmatpush1.bf16.msra.mxu0 %v1191
    %1857 = vmatprep.subr.bf16.mxu0 %v1196
    %1858 = vmatpush1.bf16.msra.mxu0 %v1195
    %1859 = vmatprep.subr.bf16.mxu0 %v1200
    %1860 = vmatpush1.bf16.msra.mxu0 %v1199
    %1861 = vmatprep.subr.bf16.mxu0 %v1204
    %1862 = vmatpush1.bf16.msra.mxu0 %v1203
    %1863 = vmatprep.subr.bf16.mxu0 %v1208
    %1864 = vmatpush1.bf16.msra.mxu0 %v1207
    %1865 = vmatprep.subr.bf16.mxu0 %v1212
    %1866 = vmatpush1.bf16.msra.mxu0 %v1211
    %1867 = vmatprep.subr.bf16.mxu0 %v1216
    %1868 = vmatpush1.bf16.msra.mxu0 %v1215
    %1869 = vmatprep.mubr.bf16.mxu0 %v100
    %1870 = vmatmul.mubr.bf16.gmra.mrb[0].mxu0 %v99
    %v1871 = vpop.f32.mrb[0].mxu0
    %v1872 = vadd.f32 %v376, %v1871
    %v1873 = vpop.f32.mrb[0].mxu0
    %v1874 = vadd.f32 %v380, %v1873
    %v1875 = vpop.f32.mrb[0].mxu0
    %v1876 = vadd.f32 %v376, %v1875
    %v1877 = vpop.f32.mrb[0].mxu0
    %v1878 = vadd.f32 %v380, %v1877
    %1879 = vdwg.mxu0
    %1880 = vmatprep.subr.bf16.mxu0 %v1220
    %1881 = vmatpush1.bf16.msra.mxu0 %v1219
    %1882 = vmatprep.subr.bf16.mxu0 %v1224
    %1883 = vmatpush1.bf16.msra.mxu0 %v1223
    %1884 = vmatprep.subr.bf16.mxu0 %v1228
    %1885 = vmatpush1.bf16.msra.mxu0 %v1227
    %1886 = vmatprep.subr.bf16.mxu0 %v1232
    %1887 = vmatpush1.bf16.msra.mxu0 %v1231
    %1888 = vmatprep.subr.bf16.mxu0 %v1236
    %1889 = vmatpush1.bf16.msra.mxu0 %v1235
    %1890 = vmatprep.subr.bf16.mxu0 %v1240
    %1891 = vmatpush1.bf16.msra.mxu0 %v1239
    %1892 = vmatprep.subr.bf16.mxu0 %v1244
    %1893 = vmatpush1.bf16.msra.mxu0 %v1243
    %1894 = vmatprep.subr.bf16.mxu0 %v1248
    %1895 = vmatpush1.bf16.msra.mxu0 %v1247
    %1896 = vmatprep.subr.bf16.mxu0 %v1252
    %1897 = vmatpush1.bf16.msra.mxu0 %v1251
    %1898 = vmatprep.subr.bf16.mxu0 %v1256
    %1899 = vmatpush1.bf16.msra.mxu0 %v1255
    %1900 = vmatprep.subr.bf16.mxu0 %v1260
    %1901 = vmatpush1.bf16.msra.mxu0 %v1259
    %1902 = vmatprep.subr.bf16.mxu0 %v1264
    %1903 = vmatpush1.bf16.msra.mxu0 %v1263
    %1904 = vmatprep.subr.bf16.mxu0 %v1268
    %1905 = vmatpush1.bf16.msra.mxu0 %v1267
    %1906 = vmatprep.subr.bf16.mxu0 %v1272
    %1907 = vmatpush1.bf16.msra.mxu0 %v1271
    %1908 = vmatprep.subr.bf16.mxu0 %v1276
    %1909 = vmatpush1.bf16.msra.mxu0 %v1275
    %1910 = vmatprep.subr.bf16.mxu0 %v1280
    %1911 = vmatpush1.bf16.msra.mxu0 %v1279
    %1912 = vmatprep.mubr.bf16.mxu0 %v102
    %1913 = vmatmul.mubr.bf16.gmra.mrb[0].mxu0 %v101
    %v1914 = vpop.f32.mrb[0].mxu0
    %v1915 = vadd.f32 %v1872, %v1914
    %v1916 = vpop.f32.mrb[0].mxu0
    %v1917 = vadd.f32 %v1874, %v1916
    %v1918 = vpop.f32.mrb[0].mxu0
    %v1919 = vadd.f32 %v1876, %v1918
    %v1920 = vpop.f32.mrb[0].mxu0
    %v1921 = vadd.f32 %v1878, %v1920
    %1922 = vdwg.mxu0
    %1923 = vmatprep.subr.bf16.mxu0 %v1284
    %1924 = vmatpush1.bf16.msra.mxu0 %v1283
    %1925 = vmatprep.subr.bf16.mxu0 %v1288
    %1926 = vmatpush1.bf16.msra.mxu0 %v1287
    %1927 = vmatprep.subr.bf16.mxu0 %v1292
    %1928 = vmatpush1.bf16.msra.mxu0 %v1291
    %1929 = vmatprep.subr.bf16.mxu0 %v1296
    %1930 = vmatpush1.bf16.msra.mxu0 %v1295
    %1931 = vmatprep.subr.bf16.mxu0 %v1300
    %1932 = vmatpush1.bf16.msra.mxu0 %v1299
    %1933 = vmatprep.subr.bf16.mxu0 %v1304
    %1934 = vmatpush1.bf16.msra.mxu0 %v1303
    %1935 = vmatprep.subr.bf16.mxu0 %v1308
    %1936 = vmatpush1.bf16.msra.mxu0 %v1307
    %1937 = vmatprep.subr.bf16.mxu0 %v1312
    %1938 = vmatpush1.bf16.msra.mxu0 %v1311
    %1939 = vmatprep.subr.bf16.mxu0 %v1316
    %1940 = vmatpush1.bf16.msra.mxu0 %v1315
    %1941 = vmatprep.subr.bf16.mxu0 %v1320
    %1942 = vmatpush1.bf16.msra.mxu0 %v1319
    %1943 = vmatprep.subr.bf16.mxu0 %v1324
    %1944 = vmatpush1.bf16.msra.mxu0 %v1323
    %1945 = vmatprep.subr.bf16.mxu0 %v1328
    %1946 = vmatpush1.bf16.msra.mxu0 %v1327
    %1947 = vmatprep.subr.bf16.mxu0 %v1332
    %1948 = vmatpush1.bf16.msra.mxu0 %v1331
    %1949 = vmatprep.subr.bf16.mxu0 %v1336
    %1950 = vmatpush1.bf16.msra.mxu0 %v1335
    %1951 = vmatprep.subr.bf16.mxu0 %v1340
    %1952 = vmatpush1.bf16.msra.mxu0 %v1339
    %1953 = vmatprep.subr.bf16.mxu0 %v1344
    %1954 = vmatpush1.bf16.msra.mxu0 %v1343
    %1955 = vmatprep.mubr.bf16.mxu0 %v104
    %1956 = vmatmul.mubr.bf16.gmra.mrb[0].mxu0 %v103
    %v1957 = vpop.f32.mrb[0].mxu0
    %v1958 = vadd.f32 %v1915, %v1957
    %v1959 = vpop.f32.mrb[0].mxu0
    %v1960 = vadd.f32 %v1917, %v1959
    %v1961 = vpop.f32.mrb[0].mxu0
    %v1962 = vadd.f32 %v1919, %v1961
    %v1963 = vpop.f32.mrb[0].mxu0
    %v1964 = vadd.f32 %v1921, %v1963
    %1965 = vdwg.mxu0
    %1966 = vmatprep.subr.bf16.mxu0 %v1348
    %1967 = vmatpush1.bf16.msra.mxu0 %v1347
    %1968 = vmatprep.subr.bf16.mxu0 %v1352
    %1969 = vmatpush1.bf16.msra.mxu0 %v1351
    %1970 = vmatprep.subr.bf16.mxu0 %v1356
    %1971 = vmatpush1.bf16.msra.mxu0 %v1355
    %1972 = vmatprep.subr.bf16.mxu0 %v1360
    %1973 = vmatpush1.bf16.msra.mxu0 %v1359
    %1974 = vmatprep.subr.bf16.mxu0 %v1364
    %1975 = vmatpush1.bf16.msra.mxu0 %v1363
    %1976 = vmatprep.subr.bf16.mxu0 %v1368
    %1977 = vmatpush1.bf16.msra.mxu0 %v1367
    %1978 = vmatprep.subr.bf16.mxu0 %v1372
    %1979 = vmatpush1.bf16.msra.mxu0 %v1371
    %1980 = vmatprep.subr.bf16.mxu0 %v1376
    %1981 = vmatpush1.bf16.msra.mxu0 %v1375
    %1982 = vmatprep.subr.bf16.mxu0 %v1380
    %1983 = vmatpush1.bf16.msra.mxu0 %v1379
    %1984 = vmatprep.subr.bf16.mxu0 %v1384
    %1985 = vmatpush1.bf16.msra.mxu0 %v1383
    %1986 = vmatprep.subr.bf16.mxu0 %v1388
    %1987 = vmatpush1.bf16.msra.mxu0 %v1387
    %1988 = vmatprep.subr.bf16.mxu0 %v1392
    %1989 = vmatpush1.bf16.msra.mxu0 %v1391
    %1990 = vmatprep.subr.bf16.mxu0 %v1396
    %1991 = vmatpush1.bf16.msra.mxu0 %v1395
    %1992 = vmatprep.subr.bf16.mxu0 %v1400
    %1993 = vmatpush1.bf16.msra.mxu0 %v1399
    %1994 = vmatprep.subr.bf16.mxu0 %v1404
    %1995 = vmatpush1.bf16.msra.mxu0 %v1403
    %1996 = vmatprep.subr.bf16.mxu0 %v1408
    %1997 = vmatpush1.bf16.msra.mxu0 %v1407
    %1998 = vmatprep.mubr.bf16.mxu0 %v106
    %1999 = vmatmul.mubr.bf16.gmra.mrb[0].mxu0 %v105
    %v2000 = vpop.f32.mrb[0].mxu0
    %v2001 = vadd.f32 %v1958, %v2000
    %v2002 = vpop.f32.mrb[0].mxu0
    %v2003 = vadd.f32 %v1960, %v2002
    %v2004 = vpop.f32.mrb[0].mxu0
    %v2005 = vadd.f32 %v1962, %v2004
    %v2006 = vpop.f32.mrb[0].mxu0
    %v2007 = vadd.f32 %v1964, %v2006
    %2008 = vdwg.mxu0
    %v2009 = vmax.f32 %v1829, 0.0
    %v2010 = vmax.f32 %v1831, 0.0
    %v2011 = vmax.f32 %v2001, 0.0
    %v2012 = vmax.f32 %v2003, 0.0
    %v2013 = vmax.f32 %v1833, 0.0
    %v2014 = vmax.f32 %v1835, 0.0
    %v2015 = vmax.f32 %v2005, 0.0
    %v2016 = vmax.f32 %v2007, 0.0
    %v2017 = vpack.c.bf16 %v2013, %v2009
    %v2018 = vpack.c.bf16 %v2014, %v2010
    %v2019 = vpack.c.bf16 %v2015, %v2011
    %v2020 = vpack.c.bf16 %v2016, %v2012
    %v2021 = vld [vmem:[#allocation7] sm:$0xff]
    %v2022 = vld [vmem:[#allocation7 + $0x8] sm:$0xff]
    %v2023 = vld [vmem:[#allocation7 + $0x10] sm:$0xff]
    %v2024 = vld [vmem:[#allocation7 + $0x18] sm:$0xff]
    %v2025 = vld [vmem:[#allocation7 + $0x20] sm:$0xff]
    %v2026 = vld [vmem:[#allocation7 + $0x28] sm:$0xff]
    %v2027 = vld [vmem:[#allocation7 + $0x30] sm:$0xff]
    %v2028 = vld [vmem:[#allocation7 + $0x38] sm:$0xff]
    %v2029 = vld [vmem:[#allocation7 + $0x40] sm:$0xff]
    %v2030 = vld [vmem:[#allocation7 + $0x48] sm:$0xff]
    %v2031 = vld [vmem:[#allocation7 + $0x50] sm:$0xff]
    %v2032 = vld [vmem:[#allocation7 + $0x58] sm:$0xff]
    %v2033 = vld [vmem:[#allocation7 + $0x60] sm:$0xff]
    %v2034 = vld [vmem:[#allocation7 + $0x68] sm:$0xff]
    %v2035 = vld [vmem:[#allocation7 + $0x70] sm:$0xff]
    %v2036 = vld [vmem:[#allocation7 + $0x78] sm:$0xff]
    %v2037 = vld [vmem:[#allocation7 + $0x80] sm:$0xff]
    %v2038 = vld [vmem:[#allocation7 + $0x88] sm:$0xff]
    %v2039 = vld [vmem:[#allocation7 + $0x90] sm:$0xff]
    %v2040 = vld [vmem:[#allocation7 + $0x98] sm:$0xff]
    %v2041 = vld [vmem:[#allocation7 + $0xa0] sm:$0xff]
    %v2042 = vld [vmem:[#allocation7 + $0xa8] sm:$0xff]
    %v2043 = vld [vmem:[#allocation7 + $0xb0] sm:$0xff]
    %v2044 = vld [vmem:[#allocation7 + $0xb8] sm:$0xff]
    %v2045 = vld [vmem:[#allocation7 + $0xc0] sm:$0xff]
    %v2046 = vld [vmem:[#allocation7 + $0xc8] sm:$0xff]
    %v2047 = vld [vmem:[#allocation7 + $0xd0] sm:$0xff]
    %v2048 = vld [vmem:[#allocation7 + $0xd8] sm:$0xff]
    %v2049 = vld [vmem:[#allocation7 + $0xe0] sm:$0xff]
    %v2050 = vld [vmem:[#allocation7 + $0xe8] sm:$0xff]
    %v2051 = vld [vmem:[#allocation7 + $0xf0] sm:$0xff]
    %v2052 = vld [vmem:[#allocation7 + $0xf8] sm:$0xff]
    %v2053 = vld [vmem:[#allocation7 + $0x100] sm:$0xff]
    %v2054 = vld [vmem:[#allocation7 + $0x108] sm:$0xff]
    %v2055 = vld [vmem:[#allocation7 + $0x110] sm:$0xff]
    %v2056 = vld [vmem:[#allocation7 + $0x118] sm:$0xff]
    %v2057 = vld [vmem:[#allocation7 + $0x120] sm:$0xff]
    %v2058 = vld [vmem:[#allocation7 + $0x128] sm:$0xff]
    %v2059 = vld [vmem:[#allocation7 + $0x130] sm:$0xff]
    %v2060 = vld [vmem:[#allocation7 + $0x138] sm:$0xff]
    %v2061 = vld [vmem:[#allocation7 + $0x140] sm:$0xff]
    %v2062 = vld [vmem:[#allocation7 + $0x148] sm:$0xff]
    %v2063 = vld [vmem:[#allocation7 + $0x150] sm:$0xff]
    %v2064 = vld [vmem:[#allocation7 + $0x158] sm:$0xff]
    %v2065 = vld [vmem:[#allocation7 + $0x160] sm:$0xff]
    %v2066 = vld [vmem:[#allocation7 + $0x168] sm:$0xff]
    %v2067 = vld [vmem:[#allocation7 + $0x170] sm:$0xff]
    %v2068 = vld [vmem:[#allocation7 + $0x178] sm:$0xff]
    %v2069 = vld [vmem:[#allocation7 + $0x180] sm:$0xff]
    %v2070 = vld [vmem:[#allocation7 + $0x188] sm:$0xff]
    %v2071 = vld [vmem:[#allocation7 + $0x190] sm:$0xff]
    %v2072 = vld [vmem:[#allocation7 + $0x198] sm:$0xff]
    %v2073 = vld [vmem:[#allocation7 + $0x1a0] sm:$0xff]
    %v2074 = vld [vmem:[#allocation7 + $0x1a8] sm:$0xff]
    %v2075 = vld [vmem:[#allocation7 + $0x1b0] sm:$0xff]
    %v2076 = vld [vmem:[#allocation7 + $0x1b8] sm:$0xff]
    %v2077 = vld [vmem:[#allocation7 + $0x1c0] sm:$0xff]
    %v2078 = vld [vmem:[#allocation7 + $0x1c8] sm:$0xff]
    %v2079 = vld [vmem:[#allocation7 + $0x1d0] sm:$0xff]
    %v2080 = vld [vmem:[#allocation7 + $0x1d8] sm:$0xff]
    %v2081 = vld [vmem:[#allocation7 + $0x1e0] sm:$0xff]
    %v2082 = vld [vmem:[#allocation7 + $0x1e8] sm:$0xff]
    %v2083 = vld [vmem:[#allocation7 + $0x1f0] sm:$0xff]
    %v2084 = vld [vmem:[#allocation7 + $0x1f8] sm:$0xff]
    %v2085 = vld [vmem:[%s4] sm:$0x3]
    %v2087 = vlaneseq
    %v2088 = vshrl.u32 %v2087, 7
    %v2089 = vsub.s32 0, %v2088
    %v2090 = vrot.slane %v2085, %v2089
    %v2091 = vlaneseq
    %v2092 = vshrl.u32 %v2091, 7
    %v2093 = vsub.s32 1, %v2092
    %v2094 = vrot.slane %v2085, %v2093
    %v2161 = vunpack.c.l.b16 %v2021
    %v2162 = vunpack.c.h.b16 %v2021
    %v2163 = vunpack.c.l.b16 %v2022
    %v2164 = vunpack.c.h.b16 %v2022
    %v2165 = vunpack.c.l.b16 %v2023
    %v2166 = vunpack.c.h.b16 %v2023
    %v2167 = vunpack.c.l.b16 %v2024
    %v2168 = vunpack.c.h.b16 %v2024
    %v2169 = vunpack.c.l.b16 %v2025
    %v2170 = vunpack.c.h.b16 %v2025
    %v2171 = vunpack.c.l.b16 %v2026
    %v2172 = vunpack.c.h.b16 %v2026
    %v2173 = vunpack.c.l.b16 %v2027
    %v2174 = vunpack.c.h.b16 %v2027
    %v2175 = vunpack.c.l.b16 %v2028
    %v2176 = vunpack.c.h.b16 %v2028
    %v2177 = vunpack.c.l.b16 %v2029
    %v2178 = vunpack.c.h.b16 %v2029
    %v2179 = vunpack.c.l.b16 %v2030
    %v2180 = vunpack.c.h.b16 %v2030
    %v2181 = vunpack.c.l.b16 %v2031
    %v2182 = vunpack.c.h.b16 %v2031
    %v2183 = vunpack.c.l.b16 %v2032
    %v2184 = vunpack.c.h.b16 %v2032
    %v2185 = vunpack.c.l.b16 %v2033
    %v2186 = vunpack.c.h.b16 %v2033
    %v2187 = vunpack.c.l.b16 %v2034
    %v2188 = vunpack.c.h.b16 %v2034
    %v2189 = vunpack.c.l.b16 %v2035
    %v2190 = vunpack.c.h.b16 %v2035
    %v2191 = vunpack.c.l.b16 %v2036
    %v2192 = vunpack.c.h.b16 %v2036
    %v2193 = vunpack.c.l.b16 %v2037
    %v2194 = vunpack.c.h.b16 %v2037
    %v2195 = vunpack.c.l.b16 %v2038
    %v2196 = vunpack.c.h.b16 %v2038
    %v2197 = vunpack.c.l.b16 %v2039
    %v2198 = vunpack.c.h.b16 %v2039
    %v2199 = vunpack.c.l.b16 %v2040
    %v2200 = vunpack.c.h.b16 %v2040
    %v2201 = vunpack.c.l.b16 %v2041
    %v2202 = vunpack.c.h.b16 %v2041
    %v2203 = vunpack.c.l.b16 %v2042
    %v2204 = vunpack.c.h.b16 %v2042
    %v2205 = vunpack.c.l.b16 %v2043
    %v2206 = vunpack.c.h.b16 %v2043
    %v2207 = vunpack.c.l.b16 %v2044
    %v2208 = vunpack.c.h.b16 %v2044
    %v2209 = vunpack.c.l.b16 %v2045
    %v2210 = vunpack.c.h.b16 %v2045
    %v2211 = vunpack.c.l.b16 %v2046
    %v2212 = vunpack.c.h.b16 %v2046
    %v2213 = vunpack.c.l.b16 %v2047
    %v2214 = vunpack.c.h.b16 %v2047
    %v2215 = vunpack.c.l.b16 %v2048
    %v2216 = vunpack.c.h.b16 %v2048
    %v2217 = vunpack.c.l.b16 %v2049
    %v2218 = vunpack.c.h.b16 %v2049
    %v2219 = vunpack.c.l.b16 %v2050
    %v2220 = vunpack.c.h.b16 %v2050
    %v2221 = vunpack.c.l.b16 %v2051
    %v2222 = vunpack.c.h.b16 %v2051
    %v2223 = vunpack.c.l.b16 %v2052
    %v2224 = vunpack.c.h.b16 %v2052
    %v2225 = vunpack.c.l.b16 %v2053
    %v2226 = vunpack.c.h.b16 %v2053
    %v2227 = vunpack.c.l.b16 %v2054
    %v2228 = vunpack.c.h.b16 %v2054
    %v2229 = vunpack.c.l.b16 %v2055
    %v2230 = vunpack.c.h.b16 %v2055
    %v2231 = vunpack.c.l.b16 %v2056
    %v2232 = vunpack.c.h.b16 %v2056
    %v2233 = vunpack.c.l.b16 %v2057
    %v2234 = vunpack.c.h.b16 %v2057
    %v2235 = vunpack.c.l.b16 %v2058
    %v2236 = vunpack.c.h.b16 %v2058
    %v2237 = vunpack.c.l.b16 %v2059
    %v2238 = vunpack.c.h.b16 %v2059
    %v2239 = vunpack.c.l.b16 %v2060
    %v2240 = vunpack.c.h.b16 %v2060
    %v2241 = vunpack.c.l.b16 %v2061
    %v2242 = vunpack.c.h.b16 %v2061
    %v2243 = vunpack.c.l.b16 %v2062
    %v2244 = vunpack.c.h.b16 %v2062
    %v2245 = vunpack.c.l.b16 %v2063
    %v2246 = vunpack.c.h.b16 %v2063
    %v2247 = vunpack.c.l.b16 %v2064
    %v2248 = vunpack.c.h.b16 %v2064
    %v2249 = vunpack.c.l.b16 %v2065
    %v2250 = vunpack.c.h.b16 %v2065
    %v2251 = vunpack.c.l.b16 %v2066
    %v2252 = vunpack.c.h.b16 %v2066
    %v2253 = vunpack.c.l.b16 %v2067
    %v2254 = vunpack.c.h.b16 %v2067
    %v2255 = vunpack.c.l.b16 %v2068
    %v2256 = vunpack.c.h.b16 %v2068
    %v2257 = vunpack.c.l.b16 %v2069
    %v2258 = vunpack.c.h.b16 %v2069
    %v2259 = vunpack.c.l.b16 %v2070
    %v2260 = vunpack.c.h.b16 %v2070
    %v2261 = vunpack.c.l.b16 %v2071
    %v2262 = vunpack.c.h.b16 %v2071
    %v2263 = vunpack.c.l.b16 %v2072
    %v2264 = vunpack.c.h.b16 %v2072
    %v2265 = vunpack.c.l.b16 %v2073
    %v2266 = vunpack.c.h.b16 %v2073
    %v2267 = vunpack.c.l.b16 %v2074
    %v2268 = vunpack.c.h.b16 %v2074
    %v2269 = vunpack.c.l.b16 %v2075
    %v2270 = vunpack.c.h.b16 %v2075
    %v2271 = vunpack.c.l.b16 %v2076
    %v2272 = vunpack.c.h.b16 %v2076
    %v2273 = vunpack.c.l.b16 %v2077
    %v2274 = vunpack.c.h.b16 %v2077
    %v2275 = vunpack.c.l.b16 %v2078
    %v2276 = vunpack.c.h.b16 %v2078
    %v2277 = vunpack.c.l.b16 %v2079
    %v2278 = vunpack.c.h.b16 %v2079
    %v2279 = vunpack.c.l.b16 %v2080
    %v2280 = vunpack.c.h.b16 %v2080
    %v2281 = vunpack.c.l.b16 %v2081
    %v2282 = vunpack.c.h.b16 %v2081
    %v2283 = vunpack.c.l.b16 %v2082
    %v2284 = vunpack.c.h.b16 %v2082
    %v2285 = vunpack.c.l.b16 %v2083
    %v2286 = vunpack.c.h.b16 %v2083
    %v2287 = vunpack.c.l.b16 %v2084
    %v2288 = vunpack.c.h.b16 %v2084
    %v2289 = vpack.c.b16 %v2163, %v2161
    %v2290 = vpack.c.b16 %v2164, %v2162
    %v2291 = vpack.c.b16 %v2167, %v2165
    %v2292 = vpack.c.b16 %v2168, %v2166
    %v2293 = vpack.c.b16 %v2171, %v2169
    %v2294 = vpack.c.b16 %v2172, %v2170
    %v2295 = vpack.c.b16 %v2175, %v2173
    %v2296 = vpack.c.b16 %v2176, %v2174
    %v2297 = vpack.c.b16 %v2179, %v2177
    %v2298 = vpack.c.b16 %v2180, %v2178
    %v2299 = vpack.c.b16 %v2183, %v2181
    %v2300 = vpack.c.b16 %v2184, %v2182
    %v2301 = vpack.c.b16 %v2187, %v2185
    %v2302 = vpack.c.b16 %v2188, %v2186
    %v2303 = vpack.c.b16 %v2191, %v2189
    %v2304 = vpack.c.b16 %v2192, %v2190
    %v2305 = vpack.c.b16 %v2195, %v2193
    %v2306 = vpack.c.b16 %v2196, %v2194
    %v2307 = vpack.c.b16 %v2199, %v2197
    %v2308 = vpack.c.b16 %v2200, %v2198
    %v2309 = vpack.c.b16 %v2203, %v2201
    %v2310 = vpack.c.b16 %v2204, %v2202
    %v2311 = vpack.c.b16 %v2207, %v2205
    %v2312 = vpack.c.b16 %v2208, %v2206
    %v2313 = vpack.c.b16 %v2211, %v2209
    %v2314 = vpack.c.b16 %v2212, %v2210
    %v2315 = vpack.c.b16 %v2215, %v2213
    %v2316 = vpack.c.b16 %v2216, %v2214
    %v2317 = vpack.c.b16 %v2219, %v2217
    %v2318 = vpack.c.b16 %v2220, %v2218
    %v2319 = vpack.c.b16 %v2223, %v2221
    %v2320 = vpack.c.b16 %v2224, %v2222
    %v2321 = vpack.c.b16 %v2227, %v2225
    %v2322 = vpack.c.b16 %v2228, %v2226
    %v2323 = vpack.c.b16 %v2231, %v2229
    %v2324 = vpack.c.b16 %v2232, %v2230
    %v2325 = vpack.c.b16 %v2235, %v2233
    %v2326 = vpack.c.b16 %v2236, %v2234
    %v2327 = vpack.c.b16 %v2239, %v2237
    %v2328 = vpack.c.b16 %v2240, %v2238
    %v2329 = vpack.c.b16 %v2243, %v2241
    %v2330 = vpack.c.b16 %v2244, %v2242
    %v2331 = vpack.c.b16 %v2247, %v2245
    %v2332 = vpack.c.b16 %v2248, %v2246
    %v2333 = vpack.c.b16 %v2251, %v2249
    %v2334 = vpack.c.b16 %v2252, %v2250
    %v2335 = vpack.c.b16 %v2255, %v2253
    %v2336 = vpack.c.b16 %v2256, %v2254
    %v2337 = vpack.c.b16 %v2259, %v2257
    %v2338 = vpack.c.b16 %v2260, %v2258
    %v2339 = vpack.c.b16 %v2263, %v2261
    %v2340 = vpack.c.b16 %v2264, %v2262
    %v2341 = vpack.c.b16 %v2267, %v2265
    %v2342 = vpack.c.b16 %v2268, %v2266
    %v2343 = vpack.c.b16 %v2271, %v2269
    %v2344 = vpack.c.b16 %v2272, %v2270
    %v2345 = vpack.c.b16 %v2275, %v2273
    %v2346 = vpack.c.b16 %v2276, %v2274
    %v2347 = vpack.c.b16 %v2279, %v2277
    %v2348 = vpack.c.b16 %v2280, %v2278
    %v2349 = vpack.c.b16 %v2283, %v2281
    %v2350 = vpack.c.b16 %v2284, %v2282
    %v2351 = vpack.c.b16 %v2287, %v2285
    %v2352 = vpack.c.b16 %v2288, %v2286
    %2417 = vmatprep.subr.bf16.mxu0 %v2290
    %2418 = vmatpush1.bf16.msra.mxu0 %v2289
    %2419 = vmatprep.subr.bf16.mxu0 %v2292
    %2420 = vmatpush1.bf16.msra.mxu0 %v2291
    %2421 = vmatprep.subr.bf16.mxu0 %v2294
    %2422 = vmatpush1.bf16.msra.mxu0 %v2293
    %2423 = vmatprep.subr.bf16.mxu0 %v2296
    %2424 = vmatpush1.bf16.msra.mxu0 %v2295
    %2425 = vmatprep.subr.bf16.mxu0 %v2298
    %2426 = vmatpush1.bf16.msra.mxu0 %v2297
    %2427 = vmatprep.subr.bf16.mxu0 %v2300
    %2428 = vmatpush1.bf16.msra.mxu0 %v2299
    %2429 = vmatprep.subr.bf16.mxu0 %v2302
    %2430 = vmatpush1.bf16.msra.mxu0 %v2301
    %2431 = vmatprep.subr.bf16.mxu0 %v2304
    %2432 = vmatpush1.bf16.msra.mxu0 %v2303
    %2433 = vmatprep.subr.bf16.mxu0 %v2306
    %2434 = vmatpush1.bf16.msra.mxu0 %v2305
    %2435 = vmatprep.subr.bf16.mxu0 %v2308
    %2436 = vmatpush1.bf16.msra.mxu0 %v2307
    %2437 = vmatprep.subr.bf16.mxu0 %v2310
    %2438 = vmatpush1.bf16.msra.mxu0 %v2309
    %2439 = vmatprep.subr.bf16.mxu0 %v2312
    %2440 = vmatpush1.bf16.msra.mxu0 %v2311
    %2441 = vmatprep.subr.bf16.mxu0 %v2314
    %2442 = vmatpush1.bf16.msra.mxu0 %v2313
    %2443 = vmatprep.subr.bf16.mxu0 %v2316
    %2444 = vmatpush1.bf16.msra.mxu0 %v2315
    %2445 = vmatprep.subr.bf16.mxu0 %v2318
    %2446 = vmatpush1.bf16.msra.mxu0 %v2317
    %2447 = vmatprep.subr.bf16.mxu0 %v2320
    %2448 = vmatpush1.bf16.msra.mxu0 %v2319
    %2449 = vmatprep.mubr.bf16.mxu0 %v2018
    %2450 = vmatmul.mubr.bf16.gmra.mrb[0].mxu0 %v2017
    %v2451 = vpop.f32.mrb[0].mxu0
    %v2452 = vadd.f32 %v2090, %v2451
    %v2453 = vpop.f32.mrb[0].mxu0
    %v2454 = vadd.f32 %v2094, %v2453
    %v2455 = vpop.f32.mrb[0].mxu0
    %v2456 = vadd.f32 %v2090, %v2455
    %v2457 = vpop.f32.mrb[0].mxu0
    %v2458 = vadd.f32 %v2094, %v2457
    %2459 = vdwg.mxu0
    %2460 = vmatprep.subr.bf16.mxu0 %v2322
    %2461 = vmatpush1.bf16.msra.mxu0 %v2321
    %2462 = vmatprep.subr.bf16.mxu0 %v2324
    %2463 = vmatpush1.bf16.msra.mxu0 %v2323
    %2464 = vmatprep.subr.bf16.mxu0 %v2326
    %2465 = vmatpush1.bf16.msra.mxu0 %v2325
    %2466 = vmatprep.subr.bf16.mxu0 %v2328
    %2467 = vmatpush1.bf16.msra.mxu0 %v2327
    %2468 = vmatprep.subr.bf16.mxu0 %v2330
    %2469 = vmatpush1.bf16.msra.mxu0 %v2329
    %2470 = vmatprep.subr.bf16.mxu0 %v2332
    %2471 = vmatpush1.bf16.msra.mxu0 %v2331
    %2472 = vmatprep.subr.bf16.mxu0 %v2334
    %2473 = vmatpush1.bf16.msra.mxu0 %v2333
    %2474 = vmatprep.subr.bf16.mxu0 %v2336
    %2475 = vmatpush1.bf16.msra.mxu0 %v2335
    %2476 = vmatprep.subr.bf16.mxu0 %v2338
    %2477 = vmatpush1.bf16.msra.mxu0 %v2337
    %2478 = vmatprep.subr.bf16.mxu0 %v2340
    %2479 = vmatpush1.bf16.msra.mxu0 %v2339
    %2480 = vmatprep.subr.bf16.mxu0 %v2342
    %2481 = vmatpush1.bf16.msra.mxu0 %v2341
    %2482 = vmatprep.subr.bf16.mxu0 %v2344
    %2483 = vmatpush1.bf16.msra.mxu0 %v2343
    %2484 = vmatprep.subr.bf16.mxu0 %v2346
    %2485 = vmatpush1.bf16.msra.mxu0 %v2345
    %2486 = vmatprep.subr.bf16.mxu0 %v2348
    %2487 = vmatpush1.bf16.msra.mxu0 %v2347
    %2488 = vmatprep.subr.bf16.mxu0 %v2350
    %2489 = vmatpush1.bf16.msra.mxu0 %v2349
    %2490 = vmatprep.subr.bf16.mxu0 %v2352
    %2491 = vmatpush1.bf16.msra.mxu0 %v2351
    %2492 = vmatprep.mubr.bf16.mxu0 %v2020
    %2493 = vmatmul.mubr.bf16.gmra.mrb[0].mxu0 %v2019
    %v2494 = vpop.f32.mrb[0].mxu0
    %v2495 = vadd.f32 %v2452, %v2494
    %v2496 = vpop.f32.mrb[0].mxu0
    %v2497 = vadd.f32 %v2454, %v2496
    %v2498 = vpop.f32.mrb[0].mxu0
    %v2499 = vadd.f32 %v2456, %v2498
    %v2500 = vpop.f32.mrb[0].mxu0
    %v2501 = vadd.f32 %v2458, %v2500
    %2502 = vdwg.mxu0
    %v2503 = vmax.f32 %v2495, 0.0
    %v2504 = vmax.f32 %v2497, 0.0
    %v2505 = vmax.f32 %v2499, 0.0
    %v2506 = vmax.f32 %v2501, 0.0
    %v2507 = vpack.c.bf16 %v2505, %v2503
    %v2508 = vpack.c.bf16 %v2506, %v2504
    %v2509 = vld [vmem:[#allocation8] sm:$0xf]
    %v2510 = vld [vmem:[#allocation8 + $0x4] sm:$0xf]
    %v2511 = vld [vmem:[#allocation8 + $0x8] sm:$0xf]
    %v2512 = vld [vmem:[#allocation8 + $0xc] sm:$0xf]
    %v2513 = vld [vmem:[#allocation8 + $0x10] sm:$0xf]
    %v2514 = vld [vmem:[#allocation8 + $0x14] sm:$0xf]
    %v2515 = vld [vmem:[#allocation8 + $0x18] sm:$0xf]
    %v2516 = vld [vmem:[#allocation8 + $0x1c] sm:$0xf]
    %v2517 = vld [vmem:[#allocation8 + $0x20] sm:$0xf]
    %v2518 = vld [vmem:[#allocation8 + $0x24] sm:$0xf]
    %v2519 = vld [vmem:[#allocation8 + $0x28] sm:$0xf]
    %v2520 = vld [vmem:[#allocation8 + $0x2c] sm:$0xf]
    %v2521 = vld [vmem:[#allocation8 + $0x30] sm:$0xf]
    %v2522 = vld [vmem:[#allocation8 + $0x34] sm:$0xf]
    %v2523 = vld [vmem:[#allocation8 + $0x38] sm:$0xf]
    %v2524 = vld [vmem:[#allocation8 + $0x3c] sm:$0xf]
    %v2525 = vld [vmem:[#allocation8 + $0x40] sm:$0xf]
    %v2526 = vld [vmem:[#allocation8 + $0x44] sm:$0xf]
    %v2527 = vld [vmem:[#allocation8 + $0x48] sm:$0xf]
    %v2528 = vld [vmem:[#allocation8 + $0x4c] sm:$0xf]
    %v2529 = vld [vmem:[#allocation8 + $0x50] sm:$0xf]
    %v2530 = vld [vmem:[#allocation8 + $0x54] sm:$0xf]
    %v2531 = vld [vmem:[#allocation8 + $0x58] sm:$0xf]
    %v2532 = vld [vmem:[#allocation8 + $0x5c] sm:$0xf]
    %v2533 = vld [vmem:[#allocation8 + $0x60] sm:$0xf]
    %v2534 = vld [vmem:[#allocation8 + $0x64] sm:$0xf]
    %v2535 = vld [vmem:[#allocation8 + $0x68] sm:$0xf]
    %v2536 = vld [vmem:[#allocation8 + $0x6c] sm:$0xf]
    %v2537 = vld [vmem:[#allocation8 + $0x70] sm:$0xf]
    %v2538 = vld [vmem:[#allocation8 + $0x74] sm:$0xf]
    %v2539 = vld [vmem:[#allocation8 + $0x78] sm:$0xf]
    %v2540 = vld [vmem:[#allocation8 + $0x7c] sm:$0xf]
    %v2541 = vld [vmem:[%s6] sm:$0x1]
    %v2543 = vlaneseq
    %v2544 = vshrl.u32 %v2543, 7
    %v2545 = vsub.s32 0, %v2544
    %v2546 = vrot.slane %v2541, %v2545
    %v2580 = vunpack.c.l.b16 %v2509
    %v2581 = vunpack.c.l.b16 %v2510
    %v2582 = vunpack.c.l.b16 %v2511
    %v2583 = vunpack.c.l.b16 %v2512
    %v2584 = vunpack.c.l.b16 %v2513
    %v2585 = vunpack.c.l.b16 %v2514
    %v2586 = vunpack.c.l.b16 %v2515
    %v2587 = vunpack.c.l.b16 %v2516
    %v2588 = vunpack.c.l.b16 %v2517
    %v2589 = vunpack.c.l.b16 %v2518
    %v2590 = vunpack.c.l.b16 %v2519
    %v2591 = vunpack.c.l.b16 %v2520
    %v2592 = vunpack.c.l.b16 %v2521
    %v2593 = vunpack.c.l.b16 %v2522
    %v2594 = vunpack.c.l.b16 %v2523
    %v2595 = vunpack.c.l.b16 %v2524
    %v2596 = vunpack.c.l.b16 %v2525
    %v2597 = vunpack.c.l.b16 %v2526
    %v2598 = vunpack.c.l.b16 %v2527
    %v2599 = vunpack.c.l.b16 %v2528
    %v2600 = vunpack.c.l.b16 %v2529
    %v2601 = vunpack.c.l.b16 %v2530
    %v2602 = vunpack.c.l.b16 %v2531
    %v2603 = vunpack.c.l.b16 %v2532
    %v2604 = vunpack.c.l.b16 %v2533
    %v2605 = vunpack.c.l.b16 %v2534
    %v2606 = vunpack.c.l.b16 %v2535
    %v2607 = vunpack.c.l.b16 %v2536
    %v2608 = vunpack.c.l.b16 %v2537
    %v2609 = vunpack.c.l.b16 %v2538
    %v2610 = vunpack.c.l.b16 %v2539
    %v2611 = vunpack.c.l.b16 %v2540
    %v2612 = vpack.c.b16 %v2581, %v2580
    %v2613 = vpack.c.b16 %v2583, %v2582
    %v2614 = vpack.c.b16 %v2585, %v2584
    %v2615 = vpack.c.b16 %v2587, %v2586
    %v2616 = vpack.c.b16 %v2589, %v2588
    %v2617 = vpack.c.b16 %v2591, %v2590
    %v2618 = vpack.c.b16 %v2593, %v2592
    %v2619 = vpack.c.b16 %v2595, %v2594
    %v2620 = vpack.c.b16 %v2597, %v2596
    %v2621 = vpack.c.b16 %v2599, %v2598
    %v2622 = vpack.c.b16 %v2601, %v2600
    %v2623 = vpack.c.b16 %v2603, %v2602
    %v2624 = vpack.c.b16 %v2605, %v2604
    %v2625 = vpack.c.b16 %v2607, %v2606
    %v2626 = vpack.c.b16 %v2609, %v2608
    %v2627 = vpack.c.b16 %v2611, %v2610
    %2644 = vmatprep.subr.bf16.mxu0 0
    %2645 = vmatpush1.bf16.msra.mxu0 %v2612
    %2646 = vmatprep.subr.bf16.mxu0 0
    %2647 = vmatpush1.bf16.msra.mxu0 %v2613
    %2648 = vmatprep.subr.bf16.mxu0 0
    %2649 = vmatpush1.bf16.msra.mxu0 %v2614
    %2650 = vmatprep.subr.bf16.mxu0 0
    %2651 = vmatpush1.bf16.msra.mxu0 %v2615
    %2652 = vmatprep.subr.bf16.mxu0 0
    %2653 = vmatpush1.bf16.msra.mxu0 %v2616
    %2654 = vmatprep.subr.bf16.mxu0 0
    %2655 = vmatpush1.bf16.msra.mxu0 %v2617
    %2656 = vmatprep.subr.bf16.mxu0 0
    %2657 = vmatpush1.bf16.msra.mxu0 %v2618
    %2658 = vmatprep.subr.bf16.mxu0 0
    %2659 = vmatpush1.bf16.msra.mxu0 %v2619
    %2660 = vmatprep.subr.bf16.mxu0 0
    %2661 = vmatpush1.bf16.msra.mxu0 %v2620
    %2662 = vmatprep.subr.bf16.mxu0 0
    %2663 = vmatpush1.bf16.msra.mxu0 %v2621
    %2664 = vmatprep.subr.bf16.mxu0 0
    %2665 = vmatpush1.bf16.msra.mxu0 %v2622
    %2666 = vmatprep.subr.bf16.mxu0 0
    %2667 = vmatpush1.bf16.msra.mxu0 %v2623
    %2668 = vmatprep.subr.bf16.mxu0 0
    %2669 = vmatpush1.bf16.msra.mxu0 %v2624
    %2670 = vmatprep.subr.bf16.mxu0 0
    %2671 = vmatpush1.bf16.msra.mxu0 %v2625
    %2672 = vmatprep.subr.bf16.mxu0 0
    %2673 = vmatpush1.bf16.msra.mxu0 %v2626
    %2674 = vmatprep.subr.bf16.mxu0 0
    %2675 = vmatpush1.bf16.msra.mxu0 %v2627
    %2676 = vmatprep.mubr.bf16.mxu0 %v2508
    %2677 = vmatmul.mubr.bf16.gmra.mrb[0].mxu0 %v2507
    %v2678 = vpop.f32.mrb[0].mxu0
    %v2679 = vadd.f32 %v2546, %v2678
    %v2680 = vpop.f32.mrb[0].mxu0
    %v2681 = vpop.f32.mrb[0].mxu0
    %v2682 = vadd.f32 %v2546, %v2681
    %v2683 = vpop.f32.mrb[0].mxu0
    %2684 = vdwg.mxu0
    %2685 = vst [vmem:[#allocation10] sm:$0xff] %v2679
    %2686 = vst [vmem:[#allocation10 + $0x8] sm:$0xff] %v2682
    // Predicated region
    $region46: #{tpu_custom_call.1} parent=1 // pred_check
      _
    $region47: #{tpu_custom_call.1} parent=1 // pred_check_branch
      %2688 = sbr.rel (0) target = $region49
    $region48: #{tpu_custom_call.1} parent=1 // pred_region
      %s2690 = ssub.s32 256, 256
      %2691 = vsyncadd [#allocation4], %s2690
      %s2692 = sshll.u32 [#allocation10], 4
      %s2693 = int_to_ptr.vmem [resolvable:$true] %s2692
      %2698 = dma.vmem_to_hbm [thread:$0]  %s2693, 256, %s7, [#allocation4], 128, 128, 8
    $region49: #{tpu_custom_call.1} parent=1 // pred_fallthru
      _
    // Predicated region
    $region50: #{tpu_custom_call.1} parent=1 // pred_check
      _
    $region51: #{tpu_custom_call.1} parent=1 // pred_check_branch
      %2700 = sbr.rel (0) target = $region53
    $region52: #{tpu_custom_call.1} parent=1 // pred_region
      %2701 = dma.done [#allocation4], 256
    $region53: #{tpu_custom_call.1} parent=1 // pred_fallthru
      _
    %2702 = vsyncpa [#allocation3], 1
    %2703 = vsyncpa [#allocation6], 1
    %2704 = vsyncpa [#allocation9], 1
    %2705 = vsyncpa [#allocation4], 1

// kernel: tpu_custom_call.1
$region0: #{tpu_custom_call.1}
  #allocation0 [shape = 'u32[]', space=smem, size = 0x4, offset = 0x4, fixed_abs, tag = 'smem constant byte address 0x4 - core index']
  #allocation1 [shape = 'u32[144,128]{1,0:T(1,128)}', space=vmem, size = 0x12000, scoped, tag = 'internal scratch']
  %s0 = inlined_call_operand.hbm [shape: f32[16,1024], index: 0, kind: input, shape index: {}]
  %s1 = inlined_call_operand.hbm [shape: bf16[1024,512], index: 1, kind: input, shape index: {}]
  %s2 = inlined_call_operand.vmem [shape: f32[1,512], index: 2, kind: input, shape index: {}]
  %s3 = inlined_call_operand.hbm [shape: bf16[512,256], index: 3, kind: input, shape index: {}]
  %s4 = inlined_call_operand.vmem [shape: f32[1,256], index: 4, kind: input, shape index: {}]
  %s5 = inlined_call_operand.hbm [shape: bf16[256,128], index: 5, kind: input, shape index: {}]
  %s6 = inlined_call_operand.vmem [shape: f32[1,128], index: 6, kind: input, shape index: {}]
  %s7 = inlined_call_operand.hbm [shape: f32[16,128], index: 7, kind: output, shape index: {}]
  %s8 = sld [smem:[#allocation0]]
  $region54: #{tpu_custom_call.1} parent=0
    _
  %s10 = ssub.s32 1, %s8
  %s11 = scalar_select 0, %s10, %s8
  $region1: #{tpu_custom_call.1} parent=0
    #allocation2 [shape = 'u8[65536]{0}', space=vmem, size = 0x10000, scoped, tag = 'input window, operand 0, single buffered']
    #allocation3 [shape = 's32[1]{0}', space=sflag, size = 0x4, scoped, tag = 'scoped memory for tpu_custom_call.1']
    #allocation4 [shape = 's32[1]{0}', space=sflag, size = 0x4, scoped, tag = 'scoped memory for tpu_custom_call.1']
    #allocation5 [shape = 'u8[1048576]{0}', space=vmem, size = 0x100000, scoped, tag = 'input window, operand 1, single buffered']
    #allocation6 [shape = 's32[1]{0}', space=sflag, size = 0x4, scoped, tag = 'scoped memory for tpu_custom_call.1']
    #allocation7 [shape = 'u8[262144]{0}', space=vmem, size = 0x40000, scoped, tag = 'input window, operand 3, single buffered']
    #allocation8 [shape = 'u8[65536]{0}', space=vmem, size = 0x10000, scoped, tag = 'input window, operand 5, single buffered']
    #allocation9 [shape = 's32[1]{0}', space=sflag, size = 0x4, scoped, tag = 'scoped memory for tpu_custom_call.1']
    #allocation10 [shape = 'u8[8192]{0}', space=vmem, size = 0x2000, scoped, tag = 'output window, operand 0, single buffered']
    %12 = vsyncpa [#allocation3], 0
    %13 = vsyncpa [#allocation6], 0
    %14 = vsyncpa [#allocation9], 0
    %15 = vsyncpa [#allocation4], 0
    // Predicated region
    $region2: #{tpu_custom_call.1} parent=1 // pred_check
      _
    $region3: #{tpu_custom_call.1} parent=1 // pred_check_branch
      %17 = sbr.rel (0) target = $region5
    $region4: #{tpu_custom_call.1} parent=1 // pred_region
      %s19 = ssub.s32 2048, 2048
      %20 = vsyncadd [#allocation3], %s19
      %s21 = sshll.u32 [#allocation2], 4
      %s22 = int_to_ptr.vmem [resolvable:$true] %s21
      %27 = dma.hbm_to_vmem [thread:$0]  %s0, 2048, %s22, [#allocation3], 1024, 1024, 64
    $region5: #{tpu_custom_call.1} parent=1 // pred_fallthru
      _
    // Predicated region
    $region6: #{tpu_custom_call.1} parent=1 // pred_check
      _
    $region7: #{tpu_custom_call.1} parent=1 // pred_check_branch
      %29 = sbr.rel (0) target = $region9
    $region8: #{tpu_custom_call.1} parent=1 // pred_region
      %s31 = ssub.s32 32768, 32768
      %32 = vsyncadd [#allocation6], %s31
      %s33 = sshll.u32 [#allocation5], 4
      %s34 = int_to_ptr.vmem [resolvable:$true] %s33
      %39 = dma.hbm_to_vmem [thread:$0]  %s1, 32768, %s34, [#allocation6], 256, 256, 16
    $region9: #{tpu_custom_call.1} parent=1 // pred_fallthru
      _
    // Predicated region
    $region10: #{tpu_custom_call.1} parent=1 // pred_check
      _
    $region11: #{tpu_custom_call.1} parent=1 // pred_check_branch
      %41 = sbr.rel (0) target = $region13
    $region12: #{tpu_custom_call.1} parent=1 // pred_region
      _
    $region13: #{tpu_custom_call.1} parent=1 // pred_fallthru
      _
    // Predicated region
    $region14: #{tpu_custom_call.1} parent=1 // pred_check
      _
    $region15: #{tpu_custom_call.1} parent=1 // pred_check_branch
      %43 = sbr.rel (0) target = $region17
    $region16: #{tpu_custom_call.1} parent=1 // pred_region
      %s45 = ssub.s32 8192, 8192
      %46 = vsyncadd [#allocation6], %s45
      %s47 = sshll.u32 [#allocation7], 4
      %s48 = int_to_ptr.vmem [resolvable:$true] %s47
      %53 = dma.hbm_to_vmem [thread:$0]  %s3, 8192, %s48, [#allocation6], 128, 128, 8
    $region17: #{tpu_custom_call.1} parent=1 // pred_fallthru
      _
    // Predicated region
    $region18: #{tpu_custom_call.1} parent=1 // pred_check
      _
    $region19: #{tpu_custom_call.1} parent=1 // pred_check_branch
      %55 = sbr.rel (0) target = $region21
    $region20: #{tpu_custom_call.1} parent=1 // pred_region
      _
    $region21: #{tpu_custom_call.1} parent=1 // pred_fallthru
      _
    // Predicated region
    $region22: #{tpu_custom_call.1} parent=1 // pred_check
      _
    $region23: #{tpu_custom_call.1} parent=1 // pred_check_branch
      %57 = sbr.rel (0) target = $region25
    $region24: #{tpu_custom_call.1} parent=1 // pred_region
      %s59 = ssub.s32 2048, 2048
      %60 = vsyncadd [#allocation9], %s59
      %s61 = sshll.u32 [#allocation8], 4
      %s62 = int_to_ptr.vmem [resolvable:$true] %s61
      %67 = dma.hbm_to_vmem [thread:$0]  %s5, 2048, %s62, [#allocation9], 64, 64, 4
    $region25: #{tpu_custom_call.1} parent=1 // pred_fallthru
      _
    // Predicated region
    $region26: #{tpu_custom_call.1} parent=1 // pred_check
      _
    $region27: #{tpu_custom_call.1} parent=1 // pred_check_branch
      %69 = sbr.rel (0) target = $region29
    $region28: #{tpu_custom_call.1} parent=1 // pred_region
      _
    $region29: #{tpu_custom_call.1} parent=1 // pred_fallthru
      _
    // Predicated region
    $region30: #{tpu_custom_call.1} parent=1 // pred_check
      _
    $region31: #{tpu_custom_call.1} parent=1 // pred_check_branch
      %71 = sbr.rel (0) target = $region33
    $region32: #{tpu_custom_call.1} parent=1 // pred_region
      %72 = dma.done [#allocation3], 2048
    $region33: #{tpu_custom_call.1} parent=1 // pred_fallthru
      _
    // Predicated region
    $region34: #{tpu_custom_call.1} parent=1 // pred_check
      _
    $region35: #{tpu_custom_call.1} parent=1 // pred_check_branch
      %74 = sbr.rel (0) target = $region37
    $region36: #{tpu_custom_call.1} parent=1 // pred_region
      %75 = dma.done [#allocation6], 32768
    $region37: #{tpu_custom_call.1} parent=1 // pred_fallthru
      _
    // Predicated region
    $region38: #{tpu_custom_call.1} parent=1 // pred_check
      _
    $region39: #{tpu_custom_call.1} parent=1 // pred_check_branch
      %77 = sbr.rel (0) target = $region41
    $region40: #{tpu_custom_call.1} parent=1 // pred_region
      %78 = dma.done [#allocation6], 8192
    $region41: #{tpu_custom_call.1} parent=1 // pred_fallthru
      _
    // Predicated region
    $region42: #{tpu_custom_call.1} parent=1 // pred_check
      _
    $region43: #{tpu_custom_call.1} parent=1 // pred_check_branch
      %80 = sbr.rel (0) target = $region45
    $region44: #{tpu_custom_call.1} parent=1 // pred_region
      %81 = dma.done [#allocation9], 2048
    $region45: #{tpu_custom_call.1} parent=1 // pred_fallthru
      _
    %v83 = vld [vmem:[#allocation2] sm:$0xff]
    %v84 = vld [vmem:[#allocation2 + $0x8] sm:$0xff]
    %v85 = vld [vmem:[#allocation2 + $0x10] sm:$0xff]
    %v86 = vld [vmem:[#allocation2 + $0x18] sm:$0xff]
    %v87 = vld [vmem:[#allocation2 + $0x20] sm:$0xff]
    %v88 = vld [vmem:[#allocation2 + $0x28] sm:$0xff]
    %v89 = vld [vmem:[#allocation2 + $0x30] sm:$0xff]
    %v90 = vld [vmem:[#allocation2 + $0x38] sm:$0xff]
    %v91 = vld [vmem:[#allocation2 + $0x40] sm:$0xff]
    %v92 = vld [vmem:[#allocation2 + $0x48] sm:$0xff]
    %v93 = vld [vmem:[#allocation2 + $0x50] sm:$0xff]
    %v94 = vld [vmem:[#allocation2 + $0x58] sm:$0xff]
    %v95 = vld [vmem:[#allocation2 + $0x60] sm:$0xff]
    %v96 = vld [vmem:[#allocation2 + $0x68] sm:$0xff]
    %v97 = vld [vmem:[#allocation2 + $0x70] sm:$0xff]
    %v98 = vld [vmem:[#allocation2 + $0x78] sm:$0xff]
    %v99 = vpack.c.bf16 %v91, %v83
    %v100 = vpack.c.bf16 %v92, %v84
    %v101 = vpack.c.bf16 %v93, %v85
    %v102 = vpack.c.bf16 %v94, %v86
    %v103 = vpack.c.bf16 %v95, %v87
    %v104 = vpack.c.bf16 %v96, %v88
    %v105 = vpack.c.bf16 %v97, %v89
    %v106 = vpack.c.bf16 %v98, %v90
    %v107 = vld [vmem:[#allocation5] sm:$0xff]
    %v108 = vld [vmem:[#allocation5 + $0x8] sm:$0xff]
    %v109 = vld [vmem:[#allocation5 + $0x10] sm:$0xff]
    %v110 = vld [vmem:[#allocation5 + $0x18] sm:$0xff]
    %v111 = vld [vmem:[#allocation5 + $0x20] sm:$0xff]
    %v112 = vld [vmem:[#allocation5 + $0x28] sm:$0xff]
    %v113 = vld [vmem:[#allocation5 + $0x30] sm:$0xff]
    %v114 = vld [vmem:[#allocation5 + $0x38] sm:$0xff]
    %v115 = vld [vmem:[#allocation5 + $0x40] sm:$0xff]
    %v116 = vld [vmem:[#allocation5 + $0x48] sm:$0xff]
    %v117 = vld [vmem:[#allocation5 + $0x50] sm:$0xff]
    %v118 = vld [vmem:[#allocation5 + $0x58] sm:$0xff]
    %v119 = vld [vmem:[#allocation5 + $0x60] sm:$0xff]
    %v120 = vld [vmem:[#allocation5 + $0x68] sm:$0xff]
    %v121 = vld [vmem:[#allocation5 + $0x70] sm:$0xff]
    %v122 = vld [vmem:[#allocation5 + $0x78] sm:$0xff]
    %v123 = vld [vmem:[#allocation5 + $0x80] sm:$0xff]
    %v124 = vld [vmem:[#allocation5 + $0x88] sm:$0xff]
    %v125 = vld [vmem:[#allocation5 + $0x90] sm:$0xff]
    %v126 = vld [vmem:[#allocation5 + $0x98] sm:$0xff]
    %v127 = vld [vmem:[#allocation5 + $0xa0] sm:$0xff]
    %v128 = vld [vmem:[#allocation5 + $0xa8] sm:$0xff]
    %v129 = vld [vmem:[#allocation5 + $0xb0] sm:$0xff]
    %v130 = vld [vmem:[#allocation5 + $0xb8] sm:$0xff]
    %v131 = vld [vmem:[#allocation5 + $0xc0] sm:$0xff]
    %v132 = vld [vmem:[#allocation5 + $0xc8] sm:$0xff]
    %v133 = vld [vmem:[#allocation5 + $0xd0] sm:$0xff]
    %v134 = vld [vmem:[#allocation5 + $0xd8] sm:$0xff]
    %v135 = vld [vmem:[#allocation5 + $0xe0] sm:$0xff]
    %v136 = vld [vmem:[#allocation5 + $0xe8] sm:$0xff]
    %v137 = vld [vmem:[#allocation5 + $0xf0] sm:$0xff]
    %v138 = vld [vmem:[#allocation5 + $0xf8] sm:$0xff]
    %v139 = vld [vmem:[#allocation5 + $0x100] sm:$0xff]
    %v140 = vld [vmem:[#allocation5 + $0x108] sm:$0xff]
    %v141 = vld [vmem:[#allocation5 + $0x110] sm:$0xff]
    %v142 = vld [vmem:[#allocation5 + $0x118] sm:$0xff]
    %v143 = vld [vmem:[#allocation5 + $0x120] sm:$0xff]
    %v144 = vld [vmem:[#allocation5 + $0x128] sm:$0xff]
    %v145 = vld [vmem:[#allocation5 + $0x130] sm:$0xff]
    %v146 = vld [vmem:[#allocation5 + $0x138] sm:$0xff]
    %v147 = vld [vmem:[#allocation5 + $0x140] sm:$0xff]
    %v148 = vld [vmem:[#allocation5 + $0x148] sm:$0xff]
    %v149 = vld [vmem:[#allocation5 + $0x150] sm:$0xff]
    %v150 = vld [vmem:[#allocation5 + $0x158] sm:$0xff]
    %v151 = vld [vmem:[#allocation5 + $0x160] sm:$0xff]
    %v152 = vld [vmem:[#allocation5 + $0x168] sm:$0xff]
    %v153 = vld [vmem:[#allocation5 + $0x170] sm:$0xff]
    %v154 = vld [vmem:[#allocation5 + $0x178] sm:$0xff]
    %v155 = vld [vmem:[#allocation5 + $0x180] sm:$0xff]
    %v156 = vld [vmem:[#allocation5 + $0x188] sm:$0xff]
    %v157 = vld [vmem:[#allocation5 + $0x190] sm:$0xff]
    %v158 = vld [vmem:[#allocation5 + $0x198] sm:$0xff]
    %v159 = vld [vmem:[#allocation5 + $0x1a0] sm:$0xff]
    %v160 = vld [vmem:[#allocation5 + $0x1a8] sm:$0xff]
    %v161 = vld [vmem:[#allocation5 + $0x1b0] sm:$0xff]
    %v162 = vld [vmem:[#allocation5 + $0x1b8] sm:$0xff]
    %v163 = vld [vmem:[#allocation5 + $0x1c0] sm:$0xff]
    %v164 = vld [vmem:[#allocation5 + $0x1c8] sm:$0xff]
    %v165 = vld [vmem:[#allocation5 + $0x1d0] sm:$0xff]
    %v166 = vld [vmem:[#allocation5 + $0x1d8] sm:$0xff]
    %v167 = vld [vmem:[#allocation5 + $0x1e0] sm:$0xff]
    %v168 = vld [vmem:[#allocation5 + $0x1e8] sm:$0xff]
    %v169 = vld [vmem:[#allocation5 + $0x1f0] sm:$0xff]
    %v170 = vld [vmem:[#allocation5 + $0x1f8] sm:$0xff]
    %v171 = vld [vmem:[#allocation5 + $0x200] sm:$0xff]
    %v172 = vld [vmem:[#allocation5 + $0x208] sm:$0xff]
    %v173 = vld [vmem:[#allocation5 + $0x210] sm:$0xff]
    %v174 = vld [vmem:[#allocation5 + $0x218] sm:$0xff]
    %v175 = vld [vmem:[#allocation5 + $0x220] sm:$0xff]
    %v176 = vld [vmem:[#allocation5 + $0x228] sm:$0xff]
    %v177 = vld [vmem:[#allocation5 + $0x230] sm:$0xff]
    %v178 = vld [vmem:[#allocation5 + $0x238] sm:$0xff]
    %v179 = vld [vmem:[#allocation5 + $0x240] sm:$0xff]
    %v180 = vld [vmem:[#allocation5 + $0x248] sm:$0xff]
    %v181 = vld [vmem:[#allocation5 + $0x250] sm:$0xff]
    %v182 = vld [vmem:[#allocation5 + $0x258] sm:$0xff]
    %v183 = vld [vmem:[#allocation5 + $0x260] sm:$0xff]
    %v184 = vld [vmem:[#allocation5 + $0x268] sm:$0xff]
    %v185 = vld [vmem:[#allocation5 + $0x270] sm:$0xff]
    %v186 = vld [vmem:[#allocation5 + $0x278] sm:$0xff]
    %v187 = vld [vmem:[#allocation5 + $0x280] sm:$0xff]
    %v188 = vld [vmem:[#allocation5 + $0x288] sm:$0xff]
    %v189 = vld [vmem:[#allocation5 + $0x290] sm:$0xff]
    %v190 = vld [vmem:[#allocation5 + $0x298] sm:$0xff]
    %v191 = vld [vmem:[#allocation5 + $0x2a0] sm:$0xff]
    %v192 = vld [vmem:[#allocation5 + $0x2a8] sm:$0xff]
    %v193 = vld [vmem:[#allocation5 + $0x2b0] sm:$0xff]
    %v194 = vld [vmem:[#allocation5 + $0x2b8] sm:$0xff]
    %v195 = vld [vmem:[#allocation5 + $0x2c0] sm:$0xff]
    %v196 = vld [vmem:[#allocation5 + $0x2c8] sm:$0xff]
    %v197 = vld [vmem:[#allocation5 + $0x2d0] sm:$0xff]
    %v198 = vld [vmem:[#allocation5 + $0x2d8] sm:$0xff]
    %v199 = vld [vmem:[#allocation5 + $0x2e0] sm:$0xff]
    %v200 = vld [vmem:[#allocation5 + $0x2e8] sm:$0xff]
    %v201 = vld [vmem:[#allocation5 + $0x2f0] sm:$0xff]
    %v202 = vld [vmem:[#allocation5 + $0x2f8] sm:$0xff]
    %v203 = vld [vmem:[#allocation5 + $0x300] sm:$0xff]
    %v204 = vld [vmem:[#allocation5 + $0x308] sm:$0xff]
    %v205 = vld [vmem:[#allocation5 + $0x310] sm:$0xff]
    %v206 = vld [vmem:[#allocation5 + $0x318] sm:$0xff]
    %v207 = vld [vmem:[#allocation5 + $0x320] sm:$0xff]
    %v208 = vld [vmem:[#allocation5 + $0x328] sm:$0xff]
    %v209 = vld [vmem:[#allocation5 + $0x330] sm:$0xff]
    %v210 = vld [vmem:[#allocation5 + $0x338] sm:$0xff]
    %v211 = vld [vmem:[#allocation5 + $0x340] sm:$0xff]
    %v212 = vld [vmem:[#allocation5 + $0x348] sm:$0xff]
    %v213 = vld [vmem:[#allocation5 + $0x350] sm:$0xff]
    %v214 = vld [vmem:[#allocation5 + $0x358] sm:$0xff]
    %v215 = vld [vmem:[#allocation5 + $0x360] sm:$0xff]
    %v216 = vld [vmem:[#allocation5 + $0x368] sm:$0xff]
    %v217 = vld [vmem:[#allocation5 + $0x370] sm:$0xff]
    %v218 = vld [vmem:[#allocation5 + $0x378] sm:$0xff]
    %v219 = vld [vmem:[#allocation5 + $0x380] sm:$0xff]
    %v220 = vld [vmem:[#allocation5 + $0x388] sm:$0xff]
    %v221 = vld [vmem:[#allocation5 + $0x390] sm:$0xff]
    %v222 = vld [vmem:[#allocation5 + $0x398] sm:$0xff]
    %v223 = vld [vmem:[#allocation5 + $0x3a0] sm:$0xff]
    %v224 = vld [vmem:[#allocation5 + $0x3a8] sm:$0xff]
    %v225 = vld [vmem:[#allocation5 + $0x3b0] sm:$0xff]
    %v226 = vld [vmem:[#allocation5 + $0x3b8] sm:$0xff]
    %v227 = vld [vmem:[#allocation5 + $0x3c0] sm:$0xff]
    %v228 = vld [vmem:[#allocation5 + $0x3c8] sm:$0xff]
    %v229 = vld [vmem:[#allocation5 + $0x3d0] sm:$0xff]
    %v230 = vld [vmem:[#allocation5 + $0x3d8] sm:$0xff]
    %v231 = vld [vmem:[#allocation5 + $0x3e0] sm:$0xff]
    %v232 = vld [vmem:[#allocation5 + $0x3e8] sm:$0xff]
    %v233 = vld [vmem:[#allocation5 + $0x3f0] sm:$0xff]
    %v234 = vld [vmem:[#allocation5 + $0x3f8] sm:$0xff]
    %v235 = vld [vmem:[#allocation5 + $0x400] sm:$0xff]
    %v236 = vld [vmem:[#allocation5 + $0x408] sm:$0xff]
    %v237 = vld [vmem:[#allocation5 + $0x410] sm:$0xff]
    %v238 = vld [vmem:[#allocation5 + $0x418] sm:$0xff]
    %v239 = vld [vmem:[#allocation5 + $0x420] sm:$0xff]
    %v240 = vld [vmem:[#allocation5 + $0x428] sm:$0xff]
    %v241 = vld [vmem:[#allocation5 + $0x430] sm:$0xff]
    %v242 = vld [vmem:[#allocation5 + $0x438] sm:$0xff]
    %v243 = vld [vmem:[#allocation5 + $0x440] sm:$0xff]
    %v244 = vld [vmem:[#allocation5 + $0x448] sm:$0xff]
    %v245 = vld [vmem:[#allocation5 + $0x450] sm:$0xff]
    %v246 = vld [vmem:[#allocation5 + $0x458] sm:$0xff]
    %v247 = vld [vmem:[#allocation5 + $0x460] sm:$0xff]
    %v248 = vld [vmem:[#allocation5 + $0x468] sm:$0xff]
    %v249 = vld [vmem:[#allocation5 + $0x470] sm:$0xff]
    %v250 = vld [vmem:[#allocation5 + $0x478] sm:$0xff]
    %v251 = vld [vmem:[#allocation5 + $0x480] sm:$0xff]
    %v252 = vld [vmem:[#allocation5 + $0x488] sm:$0xff]
    %v253 = vld [vmem:[#allocation5 + $0x490] sm:$0xff]
    %v254 = vld [vmem:[#allocation5 + $0x498] sm:$0xff]
    %v255 = vld [vmem:[#allocation5 + $0x4a0] sm:$0xff]
    %v256 = vld [vmem:[#allocation5 + $0x4a8] sm:$0xff]
    %v257 = vld [vmem:[#allocation5 + $0x4b0] sm:$0xff]
    %v258 = vld [vmem:[#allocation5 + $0x4b8] sm:$0xff]
    %v259 = vld [vmem:[#allocation5 + $0x4c0] sm:$0xff]
    %v260 = vld [vmem:[#allocation5 + $0x4c8] sm:$0xff]
    %v261 = vld [vmem:[#allocation5 + $0x4d0] sm:$0xff]
    %v262 = vld [vmem:[#allocation5 + $0x4d8] sm:$0xff]
    %v263 = vld [vmem:[#allocation5 + $0x4e0] sm:$0xff]
    %v264 = vld [vmem:[#allocation5 + $0x4e8] sm:$0xff]
    %v265 = vld [vmem:[#allocation5 + $0x4f0] sm:$0xff]
    %v266 = vld [vmem:[#allocation5 + $0x4f8] sm:$0xff]
    %v267 = vld [vmem:[#allocation5 + $0x500] sm:$0xff]
    %v268 = vld [vmem:[#allocation5 + $0x508] sm:$0xff]
    %v269 = vld [vmem:[#allocation5 + $0x510] sm:$0xff]
    %v270 = vld [vmem:[#allocation5 + $0x518] sm:$0xff]
    %v271 = vld [vmem:[#allocation5 + $0x520] sm:$0xff]
    %v272 = vld [vmem:[#allocation5 + $0x528] sm:$0xff]
    %v273 = vld [vmem:[#allocation5 + $0x530] sm:$0xff]
    %v274 = vld [vmem:[#allocation5 + $0x538] sm:$0xff]
    %v275 = vld [vmem:[#allocation5 + $0x540] sm:$0xff]
    %v276 = vld [vmem:[#allocation5 + $0x548] sm:$0xff]
    %v277 = vld [vmem:[#allocation5 + $0x550] sm:$0xff]
    %v278 = vld [vmem:[#allocation5 + $0x558] sm:$0xff]
    %v279 = vld [vmem:[#allocation5 + $0x560] sm:$0xff]
    %v280 = vld [vmem:[#allocation5 + $0x568] sm:$0xff]
    %v281 = vld [vmem:[#allocation5 + $0x570] sm:$0xff]
    %v282 = vld [vmem:[#allocation5 + $0x578] sm:$0xff]
    %v283 = vld [vmem:[#allocation5 + $0x580] sm:$0xff]
    %v284 = vld [vmem:[#allocation5 + $0x588] sm:$0xff]
    %v285 = vld [vmem:[#allocation5 + $0x590] sm:$0xff]
    %v286 = vld [vmem:[#allocation5 + $0x598] sm:$0xff]
    %v287 = vld [vmem:[#allocation5 + $0x5a0] sm:$0xff]
    %v288 = vld [vmem:[#allocation5 + $0x5a8] sm:$0xff]
    %v289 = vld [vmem:[#allocation5 + $0x5b0] sm:$0xff]
    %v290 = vld [vmem:[#allocation5 + $0x5b8] sm:$0xff]
    %v291 = vld [vmem:[#allocation5 + $0x5c0] sm:$0xff]
    %v292 = vld [vmem:[#allocation5 + $0x5c8] sm:$0xff]
    %v293 = vld [vmem:[#allocation5 + $0x5d0] sm:$0xff]
    %v294 = vld [vmem:[#allocation5 + $0x5d8] sm:$0xff]
    %v295 = vld [vmem:[#allocation5 + $0x5e0] sm:$0xff]
    %v296 = vld [vmem:[#allocation5 + $0x5e8] sm:$0xff]
    %v297 = vld [vmem:[#allocation5 + $0x5f0] sm:$0xff]
    %v298 = vld [vmem:[#allocation5 + $0x5f8] sm:$0xff]
    %v299 = vld [vmem:[#allocation5 + $0x600] sm:$0xff]
    %v300 = vld [vmem:[#allocation5 + $0x608] sm:$0xff]
    %v301 = vld [vmem:[#allocation5 + $0x610] sm:$0xff]
    %v302 = vld [vmem:[#allocation5 + $0x618] sm:$0xff]
    %v303 = vld [vmem:[#allocation5 + $0x620] sm:$0xff]
    %v304 = vld [vmem:[#allocation5 + $0x628] sm:$0xff]
    %v305 = vld [vmem:[#allocation5 + $0x630] sm:$0xff]
    %v306 = vld [vmem:[#allocation5 + $0x638] sm:$0xff]
    %v307 = vld [vmem:[#allocation5 + $0x640] sm:$0xff]
    %v308 = vld [vmem:[#allocation5 + $0x648] sm:$0xff]
    %v309 = vld [vmem:[#allocation5 + $0x650] sm:$0xff]
    %v310 = vld [vmem:[#allocation5 + $0x658] sm:$0xff]
    %v311 = vld [vmem:[#allocation5 + $0x660] sm:$0xff]
    %v312 = vld [vmem:[#allocation5 + $0x668] sm:$0xff]
    %v313 = vld [vmem:[#allocation5 + $0x670] sm:$0xff]
    %v314 = vld [vmem:[#allocation5 + $0x678] sm:$0xff]
    %v315 = vld [vmem:[#allocation5 + $0x680] sm:$0xff]
    %v316 = vld [vmem:[#allocation5 + $0x688] sm:$0xff]
    %v317 = vld [vmem:[#allocation5 + $0x690] sm:$0xff]
    %v318 = vld [vmem:[#allocation5 + $0x698] sm:$0xff]
    %v319 = vld [vmem:[#allocation5 + $0x6a0] sm:$0xff]
    %v320 = vld [vmem:[#allocation5 + $0x6a8] sm:$0xff]
    %v321 = vld [vmem:[#allocation5 + $0x6b0] sm:$0xff]
    %v322 = vld [vmem:[#allocation5 + $0x6b8] sm:$0xff]
    %v323 = vld [vmem:[#allocation5 + $0x6c0] sm:$0xff]
    %v324 = vld [vmem:[#allocation5 + $0x6c8] sm:$0xff]
    %v325 = vld [vmem:[#allocation5 + $0x6d0] sm:$0xff]
    %v326 = vld [vmem:[#allocation5 + $0x6d8] sm:$0xff]
    %v327 = vld [vmem:[#allocation5 + $0x6e0] sm:$0xff]
    %v328 = vld [vmem:[#allocation5 + $0x6e8] sm:$0xff]
    %v329 = vld [vmem:[#allocation5 + $0x6f0] sm:$0xff]
    %v330 = vld [vmem:[#allocation5 + $0x6f8] sm:$0xff]
    %v331 = vld [vmem:[#allocation5 + $0x700] sm:$0xff]
    %v332 = vld [vmem:[#allocation5 + $0x708] sm:$0xff]
    %v333 = vld [vmem:[#allocation5 + $0x710] sm:$0xff]
    %v334 = vld [vmem:[#allocation5 + $0x718] sm:$0xff]
    %v335 = vld [vmem:[#allocation5 + $0x720] sm:$0xff]
    %v336 = vld [vmem:[#allocation5 + $0x728] sm:$0xff]
    %v337 = vld [vmem:[#allocation5 + $0x730] sm:$0xff]
    %v338 = vld [vmem:[#allocation5 + $0x738] sm:$0xff]
    %v339 = vld [vmem:[#allocation5 + $0x740] sm:$0xff]
    %v340 = vld [vmem:[#allocation5 + $0x748] sm:$0xff]
    %v341 = vld [vmem:[#allocation5 + $0x750] sm:$0xff]
    %v342 = vld [vmem:[#allocation5 + $0x758] sm:$0xff]
    %v343 = vld [vmem:[#allocation5 + $0x760] sm:$0xff]
    %v344 = vld [vmem:[#allocation5 + $0x768] sm:$0xff]
    %v345 = vld [vmem:[#allocation5 + $0x770] sm:$0xff]
    %v346 = vld [vmem:[#allocation5 + $0x778] sm:$0xff]
    %v347 = vld [vmem:[#allocation5 + $0x780] sm:$0xff]
    %v348 = vld [vmem:[#allocation5 + $0x788] sm:$0xff]
    %v349 = vld [vmem:[#allocation5 + $0x790] sm:$0xff]
    %v350 = vld [vmem:[#allocation5 + $0x798] sm:$0xff]
    %v351 = vld [vmem:[#allocation5 + $0x7a0] sm:$0xff]
    %v352 = vld [vmem:[#allocation5 + $0x7a8] sm:$0xff]
    %v353 = vld [vmem:[#allocation5 + $0x7b0] sm:$0xff]
    %v354 = vld [vmem:[#allocation5 + $0x7b8] sm:$0xff]
    %v355 = vld [vmem:[#allocation5 + $0x7c0] sm:$0xff]
    %v356 = vld [vmem:[#allocation5 + $0x7c8] sm:$0xff]
    %v357 = vld [vmem:[#allocation5 + $0x7d0] sm:$0xff]
    %v358 = vld [vmem:[#allocation5 + $0x7d8] sm:$0xff]
    %v359 = vld [vmem:[#allocation5 + $0x7e0] sm:$0xff]
    %v360 = vld [vmem:[#allocation5 + $0x7e8] sm:$0xff]
    %v361 = vld [vmem:[#allocation5 + $0x7f0] sm:$0xff]
    %v362 = vld [vmem:[#allocation5 + $0x7f8] sm:$0xff]
    %v363 = vld [vmem:[%s2] sm:$0xf]
    %v365 = vlaneseq
    %v366 = vshrl.u32 %v365, 7
    %v367 = vsub.s32 0, %v366
    %v368 = vrot.slane %v363, %v367
    %v369 = vlaneseq
    %v370 = vshrl.u32 %v369, 7
    %v371 = vsub.s32 1, %v370
    %v372 = vrot.slane %v363, %v371
    %v373 = vlaneseq
    %v374 = vshrl.u32 %v373, 7
    %v375 = vsub.s32 2, %v374
    %v376 = vrot.slane %v363, %v375
    %v377 = vlaneseq
    %v378 = vshrl.u32 %v377, 7
    %v379 = vsub.s32 3, %v378
    %v380 = vrot.slane %v363, %v379
    %v641 = vunpack.c.l.b16 %v107
    %v642 = vunpack.c.h.b16 %v107
    %v643 = vunpack.c.l.b16 %v108
    %v644 = vunpack.c.h.b16 %v108
    %v645 = vunpack.c.l.b16 %v109
    %v646 = vunpack.c.h.b16 %v109
    %v647 = vunpack.c.l.b16 %v110
    %v648 = vunpack.c.h.b16 %v110
    %v649 = vunpack.c.l.b16 %v111
    %v650 = vunpack.c.h.b16 %v111
    %v651 = vunpack.c.l.b16 %v112
    %v652 = vunpack.c.h.b16 %v112
    %v653 = vunpack.c.l.b16 %v113
    %v654 = vunpack.c.h.b16 %v113
    %v655 = vunpack.c.l.b16 %v114
    %v656 = vunpack.c.h.b16 %v114
    %v657 = vunpack.c.l.b16 %v115
    %v658 = vunpack.c.h.b16 %v115
    %v659 = vunpack.c.l.b16 %v116
    %v660 = vunpack.c.h.b16 %v116
    %v661 = vunpack.c.l.b16 %v117
    %v662 = vunpack.c.h.b16 %v117
    %v663 = vunpack.c.l.b16 %v118
    %v664 = vunpack.c.h.b16 %v118
    %v665 = vunpack.c.l.b16 %v119
    %v666 = vunpack.c.h.b16 %v119
    %v667 = vunpack.c.l.b16 %v120
    %v668 = vunpack.c.h.b16 %v120
    %v669 = vunpack.c.l.b16 %v121
    %v670 = vunpack.c.h.b16 %v121
    %v671 = vunpack.c.l.b16 %v122
    %v672 = vunpack.c.h.b16 %v122
    %v673 = vunpack.c.l.b16 %v123
    %v674 = vunpack.c.h.b16 %v123
    %v675 = vunpack.c.l.b16 %v124
    %v676 = vunpack.c.h.b16 %v124
    %v677 = vunpack.c.l.b16 %v125
    %v678 = vunpack.c.h.b16 %v125
    %v679 = vunpack.c.l.b16 %v126
    %v680 = vunpack.c.h.b16 %v126
    %v681 = vunpack.c.l.b16 %v127
    %v682 = vunpack.c.h.b16 %v127
    %v683 = vunpack.c.l.b16 %v128
    %v684 = vunpack.c.h.b16 %v128
    %v685 = vunpack.c.l.b16 %v129
    %v686 = vunpack.c.h.b16 %v129
    %v687 = vunpack.c.l.b16 %v130
    %v688 = vunpack.c.h.b16 %v130
    %v689 = vunpack.c.l.b16 %v131
    %v690 = vunpack.c.h.b16 %v131
    %v691 = vunpack.c.l.b16 %v132
    %v692 = vunpack.c.h.b16 %v132
    %v693 = vunpack.c.l.b16 %v133
    %v694 = vunpack.c.h.b16 %v133
    %v695 = vunpack.c.l.b16 %v134
    %v696 = vunpack.c.h.b16 %v134
    %v697 = vunpack.c.l.b16 %v135
    %v698 = vunpack.c.h.b16 %v135
    %v699 = vunpack.c.l.b16 %v136
    %v700 = vunpack.c.h.b16 %v136
    %v701 = vunpack.c.l.b16 %v137
    %v702 = vunpack.c.h.b16 %v137
    %v703 = vunpack.c.l.b16 %v138
    %v704 = vunpack.c.h.b16 %v138
    %v705 = vunpack.c.l.b16 %v139
    %v706 = vunpack.c.h.b16 %v139
    %v707 = vunpack.c.l.b16 %v140
    %v708 = vunpack.c.h.b16 %v140
    %v709 = vunpack.c.l.b16 %v141
    %v710 = vunpack.c.h.b16 %v141
    %v711 = vunpack.c.l.b16 %v142
    %v712 = vunpack.c.h.b16 %v142
    %v713 = vunpack.c.l.b16 %v143
    %v714 = vunpack.c.h.b16 %v143
    %v715 = vunpack.c.l.b16 %v144
    %v716 = vunpack.c.h.b16 %v144
    %v717 = vunpack.c.l.b16 %v145
    %v718 = vunpack.c.h.b16 %v145
    %v719 = vunpack.c.l.b16 %v146
    %v720 = vunpack.c.h.b16 %v146
    %v721 = vunpack.c.l.b16 %v147
    %v722 = vunpack.c.h.b16 %v147
    %v723 = vunpack.c.l.b16 %v148
    %v724 = vunpack.c.h.b16 %v148
    %v725 = vunpack.c.l.b16 %v149
    %v726 = vunpack.c.h.b16 %v149
    %v727 = vunpack.c.l.b16 %v150
    %v728 = vunpack.c.h.b16 %v150
    %v729 = vunpack.c.l.b16 %v151
    %v730 = vunpack.c.h.b16 %v151
    %v731 = vunpack.c.l.b16 %v152
    %v732 = vunpack.c.h.b16 %v152
    %v733 = vunpack.c.l.b16 %v153
    %v734 = vunpack.c.h.b16 %v153
    %v735 = vunpack.c.l.b16 %v154
    %v736 = vunpack.c.h.b16 %v154
    %v737 = vunpack.c.l.b16 %v155
    %v738 = vunpack.c.h.b16 %v155
    %v739 = vunpack.c.l.b16 %v156
    %v740 = vunpack.c.h.b16 %v156
    %v741 = vunpack.c.l.b16 %v157
    %v742 = vunpack.c.h.b16 %v157
    %v743 = vunpack.c.l.b16 %v158
    %v744 = vunpack.c.h.b16 %v158
    %v745 = vunpack.c.l.b16 %v159
    %v746 = vunpack.c.h.b16 %v159
    %v747 = vunpack.c.l.b16 %v160
    %v748 = vunpack.c.h.b16 %v160
    %v749 = vunpack.c.l.b16 %v161
    %v750 = vunpack.c.h.b16 %v161
    %v751 = vunpack.c.l.b16 %v162
    %v752 = vunpack.c.h.b16 %v162
    %v753 = vunpack.c.l.b16 %v163
    %v754 = vunpack.c.h.b16 %v163
    %v755 = vunpack.c.l.b16 %v164
    %v756 = vunpack.c.h.b16 %v164
    %v757 = vunpack.c.l.b16 %v165
    %v758 = vunpack.c.h.b16 %v165
    %v759 = vunpack.c.l.b16 %v166
    %v760 = vunpack.c.h.b16 %v166
    %v761 = vunpack.c.l.b16 %v167
    %v762 = vunpack.c.h.b16 %v167
    %v763 = vunpack.c.l.b16 %v168
    %v764 = vunpack.c.h.b16 %v168
    %v765 = vunpack.c.l.b16 %v169
    %v766 = vunpack.c.h.b16 %v169
    %v767 = vunpack.c.l.b16 %v170
    %v768 = vunpack.c.h.b16 %v170
    %v769 = vunpack.c.l.b16 %v171
    %v770 = vunpack.c.h.b16 %v171
    %v771 = vunpack.c.l.b16 %v172
    %v772 = vunpack.c.h.b16 %v172
    %v773 = vunpack.c.l.b16 %v173
    %v774 = vunpack.c.h.b16 %v173
    %v775 = vunpack.c.l.b16 %v174
    %v776 = vunpack.c.h.b16 %v174
    %v777 = vunpack.c.l.b16 %v175
    %v778 = vunpack.c.h.b16 %v175
    %v779 = vunpack.c.l.b16 %v176
    %v780 = vunpack.c.h.b16 %v176
    %v781 = vunpack.c.l.b16 %v177
    %v782 = vunpack.c.h.b16 %v177
    %v783 = vunpack.c.l.b16 %v178
    %v784 = vunpack.c.h.b16 %v178
    %v785 = vunpack.c.l.b16 %v179
    %v786 = vunpack.c.h.b16 %v179
    %v787 = vunpack.c.l.b16 %v180
    %v788 = vunpack.c.h.b16 %v180
    %v789 = vunpack.c.l.b16 %v181
    %v790 = vunpack.c.h.b16 %v181
    %v791 = vunpack.c.l.b16 %v182
    %v792 = vunpack.c.h.b16 %v182
    %v793 = vunpack.c.l.b16 %v183
    %v794 = vunpack.c.h.b16 %v183
    %v795 = vunpack.c.l.b16 %v184
    %v796 = vunpack.c.h.b16 %v184
    %v797 = vunpack.c.l.b16 %v185
    %v798 = vunpack.c.h.b16 %v185
    %v799 = vunpack.c.l.b16 %v186
    %v800 = vunpack.c.h.b16 %v186
    %v801 = vunpack.c.l.b16 %v187
    %v802 = vunpack.c.h.b16 %v187
    %v803 = vunpack.c.l.b16 %v188
    %v804 = vunpack.c.h.b16 %v188
    %v805 = vunpack.c.l.b16 %v189
    %v806 = vunpack.c.h.b16 %v189
    %v807 = vunpack.c.l.b16 %v190
    %v808 = vunpack.c.h.b16 %v190
    %v809 = vunpack.c.l.b16 %v191
    %v810 = vunpack.c.h.b16 %v191
    %v811 = vunpack.c.l.b16 %v192
    %v812 = vunpack.c.h.b16 %v192
    %v813 = vunpack.c.l.b16 %v193
    %v814 = vunpack.c.h.b16 %v193
    %v815 = vunpack.c.l.b16 %v194
    %v816 = vunpack.c.h.b16 %v194
    %v817 = vunpack.c.l.b16 %v195
    %v818 = vunpack.c.h.b16 %v195
    %v819 = vunpack.c.l.b16 %v196
    %v820 = vunpack.c.h.b16 %v196
    %v821 = vunpack.c.l.b16 %v197
    %v822 = vunpack.c.h.b16 %v197
    %v823 = vunpack.c.l.b16 %v198
    %v824 = vunpack.c.h.b16 %v198
    %v825 = vunpack.c.l.b16 %v199
    %v826 = vunpack.c.h.b16 %v199
    %v827 = vunpack.c.l.b16 %v200
    %v828 = vunpack.c.h.b16 %v200
    %v829 = vunpack.c.l.b16 %v201
    %v830 = vunpack.c.h.b16 %v201
    %v831 = vunpack.c.l.b16 %v202
    %v832 = vunpack.c.h.b16 %v202
    %v833 = vunpack.c.l.b16 %v203
    %v834 = vunpack.c.h.b16 %v203
    %v835 = vunpack.c.l.b16 %v204
    %v836 = vunpack.c.h.b16 %v204
    %v837 = vunpack.c.l.b16 %v205
    %v838 = vunpack.c.h.b16 %v205
    %v839 = vunpack.c.l.b16 %v206
    %v840 = vunpack.c.h.b16 %v206
    %v841 = vunpack.c.l.b16 %v207
    %v842 = vunpack.c.h.b16 %v207
    %v843 = vunpack.c.l.b16 %v208
    %v844 = vunpack.c.h.b16 %v208
    %v845 = vunpack.c.l.b16 %v209
    %v846 = vunpack.c.h.b16 %v209
    %v847 = vunpack.c.l.b16 %v210
    %v848 = vunpack.c.h.b16 %v210
    %v849 = vunpack.c.l.b16 %v211
    %v850 = vunpack.c.h.b16 %v211
    %v851 = vunpack.c.l.b16 %v212
    %v852 = vunpack.c.h.b16 %v212
    %v853 = vunpack.c.l.b16 %v213
    %v854 = vunpack.c.h.b16 %v213
    %v855 = vunpack.c.l.b16 %v214
    %v856 = vunpack.c.h.b16 %v214
    %v857 = vunpack.c.l.b16 %v215
    %v858 = vunpack.c.h.b16 %v215
    %v859 = vunpack.c.l.b16 %v216
    %v860 = vunpack.c.h.b16 %v216
    %v861 = vunpack.c.l.b16 %v217
    %v862 = vunpack.c.h.b16 %v217
    %v863 = vunpack.c.l.b16 %v218
    %v864 = vunpack.c.h.b16 %v218
    %v865 = vunpack.c.l.b16 %v219
    %v866 = vunpack.c.h.b16 %v219
    %v867 = vunpack.c.l.b16 %v220
    %v868 = vunpack.c.h.b16 %v220
    %v869 = vunpack.c.l.b16 %v221
    %v870 = vunpack.c.h.b16 %v221
    %v871 = vunpack.c.l.b16 %v222
    %v872 = vunpack.c.h.b16 %v222
    %v873 = vunpack.c.l.b16 %v223
    %v874 = vunpack.c.h.b16 %v223
    %v875 = vunpack.c.l.b16 %v224
    %v876 = vunpack.c.h.b16 %v224
    %v877 = vunpack.c.l.b16 %v225
    %v878 = vunpack.c.h.b16 %v225
    %v879 = vunpack.c.l.b16 %v226
    %v880 = vunpack.c.h.b16 %v226
    %v881 = vunpack.c.l.b16 %v227
    %v882 = vunpack.c.h.b16 %v227
    %v883 = vunpack.c.l.b16 %v228
    %v884 = vunpack.c.h.b16 %v228
    %v885 = vunpack.c.l.b16 %v229
    %v886 = vunpack.c.h.b16 %v229
    %v887 = vunpack.c.l.b16 %v230
    %v888 = vunpack.c.h.b16 %v230
    %v889 = vunpack.c.l.b16 %v231
    %v890 = vunpack.c.h.b16 %v231
    %v891 = vunpack.c.l.b16 %v232
    %v892 = vunpack.c.h.b16 %v232
    %v893 = vunpack.c.l.b16 %v233
    %v894 = vunpack.c.h.b16 %v233
    %v895 = vunpack.c.l.b16 %v234
    %v896 = vunpack.c.h.b16 %v234
    %v897 = vunpack.c.l.b16 %v235
    %v898 = vunpack.c.h.b16 %v235
    %v899 = vunpack.c.l.b16 %v236
    %v900 = vunpack.c.h.b16 %v236
    %v901 = vunpack.c.l.b16 %v237
    %v902 = vunpack.c.h.b16 %v237
    %v903 = vunpack.c.l.b16 %v238
    %v904 = vunpack.c.h.b16 %v238
    %v905 = vunpack.c.l.b16 %v239
    %v906 = vunpack.c.h.b16 %v239
    %v907 = vunpack.c.l.b16 %v240
    %v908 = vunpack.c.h.b16 %v240
    %v909 = vunpack.c.l.b16 %v241
    %v910 = vunpack.c.h.b16 %v241
    %v911 = vunpack.c.l.b16 %v242
    %v912 = vunpack.c.h.b16 %v242
    %v913 = vunpack.c.l.b16 %v243
    %v914 = vunpack.c.h.b16 %v243
    %v915 = vunpack.c.l.b16 %v244
    %v916 = vunpack.c.h.b16 %v244
    %v917 = vunpack.c.l.b16 %v245
    %v918 = vunpack.c.h.b16 %v245
    %v919 = vunpack.c.l.b16 %v246
    %v920 = vunpack.c.h.b16 %v246
    %v921 = vunpack.c.l.b16 %v247
    %v922 = vunpack.c.h.b16 %v247
    %v923 = vunpack.c.l.b16 %v248
    %v924 = vunpack.c.h.b16 %v248
    %v925 = vunpack.c.l.b16 %v249
    %v926 = vunpack.c.h.b16 %v249
    %v927 = vunpack.c.l.b16 %v250
    %v928 = vunpack.c.h.b16 %v250
    %v929 = vunpack.c.l.b16 %v251
    %v930 = vunpack.c.h.b16 %v251
    %v931 = vunpack.c.l.b16 %v252
    %v932 = vunpack.c.h.b16 %v252
    %v933 = vunpack.c.l.b16 %v253
    %v934 = vunpack.c.h.b16 %v253
    %v935 = vunpack.c.l.b16 %v254
    %v936 = vunpack.c.h.b16 %v254
    %v937 = vunpack.c.l.b16 %v255
    %v938 = vunpack.c.h.b16 %v255
    %v939 = vunpack.c.l.b16 %v256
    %v940 = vunpack.c.h.b16 %v256
    %v941 = vunpack.c.l.b16 %v257
    %v942 = vunpack.c.h.b16 %v257
    %v943 = vunpack.c.l.b16 %v258
    %v944 = vunpack.c.h.b16 %v258
    %v945 = vunpack.c.l.b16 %v259
    %v946 = vunpack.c.h.b16 %v259
    %v947 = vunpack.c.l.b16 %v260
    %v948 = vunpack.c.h.b16 %v260
    %v949 = vunpack.c.l.b16 %v261
    %v950 = vunpack.c.h.b16 %v261
    %v951 = vunpack.c.l.b16 %v262
    %v952 = vunpack.c.h.b16 %v262
    %v953 = vunpack.c.l.b16 %v263
    %v954 = vunpack.c.h.b16 %v263
    %v955 = vunpack.c.l.b16 %v264
    %v956 = vunpack.c.h.b16 %v264
    %v957 = vunpack.c.l.b16 %v265
    %v958 = vunpack.c.h.b16 %v265
    %v959 = vunpack.c.l.b16 %v266
    %v960 = vunpack.c.h.b16 %v266
    %v961 = vunpack.c.l.b16 %v267
    %v962 = vunpack.c.h.b16 %v267
    %v963 = vunpack.c.l.b16 %v268
    %v964 = vunpack.c.h.b16 %v268
    %v965 = vunpack.c.l.b16 %v269
    %v966 = vunpack.c.h.b16 %v269
    %v967 = vunpack.c.l.b16 %v270
    %v968 = vunpack.c.h.b16 %v270
    %v969 = vunpack.c.l.b16 %v271
    %v970 = vunpack.c.h.b16 %v271
    %v971 = vunpack.c.l.b16 %v272
    %v972 = vunpack.c.h.b16 %v272
    %v973 = vunpack.c.l.b16 %v273
    %v974 = vunpack.c.h.b16 %v273
    %v975 = vunpack.c.l.b16 %v274
    %v976 = vunpack.c.h.b16 %v274
    %v977 = vunpack.c.l.b16 %v275
    %v978 = vunpack.c.h.b16 %v275
    %v979 = vunpack.c.l.b16 %v276
    %v980 = vunpack.c.h.b16 %v276
    %v981 = vunpack.c.l.b16 %v277
    %v982 = vunpack.c.h.b16 %v277
    %v983 = vunpack.c.l.b16 %v278
    %v984 = vunpack.c.h.b16 %v278
    %v985 = vunpack.c.l.b16 %v279
    %v986 = vunpack.c.h.b16 %v279
    %v987 = vunpack.c.l.b16 %v280
    %v988 = vunpack.c.h.b16 %v280
    %v989 = vunpack.c.l.b16 %v281
    %v990 = vunpack.c.h.b16 %v281
    %v991 = vunpack.c.l.b16 %v282
    %v992 = vunpack.c.h.b16 %v282
    %v993 = vunpack.c.l.b16 %v283
    %v994 = vunpack.c.h.b16 %v283
    %v995 = vunpack.c.l.b16 %v284
    %v996 = vunpack.c.h.b16 %v284
    %v997 = vunpack.c.l.b16 %v285
    %v998 = vunpack.c.h.b16 %v285
    %v999 = vunpack.c.l.b16 %v286
    %v1000 = vunpack.c.h.b16 %v286
    %v1001 = vunpack.c.l.b16 %v287
    %v1002 = vunpack.c.h.b16 %v287
    %v1003 = vunpack.c.l.b16 %v288
    %v1004 = vunpack.c.h.b16 %v288
    %v1005 = vunpack.c.l.b16 %v289
    %v1006 = vunpack.c.h.b16 %v289
    %v1007 = vunpack.c.l.b16 %v290
    %v1008 = vunpack.c.h.b16 %v290
    %v1009 = vunpack.c.l.b16 %v291
    %v1010 = vunpack.c.h.b16 %v291
    %v1011 = vunpack.c.l.b16 %v292
    %v1012 = vunpack.c.h.b16 %v292
    %v1013 = vunpack.c.l.b16 %v293
    %v1014 = vunpack.c.h.b16 %v293
    %v1015 = vunpack.c.l.b16 %v294
    %v1016 = vunpack.c.h.b16 %v294
    %v1017 = vunpack.c.l.b16 %v295
    %v1018 = vunpack.c.h.b16 %v295
    %v1019 = vunpack.c.l.b16 %v296
    %v1020 = vunpack.c.h.b16 %v296
    %v1021 = vunpack.c.l.b16 %v297
    %v1022 = vunpack.c.h.b16 %v297
    %v1023 = vunpack.c.l.b16 %v298
    %v1024 = vunpack.c.h.b16 %v298
    %v1025 = vunpack.c.l.b16 %v299
    %v1026 = vunpack.c.h.b16 %v299
    %v1027 = vunpack.c.l.b16 %v300
    %v1028 = vunpack.c.h.b16 %v300
    %v1029 = vunpack.c.l.b16 %v301
    %v1030 = vunpack.c.h.b16 %v301
    %v1031 = vunpack.c.l.b16 %v302
    %v1032 = vunpack.c.h.b16 %v302
    %v1033 = vunpack.c.l.b16 %v303
    %v1034 = vunpack.c.h.b16 %v303
    %v1035 = vunpack.c.l.b16 %v304
    %v1036 = vunpack.c.h.b16 %v304
    %v1037 = vunpack.c.l.b16 %v305
    %v1038 = vunpack.c.h.b16 %v305
    %v1039 = vunpack.c.l.b16 %v306
    %v1040 = vunpack.c.h.b16 %v306
    %v1041 = vunpack.c.l.b16 %v307
    %v1042 = vunpack.c.h.b16 %v307
    %v1043 = vunpack.c.l.b16 %v308
    %v1044 = vunpack.c.h.b16 %v308
    %v1045 = vunpack.c.l.b16 %v309
    %v1046 = vunpack.c.h.b16 %v309
    %v1047 = vunpack.c.l.b16 %v310
    %v1048 = vunpack.c.h.b16 %v310
    %v1049 = vunpack.c.l.b16 %v311
    %v1050 = vunpack.c.h.b16 %v311
    %v1051 = vunpack.c.l.b16 %v312
    %v1052 = vunpack.c.h.b16 %v312
    %v1053 = vunpack.c.l.b16 %v313
    %v1054 = vunpack.c.h.b16 %v313
    %v1055 = vunpack.c.l.b16 %v314
    %v1056 = vunpack.c.h.b16 %v314
    %v1057 = vunpack.c.l.b16 %v315
    %v1058 = vunpack.c.h.b16 %v315
    %v1059 = vunpack.c.l.b16 %v316
    %v1060 = vunpack.c.h.b16 %v316
    %v1061 = vunpack.c.l.b16 %v317
    %v1062 = vunpack.c.h.b16 %v317
    %v1063 = vunpack.c.l.b16 %v318
    %v1064 = vunpack.c.h.b16 %v318
    %v1065 = vunpack.c.l.b16 %v319
    %v1066 = vunpack.c.h.b16 %v319
    %v1067 = vunpack.c.l.b16 %v320
    %v1068 = vunpack.c.h.b16 %v320
    %v1069 = vunpack.c.l.b16 %v321
    %v1070 = vunpack.c.h.b16 %v321
    %v1071 = vunpack.c.l.b16 %v322
    %v1072 = vunpack.c.h.b16 %v322
    %v1073 = vunpack.c.l.b16 %v323
    %v1074 = vunpack.c.h.b16 %v323
    %v1075 = vunpack.c.l.b16 %v324
    %v1076 = vunpack.c.h.b16 %v324
    %v1077 = vunpack.c.l.b16 %v325
    %v1078 = vunpack.c.h.b16 %v325
    %v1079 = vunpack.c.l.b16 %v326
    %v1080 = vunpack.c.h.b16 %v326
    %v1081 = vunpack.c.l.b16 %v327
    %v1082 = vunpack.c.h.b16 %v327
    %v1083 = vunpack.c.l.b16 %v328
    %v1084 = vunpack.c.h.b16 %v328
    %v1085 = vunpack.c.l.b16 %v329
    %v1086 = vunpack.c.h.b16 %v329
    %v1087 = vunpack.c.l.b16 %v330
    %v1088 = vunpack.c.h.b16 %v330
    %v1089 = vunpack.c.l.b16 %v331
    %v1090 = vunpack.c.h.b16 %v331
    %v1091 = vunpack.c.l.b16 %v332
    %v1092 = vunpack.c.h.b16 %v332
    %v1093 = vunpack.c.l.b16 %v333
    %v1094 = vunpack.c.h.b16 %v333
    %v1095 = vunpack.c.l.b16 %v334
    %v1096 = vunpack.c.h.b16 %v334
    %v1097 = vunpack.c.l.b16 %v335
    %v1098 = vunpack.c.h.b16 %v335
    %v1099 = vunpack.c.l.b16 %v336
    %v1100 = vunpack.c.h.b16 %v336
    %v1101 = vunpack.c.l.b16 %v337
    %v1102 = vunpack.c.h.b16 %v337
    %v1103 = vunpack.c.l.b16 %v338
    %v1104 = vunpack.c.h.b16 %v338
    %v1105 = vunpack.c.l.b16 %v339
    %v1106 = vunpack.c.h.b16 %v339
    %v1107 = vunpack.c.l.b16 %v340
    %v1108 = vunpack.c.h.b16 %v340
    %v1109 = vunpack.c.l.b16 %v341
    %v1110 = vunpack.c.h.b16 %v341
    %v1111 = vunpack.c.l.b16 %v342
    %v1112 = vunpack.c.h.b16 %v342
    %v1113 = vunpack.c.l.b16 %v343
    %v1114 = vunpack.c.h.b16 %v343
    %v1115 = vunpack.c.l.b16 %v344
    %v1116 = vunpack.c.h.b16 %v344
    %v1117 = vunpack.c.l.b16 %v345
    %v1118 = vunpack.c.h.b16 %v345
    %v1119 = vunpack.c.l.b16 %v346
    %v1120 = vunpack.c.h.b16 %v346
    %v1121 = vunpack.c.l.b16 %v347
    %v1122 = vunpack.c.h.b16 %v347
    %v1123 = vunpack.c.l.b16 %v348
    %v1124 = vunpack.c.h.b16 %v348
    %v1125 = vunpack.c.l.b16 %v349
    %v1126 = vunpack.c.h.b16 %v349
    %v1127 = vunpack.c.l.b16 %v350
    %v1128 = vunpack.c.h.b16 %v350
    %v1129 = vunpack.c.l.b16 %v351
    %v1130 = vunpack.c.h.b16 %v351
    %v1131 = vunpack.c.l.b16 %v352
    %v1132 = vunpack.c.h.b16 %v352
    %v1133 = vunpack.c.l.b16 %v353
    %v1134 = vunpack.c.h.b16 %v353
    %v1135 = vunpack.c.l.b16 %v354
    %v1136 = vunpack.c.h.b16 %v354
    %v1137 = vunpack.c.l.b16 %v355
    %v1138 = vunpack.c.h.b16 %v355
    %v1139 = vunpack.c.l.b16 %v356
    %v1140 = vunpack.c.h.b16 %v356
    %v1141 = vunpack.c.l.b16 %v357
    %v1142 = vunpack.c.h.b16 %v357
    %v1143 = vunpack.c.l.b16 %v358
    %v1144 = vunpack.c.h.b16 %v358
    %v1145 = vunpack.c.l.b16 %v359
    %v1146 = vunpack.c.h.b16 %v359
    %v1147 = vunpack.c.l.b16 %v360
    %v1148 = vunpack.c.h.b16 %v360
    %v1149 = vunpack.c.l.b16 %v361
    %v1150 = vunpack.c.h.b16 %v361
    %v1151 = vunpack.c.l.b16 %v362
    %v1152 = vunpack.c.h.b16 %v362
    %v1153 = vpack.c.b16 %v645, %v641
    %v1154 = vpack.c.b16 %v646, %v642
    %v1155 = vpack.c.b16 %v647, %v643
    %v1156 = vpack.c.b16 %v648, %v644
    %v1157 = vpack.c.b16 %v653, %v649
    %v1158 = vpack.c.b16 %v654, %v650
    %v1159 = vpack.c.b16 %v655, %v651
    %v1160 = vpack.c.b16 %v656, %v652
    %v1161 = vpack.c.b16 %v661, %v657
    %v1162 = vpack.c.b16 %v662, %v658
    %v1163 = vpack.c.b16 %v663, %v659
    %v1164 = vpack.c.b16 %v664, %v660
    %v1165 = vpack.c.b16 %v669, %v665
    %v1166 = vpack.c.b16 %v670, %v666
    %v1167 = vpack.c.b16 %v671, %v667
    %v1168 = vpack.c.b16 %v672, %v668
    %v1169 = vpack.c.b16 %v677, %v673
    %v1170 = vpack.c.b16 %v678, %v674
    %v1171 = vpack.c.b16 %v679, %v675
    %v1172 = vpack.c.b16 %v680, %v676
    %v1173 = vpack.c.b16 %v685, %v681
    %v1174 = vpack.c.b16 %v686, %v682
    %v1175 = vpack.c.b16 %v687, %v683
    %v1176 = vpack.c.b16 %v688, %v684
    %v1177 = vpack.c.b16 %v693, %v689
    %v1178 = vpack.c.b16 %v694, %v690
    %v1179 = vpack.c.b16 %v695, %v691
    %v1180 = vpack.c.b16 %v696, %v692
    %v1181 = vpack.c.b16 %v701, %v697
    %v1182 = vpack.c.b16 %v702, %v698
    %v1183 = vpack.c.b16 %v703, %v699
    %v1184 = vpack.c.b16 %v704, %v700
    %v1185 = vpack.c.b16 %v709, %v705
    %v1186 = vpack.c.b16 %v710, %v706
    %v1187 = vpack.c.b16 %v711, %v707
    %v1188 = vpack.c.b16 %v712, %v708
    %v1189 = vpack.c.b16 %v717, %v713
    %v1190 = vpack.c.b16 %v718, %v714
    %v1191 = vpack.c.b16 %v719, %v715
    %v1192 = vpack.c.b16 %v720, %v716
    %v1193 = vpack.c.b16 %v725, %v721
    %v1194 = vpack.c.b16 %v726, %v722
    %v1195 = vpack.c.b16 %v727, %v723
    %v1196 = vpack.c.b16 %v728, %v724
    %v1197 = vpack.c.b16 %v733, %v729
    %v1198 = vpack.c.b16 %v734, %v730
    %v1199 = vpack.c.b16 %v735, %v731
    %v1200 = vpack.c.b16 %v736, %v732
    %v1201 = vpack.c.b16 %v741, %v737
    %v1202 = vpack.c.b16 %v742, %v738
    %v1203 = vpack.c.b16 %v743, %v739
    %v1204 = vpack.c.b16 %v744, %v740
    %v1205 = vpack.c.b16 %v749, %v745
    %v1206 = vpack.c.b16 %v750, %v746
    %v1207 = vpack.c.b16 %v751, %v747
    %v1208 = vpack.c.b16 %v752, %v748
    %v1209 = vpack.c.b16 %v757, %v753
    %v1210 = vpack.c.b16 %v758, %v754
    %v1211 = vpack.c.b16 %v759, %v755
    %v1212 = vpack.c.b16 %v760, %v756
    %v1213 = vpack.c.b16 %v765, %v761
    %v1214 = vpack.c.b16 %v766, %v762
    %v1215 = vpack.c.b16 %v767, %v763
    %v1216 = vpack.c.b16 %v768, %v764
    %v1217 = vpack.c.b16 %v773, %v769
    %v1218 = vpack.c.b16 %v774, %v770
    %v1219 = vpack.c.b16 %v775, %v771
    %v1220 = vpack.c.b16 %v776, %v772
    %v1221 = vpack.c.b16 %v781, %v777
    %v1222 = vpack.c.b16 %v782, %v778
    %v1223 = vpack.c.b16 %v783, %v779
    %v1224 = vpack.c.b16 %v784, %v780
    %v1225 = vpack.c.b16 %v789, %v785
    %v1226 = vpack.c.b16 %v790, %v786
    %v1227 = vpack.c.b16 %v791, %v787
    %v1228 = vpack.c.b16 %v792, %v788
    %v1229 = vpack.c.b16 %v797, %v793
    %v1230 = vpack.c.b16 %v798, %v794
    %v1231 = vpack.c.b16 %v799, %v795
    %v1232 = vpack.c.b16 %v800, %v796
    %v1233 = vpack.c.b16 %v805, %v801
    %v1234 = vpack.c.b16 %v806, %v802
    %v1235 = vpack.c.b16 %v807, %v803
    %v1236 = vpack.c.b16 %v808, %v804
    %v1237 = vpack.c.b16 %v813, %v809
    %v1238 = vpack.c.b16 %v814, %v810
    %v1239 = vpack.c.b16 %v815, %v811
    %v1240 = vpack.c.b16 %v816, %v812
    %v1241 = vpack.c.b16 %v821, %v817
    %v1242 = vpack.c.b16 %v822, %v818
    %v1243 = vpack.c.b16 %v823, %v819
    %v1244 = vpack.c.b16 %v824, %v820
    %v1245 = vpack.c.b16 %v829, %v825
    %v1246 = vpack.c.b16 %v830, %v826
    %v1247 = vpack.c.b16 %v831, %v827
    %v1248 = vpack.c.b16 %v832, %v828
    %v1249 = vpack.c.b16 %v837, %v833
    %v1250 = vpack.c.b16 %v838, %v834
    %v1251 = vpack.c.b16 %v839, %v835
    %v1252 = vpack.c.b16 %v840, %v836
    %v1253 = vpack.c.b16 %v845, %v841
    %v1254 = vpack.c.b16 %v846, %v842
    %v1255 = vpack.c.b16 %v847, %v843
    %v1256 = vpack.c.b16 %v848, %v844
    %v1257 = vpack.c.b16 %v853, %v849
    %v1258 = vpack.c.b16 %v854, %v850
    %v1259 = vpack.c.b16 %v855, %v851
    %v1260 = vpack.c.b16 %v856, %v852
    %v1261 = vpack.c.b16 %v861, %v857
    %v1262 = vpack.c.b16 %v862, %v858
    %v1263 = vpack.c.b16 %v863, %v859
    %v1264 = vpack.c.b16 %v864, %v860
    %v1265 = vpack.c.b16 %v869, %v865
    %v1266 = vpack.c.b16 %v870, %v866
    %v1267 = vpack.c.b16 %v871, %v867
    %v1268 = vpack.c.b16 %v872, %v868
    %v1269 = vpack.c.b16 %v877, %v873
    %v1270 = vpack.c.b16 %v878, %v874
    %v1271 = vpack.c.b16 %v879, %v875
    %v1272 = vpack.c.b16 %v880, %v876
    %v1273 = vpack.c.b16 %v885, %v881
    %v1274 = vpack.c.b16 %v886, %v882
    %v1275 = vpack.c.b16 %v887, %v883
    %v1276 = vpack.c.b16 %v888, %v884
    %v1277 = vpack.c.b16 %v893, %v889
    %v1278 = vpack.c.b16 %v894, %v890
    %v1279 = vpack.c.b16 %v895, %v891
    %v1280 = vpack.c.b16 %v896, %v892
    %v1281 = vpack.c.b16 %v901, %v897
    %v1282 = vpack.c.b16 %v902, %v898
    %v1283 = vpack.c.b16 %v903, %v899
    %v1284 = vpack.c.b16 %v904, %v900
    %v1285 = vpack.c.b16 %v909, %v905
    %v1286 = vpack.c.b16 %v910, %v906
    %v1287 = vpack.c.b16 %v911, %v907
    %v1288 = vpack.c.b16 %v912, %v908
    %v1289 = vpack.c.b16 %v917, %v913
    %v1290 = vpack.c.b16 %v918, %v914
    %v1291 = vpack.c.b16 %v919, %v915
    %v1292 = vpack.c.b16 %v920, %v916
    %v1293 = vpack.c.b16 %v925, %v921
    %v1294 = vpack.c.b16 %v926, %v922
    %v1295 = vpack.c.b16 %v927, %v923
    %v1296 = vpack.c.b16 %v928, %v924
    %v1297 = vpack.c.b16 %v933, %v929
    %v1298 = vpack.c.b16 %v934, %v930
    %v1299 = vpack.c.b16 %v935, %v931
    %v1300 = vpack.c.b16 %v936, %v932
    %v1301 = vpack.c.b16 %v941, %v937
    %v1302 = vpack.c.b16 %v942, %v938
    %v1303 = vpack.c.b16 %v943, %v939
    %v1304 = vpack.c.b16 %v944, %v940
    %v1305 = vpack.c.b16 %v949, %v945
    %v1306 = vpack.c.b16 %v950, %v946
    %v1307 = vpack.c.b16 %v951, %v947
    %v1308 = vpack.c.b16 %v952, %v948
    %v1309 = vpack.c.b16 %v957, %v953
    %v1310 = vpack.c.b16 %v958, %v954
    %v1311 = vpack.c.b16 %v959, %v955
    %v1312 = vpack.c.b16 %v960, %v956
    %v1313 = vpack.c.b16 %v965, %v961
    %v1314 = vpack.c.b16 %v966, %v962
    %v1315 = vpack.c.b16 %v967, %v963
    %v1316 = vpack.c.b16 %v968, %v964
    %v1317 = vpack.c.b16 %v973, %v969
    %v1318 = vpack.c.b16 %v974, %v970
    %v1319 = vpack.c.b16 %v975, %v971
    %v1320 = vpack.c.b16 %v976, %v972
    %v1321 = vpack.c.b16 %v981, %v977
    %v1322 = vpack.c.b16 %v982, %v978
    %v1323 = vpack.c.b16 %v983, %v979
    %v1324 = vpack.c.b16 %v984, %v980
    %v1325 = vpack.c.b16 %v989, %v985
    %v1326 = vpack.c.b16 %v990, %v986
    %v1327 = vpack.c.b16 %v991, %v987
    %v1328 = vpack.c.b16 %v992, %v988
    %v1329 = vpack.c.b16 %v997, %v993
    %v1330 = vpack.c.b16 %v998, %v994
    %v1331 = vpack.c.b16 %v999, %v995
    %v1332 = vpack.c.b16 %v1000, %v996
    %v1333 = vpack.c.b16 %v1005, %v1001
    %v1334 = vpack.c.b16 %v1006, %v1002
    %v1335 = vpack.c.b16 %v1007, %v1003
    %v1336 = vpack.c.b16 %v1008, %v1004
    %v1337 = vpack.c.b16 %v1013, %v1009
    %v1338 = vpack.c.b16 %v1014, %v1010
    %v1339 = vpack.c.b16 %v1015, %v1011
    %v1340 = vpack.c.b16 %v1016, %v1012
    %v1341 = vpack.c.b16 %v1021, %v1017
    %v1342 = vpack.c.b16 %v1022, %v1018
    %v1343 = vpack.c.b16 %v1023, %v1019
    %v1344 = vpack.c.b16 %v1024, %v1020
    %v1345 = vpack.c.b16 %v1029, %v1025
    %v1346 = vpack.c.b16 %v1030, %v1026
    %v1347 = vpack.c.b16 %v1031, %v1027
    %v1348 = vpack.c.b16 %v1032, %v1028
    %v1349 = vpack.c.b16 %v1037, %v1033
    %v1350 = vpack.c.b16 %v1038, %v1034
    %v1351 = vpack.c.b16 %v1039, %v1035
    %v1352 = vpack.c.b16 %v1040, %v1036
    %v1353 = vpack.c.b16 %v1045, %v1041
    %v1354 = vpack.c.b16 %v1046, %v1042
    %v1355 = vpack.c.b16 %v1047, %v1043
    %v1356 = vpack.c.b16 %v1048, %v1044
    %v1357 = vpack.c.b16 %v1053, %v1049
    %v1358 = vpack.c.b16 %v1054, %v1050
    %v1359 = vpack.c.b16 %v1055, %v1051
    %v1360 = vpack.c.b16 %v1056, %v1052
    %v1361 = vpack.c.b16 %v1061, %v1057
    %v1362 = vpack.c.b16 %v1062, %v1058
    %v1363 = vpack.c.b16 %v1063, %v1059
    %v1364 = vpack.c.b16 %v1064, %v1060
    %v1365 = vpack.c.b16 %v1069, %v1065
    %v1366 = vpack.c.b16 %v1070, %v1066
    %v1367 = vpack.c.b16 %v1071, %v1067
    %v1368 = vpack.c.b16 %v1072, %v1068
    %v1369 = vpack.c.b16 %v1077, %v1073
    %v1370 = vpack.c.b16 %v1078, %v1074
    %v1371 = vpack.c.b16 %v1079, %v1075
    %v1372 = vpack.c.b16 %v1080, %v1076
    %v1373 = vpack.c.b16 %v1085, %v1081
    %v1374 = vpack.c.b16 %v1086, %v1082
    %v1375 = vpack.c.b16 %v1087, %v1083
    %v1376 = vpack.c.b16 %v1088, %v1084
    %v1377 = vpack.c.b16 %v1093, %v1089
    %v1378 = vpack.c.b16 %v1094, %v1090
    %v1379 = vpack.c.b16 %v1095, %v1091
    %v1380 = vpack.c.b16 %v1096, %v1092
    %v1381 = vpack.c.b16 %v1101, %v1097
    %v1382 = vpack.c.b16 %v1102, %v1098
    %v1383 = vpack.c.b16 %v1103, %v1099
    %v1384 = vpack.c.b16 %v1104, %v1100
    %v1385 = vpack.c.b16 %v1109, %v1105
    %v1386 = vpack.c.b16 %v1110, %v1106
    %v1387 = vpack.c.b16 %v1111, %v1107
    %v1388 = vpack.c.b16 %v1112, %v1108
    %v1389 = vpack.c.b16 %v1117, %v1113
    %v1390 = vpack.c.b16 %v1118, %v1114
    %v1391 = vpack.c.b16 %v1119, %v1115
    %v1392 = vpack.c.b16 %v1120, %v1116
    %v1393 = vpack.c.b16 %v1125, %v1121
    %v1394 = vpack.c.b16 %v1126, %v1122
    %v1395 = vpack.c.b16 %v1127, %v1123
    %v1396 = vpack.c.b16 %v1128, %v1124
    %v1397 = vpack.c.b16 %v1133, %v1129
    %v1398 = vpack.c.b16 %v1134, %v1130
    %v1399 = vpack.c.b16 %v1135, %v1131
    %v1400 = vpack.c.b16 %v1136, %v1132
    %v1401 = vpack.c.b16 %v1141, %v1137
    %v1402 = vpack.c.b16 %v1142, %v1138
    %v1403 = vpack.c.b16 %v1143, %v1139
    %v1404 = vpack.c.b16 %v1144, %v1140
    %v1405 = vpack.c.b16 %v1149, %v1145
    %v1406 = vpack.c.b16 %v1150, %v1146
    %v1407 = vpack.c.b16 %v1151, %v1147
    %v1408 = vpack.c.b16 %v1152, %v1148
    %1665 = vmatprep.subr.bf16.mxu0 %v1154
    %1666 = vmatpush1.bf16.msra.mxu0 %v1153
    %1667 = vmatprep.subr.bf16.mxu0 %v1158
    %1668 = vmatpush1.bf16.msra.mxu0 %v1157
    %1669 = vmatprep.subr.bf16.mxu0 %v1162
    %1670 = vmatpush1.bf16.msra.mxu0 %v1161
    %1671 = vmatprep.subr.bf16.mxu0 %v1166
    %1672 = vmatpush1.bf16.msra.mxu0 %v1165
    %1673 = vmatprep.subr.bf16.mxu0 %v1170
    %1674 = vmatpush1.bf16.msra.mxu0 %v1169
    %1675 = vmatprep.subr.bf16.mxu0 %v1174
    %1676 = vmatpush1.bf16.msra.mxu0 %v1173
    %1677 = vmatprep.subr.bf16.mxu0 %v1178
    %1678 = vmatpush1.bf16.msra.mxu0 %v1177
    %1679 = vmatprep.subr.bf16.mxu0 %v1182
    %1680 = vmatpush1.bf16.msra.mxu0 %v1181
    %1681 = vmatprep.subr.bf16.mxu0 %v1186
    %1682 = vmatpush1.bf16.msra.mxu0 %v1185
    %1683 = vmatprep.subr.bf16.mxu0 %v1190
    %1684 = vmatpush1.bf16.msra.mxu0 %v1189
    %1685 = vmatprep.subr.bf16.mxu0 %v1194
    %1686 = vmatpush1.bf16.msra.mxu0 %v1193
    %1687 = vmatprep.subr.bf16.mxu0 %v1198
    %1688 = vmatpush1.bf16.msra.mxu0 %v1197
    %1689 = vmatprep.subr.bf16.mxu0 %v1202
    %1690 = vmatpush1.bf16.msra.mxu0 %v1201
    %1691 = vmatprep.subr.bf16.mxu0 %v1206
    %1692 = vmatpush1.bf16.msra.mxu0 %v1205
    %1693 = vmatprep.subr.bf16.mxu0 %v1210
    %1694 = vmatpush1.bf16.msra.mxu0 %v1209
    %1695 = vmatprep.subr.bf16.mxu0 %v1214
    %1696 = vmatpush1.bf16.msra.mxu0 %v1213
    %1697 = vmatprep.mubr.bf16.mxu0 %v100
    %1698 = vmatmul.mubr.bf16.gmra.mrb[0].mxu0 %v99
    %v1699 = vpop.f32.mrb[0].mxu0
    %v1700 = vadd.f32 %v368, %v1699
    %v1701 = vpop.f32.mrb[0].mxu0
    %v1702 = vadd.f32 %v372, %v1701
    %v1703 = vpop.f32.mrb[0].mxu0
    %v1704 = vadd.f32 %v368, %v1703
    %v1705 = vpop.f32.mrb[0].mxu0
    %v1706 = vadd.f32 %v372, %v1705
    %1707 = vdwg.mxu0
    %1708 = vmatprep.subr.bf16.mxu0 %v1218
    %1709 = vmatpush1.bf16.msra.mxu0 %v1217
    %1710 = vmatprep.subr.bf16.mxu0 %v1222
    %1711 = vmatpush1.bf16.msra.mxu0 %v1221
    %1712 = vmatprep.subr.bf16.mxu0 %v1226
    %1713 = vmatpush1.bf16.msra.mxu0 %v1225
    %1714 = vmatprep.subr.bf16.mxu0 %v1230
    %1715 = vmatpush1.bf16.msra.mxu0 %v1229
    %1716 = vmatprep.subr.bf16.mxu0 %v1234
    %1717 = vmatpush1.bf16.msra.mxu0 %v1233
    %1718 = vmatprep.subr.bf16.mxu0 %v1238
    %1719 = vmatpush1.bf16.msra.mxu0 %v1237
    %1720 = vmatprep.subr.bf16.mxu0 %v1242
    %1721 = vmatpush1.bf16.msra.mxu0 %v1241
    %1722 = vmatprep.subr.bf16.mxu0 %v1246
    %1723 = vmatpush1.bf16.msra.mxu0 %v1245
    %1724 = vmatprep.subr.bf16.mxu0 %v1250
    %1725 = vmatpush1.bf16.msra.mxu0 %v1249
    %1726 = vmatprep.subr.bf16.mxu0 %v1254
    %1727 = vmatpush1.bf16.msra.mxu0 %v1253
    %1728 = vmatprep.subr.bf16.mxu0 %v1258
    %1729 = vmatpush1.bf16.msra.mxu0 %v1257
    %1730 = vmatprep.subr.bf16.mxu0 %v1262
    %1731 = vmatpush1.bf16.msra.mxu0 %v1261
    %1732 = vmatprep.subr.bf16.mxu0 %v1266
    %1733 = vmatpush1.bf16.msra.mxu0 %v1265
    %1734 = vmatprep.subr.bf16.mxu0 %v1270
    %1735 = vmatpush1.bf16.msra.mxu0 %v1269
    %1736 = vmatprep.subr.bf16.mxu0 %v1274
    %1737 = vmatpush1.bf16.msra.mxu0 %v1273
    %1738 = vmatprep.subr.bf16.mxu0 %v1278
    %1739 = vmatpush1.bf16.msra.mxu0 %v1277
    %1740 = vmatprep.mubr.bf16.mxu0 %v102
    %1741 = vmatmul.mubr.bf16.gmra.mrb[0].mxu0 %v101
    %v1742 = vpop.f32.mrb[0].mxu0
    %v1743 = vadd.f32 %v1700, %v1742
    %v1744 = vpop.f32.mrb[0].mxu0
    %v1745 = vadd.f32 %v1702, %v1744
    %v1746 = vpop.f32.mrb[0].mxu0
    %v1747 = vadd.f32 %v1704, %v1746
    %v1748 = vpop.f32.mrb[0].mxu0
    %v1749 = vadd.f32 %v1706, %v1748
    %1750 = vdwg.mxu0
    %1751 = vmatprep.subr.bf16.mxu0 %v1282
    %1752 = vmatpush1.bf16.msra.mxu0 %v1281
    %1753 = vmatprep.subr.bf16.mxu0 %v1286
    %1754 = vmatpush1.bf16.msra.mxu0 %v1285
    %1755 = vmatprep.subr.bf16.mxu0 %v1290
    %1756 = vmatpush1.bf16.msra.mxu0 %v1289
    %1757 = vmatprep.subr.bf16.mxu0 %v1294
    %1758 = vmatpush1.bf16.msra.mxu0 %v1293
    %1759 = vmatprep.subr.bf16.mxu0 %v1298
    %1760 = vmatpush1.bf16.msra.mxu0 %v1297
    %1761 = vmatprep.subr.bf16.mxu0 %v1302
    %1762 = vmatpush1.bf16.msra.mxu0 %v1301
    %1763 = vmatprep.subr.bf16.mxu0 %v1306
    %1764 = vmatpush1.bf16.msra.mxu0 %v1305
    %1765 = vmatprep.subr.bf16.mxu0 %v1310
    %1766 = vmatpush1.bf16.msra.mxu0 %v1309
    %1767 = vmatprep.subr.bf16.mxu0 %v1314
    %1768 = vmatpush1.bf16.msra.mxu0 %v1313
    %1769 = vmatprep.subr.bf16.mxu0 %v1318
    %1770 = vmatpush1.bf16.msra.mxu0 %v1317
    %1771 = vmatprep.subr.bf16.mxu0 %v1322
    %1772 = vmatpush1.bf16.msra.mxu0 %v1321
    %1773 = vmatprep.subr.bf16.mxu0 %v1326
    %1774 = vmatpush1.bf16.msra.mxu0 %v1325
    %1775 = vmatprep.subr.bf16.mxu0 %v1330
    %1776 = vmatpush1.bf16.msra.mxu0 %v1329
    %1777 = vmatprep.subr.bf16.mxu0 %v1334
    %1778 = vmatpush1.bf16.msra.mxu0 %v1333
    %1779 = vmatprep.subr.bf16.mxu0 %v1338
    %1780 = vmatpush1.bf16.msra.mxu0 %v1337
    %1781 = vmatprep.subr.bf16.mxu0 %v1342
    %1782 = vmatpush1.bf16.msra.mxu0 %v1341
    %1783 = vmatprep.mubr.bf16.mxu0 %v104
    %1784 = vmatmul.mubr.bf16.gmra.mrb[0].mxu0 %v103
    %v1785 = vpop.f32.mrb[0].mxu0
    %v1786 = vadd.f32 %v1743, %v1785
    %v1787 = vpop.f32.mrb[0].mxu0
    %v1788 = vadd.f32 %v1745, %v1787
    %v1789 = vpop.f32.mrb[0].mxu0
    %v1790 = vadd.f32 %v1747, %v1789
    %v1791 = vpop.f32.mrb[0].mxu0
    %v1792 = vadd.f32 %v1749, %v1791
    %1793 = vdwg.mxu0
    %1794 = vmatprep.subr.bf16.mxu0 %v1346
    %1795 = vmatpush1.bf16.msra.mxu0 %v1345
    %1796 = vmatprep.subr.bf16.mxu0 %v1350
    %1797 = vmatpush1.bf16.msra.mxu0 %v1349
    %1798 = vmatprep.subr.bf16.mxu0 %v1354
    %1799 = vmatpush1.bf16.msra.mxu0 %v1353
    %1800 = vmatprep.subr.bf16.mxu0 %v1358
    %1801 = vmatpush1.bf16.msra.mxu0 %v1357
    %1802 = vmatprep.subr.bf16.mxu0 %v1362
    %1803 = vmatpush1.bf16.msra.mxu0 %v1361
    %1804 = vmatprep.subr.bf16.mxu0 %v1366
    %1805 = vmatpush1.bf16.msra.mxu0 %v1365
    %1806 = vmatprep.subr.bf16.mxu0 %v1370
    %1807 = vmatpush1.bf16.msra.mxu0 %v1369
    %1808 = vmatprep.subr.bf16.mxu0 %v1374
    %1809 = vmatpush1.bf16.msra.mxu0 %v1373
    %1810 = vmatprep.subr.bf16.mxu0 %v1378
    %1811 = vmatpush1.bf16.msra.mxu0 %v1377
    %1812 = vmatprep.subr.bf16.mxu0 %v1382
    %1813 = vmatpush1.bf16.msra.mxu0 %v1381
    %1814 = vmatprep.subr.bf16.mxu0 %v1386
    %1815 = vmatpush1.bf16.msra.mxu0 %v1385
    %1816 = vmatprep.subr.bf16.mxu0 %v1390
    %1817 = vmatpush1.bf16.msra.mxu0 %v1389
    %1818 = vmatprep.subr.bf16.mxu0 %v1394
    %1819 = vmatpush1.bf16.msra.mxu0 %v1393
    %1820 = vmatprep.subr.bf16.mxu0 %v1398
    %1821 = vmatpush1.bf16.msra.mxu0 %v1397
    %1822 = vmatprep.subr.bf16.mxu0 %v1402
    %1823 = vmatpush1.bf16.msra.mxu0 %v1401
    %1824 = vmatprep.subr.bf16.mxu0 %v1406
    %1825 = vmatpush1.bf16.msra.mxu0 %v1405
    %1826 = vmatprep.mubr.bf16.mxu0 %v106
    %1827 = vmatmul.mubr.bf16.gmra.mrb[0].mxu0 %v105
    %v1828 = vpop.f32.mrb[0].mxu0
    %v1829 = vadd.f32 %v1786, %v1828
    %v1830 = vpop.f32.mrb[0].mxu0
    %v1831 = vadd.f32 %v1788, %v1830
    %v1832 = vpop.f32.mrb[0].mxu0
    %v1833 = vadd.f32 %v1790, %v1832
    %v1834 = vpop.f32.mrb[0].mxu0
    %v1835 = vadd.f32 %v1792, %v1834
    %1836 = vdwg.mxu0
    %1837 = vmatprep.subr.bf16.mxu0 %v1156
    %1838 = vmatpush1.bf16.msra.mxu0 %v1155
    %1839 = vmatprep.subr.bf16.mxu0 %v1160
    %1840 = vmatpush1.bf16.msra.mxu0 %v1159
    %1841 = vmatprep.subr.bf16.mxu0 %v1164
    %1842 = vmatpush1.bf16.msra.mxu0 %v1163
    %1843 = vmatprep.subr.bf16.mxu0 %v1168
    %1844 = vmatpush1.bf16.msra.mxu0 %v1167
    %1845 = vmatprep.subr.bf16.mxu0 %v1172
    %1846 = vmatpush1.bf16.msra.mxu0 %v1171
    %1847 = vmatprep.subr.bf16.mxu0 %v1176
    %1848 = vmatpush1.bf16.msra.mxu0 %v1175
    %1849 = vmatprep.subr.bf16.mxu0 %v1180
    %1850 = vmatpush1.bf16.msra.mxu0 %v1179
    %1851 = vmatprep.subr.bf16.mxu0 %v1184
    %1852 = vmatpush1.bf16.msra.mxu0 %v1183
    %1853 = vmatprep.subr.bf16.mxu0 %v1188
    %1854 = vmatpush1.bf16.msra.mxu0 %v1187
    %1855 = vmatprep.subr.bf16.mxu0 %v1192
    %1856 = vmatpush1.bf16.msra.mxu0 %v1191
    %1857 = vmatprep.subr.bf16.mxu0 %v1196
    %1858 = vmatpush1.bf16.msra.mxu0 %v1195
    %1859 = vmatprep.subr.bf16.mxu0 %v1200
    %1860 = vmatpush1.bf16.msra.mxu0 %v1199
    %1861 = vmatprep.subr.bf16.mxu0 %v1204
    %1862 = vmatpush1.bf16.msra.mxu0 %v1203
    %1863 = vmatprep.subr.bf16.mxu0 %v1208
    %1864 = vmatpush1.bf16.msra.mxu0 %v1207
    %1865 = vmatprep.subr.bf16.mxu0 %v1212
    %1866 = vmatpush1.bf16.msra.mxu0 %v1211
    %1867 = vmatprep.subr.bf16.mxu0 %v1216
    %1868 = vmatpush1.bf16.msra.mxu0 %v1215
    %1869 = vmatprep.mubr.bf16.mxu0 %v100
    %1870 = vmatmul.mubr.bf16.gmra.mrb[0].mxu0 %v99
    %v1871 = vpop.f32.mrb[0].mxu0
    %v1872 = vadd.f32 %v376, %v1871
    %v1873 = vpop.f32.mrb[0].mxu0
    %v1874 = vadd.f32 %v380, %v1873
    %v1875 = vpop.f32.mrb[0].mxu0
    %v1876 = vadd.f32 %v376, %v1875
    %v1877 = vpop.f32.mrb[0].mxu0
    %v1878 = vadd.f32 %v380, %v1877
    %1879 = vdwg.mxu0
    %1880 = vmatprep.subr.bf16.mxu0 %v1220
    %1881 = vmatpush1.bf16.msra.mxu0 %v1219
    %1882 = vmatprep.subr.bf16.mxu0 %v1224
    %1883 = vmatpush1.bf16.msra.mxu0 %v1223
    %1884 = vmatprep.subr.bf16.mxu0 %v1228
    %1885 = vmatpush1.bf16.msra.mxu0 %v1227
    %1886 = vmatprep.subr.bf16.mxu0 %v1232
    %1887 = vmatpush1.bf16.msra.mxu0 %v1231
    %1888 = vmatprep.subr.bf16.mxu0 %v1236
    %1889 = vmatpush1.bf16.msra.mxu0 %v1235
    %1890 = vmatprep.subr.bf16.mxu0 %v1240
    %1891 = vmatpush1.bf16.msra.mxu0 %v1239
    %1892 = vmatprep.subr.bf16.mxu0 %v1244
    %1893 = vmatpush1.bf16.msra.mxu0 %v1243
    %1894 = vmatprep.subr.bf16.mxu0 %v1248
    %1895 = vmatpush1.bf16.msra.mxu0 %v1247
    %1896 = vmatprep.subr.bf16.mxu0 %v1252
    %1897 = vmatpush1.bf16.msra.mxu0 %v1251
    %1898 = vmatprep.subr.bf16.mxu0 %v1256
    %1899 = vmatpush1.bf16.msra.mxu0 %v1255
    %1900 = vmatprep.subr.bf16.mxu0 %v1260
    %1901 = vmatpush1.bf16.msra.mxu0 %v1259
    %1902 = vmatprep.subr.bf16.mxu0 %v1264
    %1903 = vmatpush1.bf16.msra.mxu0 %v1263
    %1904 = vmatprep.subr.bf16.mxu0 %v1268
    %1905 = vmatpush1.bf16.msra.mxu0 %v1267
    %1906 = vmatprep.subr.bf16.mxu0 %v1272
    %1907 = vmatpush1.bf16.msra.mxu0 %v1271
    %1908 = vmatprep.subr.bf16.mxu0 %v1276
    %1909 = vmatpush1.bf16.msra.mxu0 %v1275
    %1910 = vmatprep.subr.bf16.mxu0 %v1280
    %1911 = vmatpush1.bf16.msra.mxu0 %v1279
    %1912 = vmatprep.mubr.bf16.mxu0 %v102
    %1913 = vmatmul.mubr.bf16.gmra.mrb[0].mxu0 %v101
    %v1914 = vpop.f32.mrb[0].mxu0
    %v1915 = vadd.f32 %v1872, %v1914
    %v1916 = vpop.f32.mrb[0].mxu0
    %v1917 = vadd.f32 %v1874, %v1916
    %v1918 = vpop.f32.mrb[0].mxu0
    %v1919 = vadd.f32 %v1876, %v1918
    %v1920 = vpop.f32.mrb[0].mxu0
    %v1921 = vadd.f32 %v1878, %v1920
    %1922 = vdwg.mxu0
    %1923 = vmatprep.subr.bf16.mxu0 %v1284
    %1924 = vmatpush1.bf16.msra.mxu0 %v1283
    %1925 = vmatprep.subr.bf16.mxu0 %v1288
    %1926 = vmatpush1.bf16.msra.mxu0 %v1287
    %1927 = vmatprep.subr.bf16.mxu0 %v1292
    %1928 = vmatpush1.bf16.msra.mxu0 %v1291
    %1929 = vmatprep.subr.bf16.mxu0 %v1296
    %1930 = vmatpush1.bf16.msra.mxu0 %v1295
    %1931 = vmatprep.subr.bf16.mxu0 %v1300
    %1932 = vmatpush1.bf16.msra.mxu0 %v1299
    %1933 = vmatprep.subr.bf16.mxu0 %v1304
    %1934 = vmatpush1.bf16.msra.mxu0 %v1303
    %1935 = vmatprep.subr.bf16.mxu0 %v1308
    %1936 = vmatpush1.bf16.msra.mxu0 %v1307
    %1937 = vmatprep.subr.bf16.mxu0 %v1312
    %1938 = vmatpush1.bf16.msra.mxu0 %v1311
    %1939 = vmatprep.subr.bf16.mxu0 %v1316
    %1940 = vmatpush1.bf16.msra.mxu0 %v1315
    %1941 = vmatprep.subr.bf16.mxu0 %v1320
    %1942 = vmatpush1.bf16.msra.mxu0 %v1319
    %1943 = vmatprep.subr.bf16.mxu0 %v1324
    %1944 = vmatpush1.bf16.msra.mxu0 %v1323
    %1945 = vmatprep.subr.bf16.mxu0 %v1328
    %1946 = vmatpush1.bf16.msra.mxu0 %v1327
    %1947 = vmatprep.subr.bf16.mxu0 %v1332
    %1948 = vmatpush1.bf16.msra.mxu0 %v1331
    %1949 = vmatprep.subr.bf16.mxu0 %v1336
    %1950 = vmatpush1.bf16.msra.mxu0 %v1335
    %1951 = vmatprep.subr.bf16.mxu0 %v1340
    %1952 = vmatpush1.bf16.msra.mxu0 %v1339
    %1953 = vmatprep.subr.bf16.mxu0 %v1344
    %1954 = vmatpush1.bf16.msra.mxu0 %v1343
    %1955 = vmatprep.mubr.bf16.mxu0 %v104
    %1956 = vmatmul.mubr.bf16.gmra.mrb[0].mxu0 %v103
    %v1957 = vpop.f32.mrb[0].mxu0
    %v1958 = vadd.f32 %v1915, %v1957
    %v1959 = vpop.f32.mrb[0].mxu0
    %v1960 = vadd.f32 %v1917, %v1959
    %v1961 = vpop.f32.mrb[0].mxu0
    %v1962 = vadd.f32 %v1919, %v1961
    %v1963 = vpop.f32.mrb[0].mxu0
    %v1964 = vadd.f32 %v1921, %v1963
    %1965 = vdwg.mxu0
    %1966 = vmatprep.subr.bf16.mxu0 %v1348
    %1967 = vmatpush1.bf16.msra.mxu0 %v1347
    %1968 = vmatprep.subr.bf16.mxu0 %v1352
    %1969 = vmatpush1.bf16.msra.mxu0 %v1351
    %1970 = vmatprep.subr.bf16.mxu0 %v1356
    %1971 = vmatpush1.bf16.msra.mxu0 %v1355
    %1972 = vmatprep.subr.bf16.mxu0 %v1360
    %1973 = vmatpush1.bf16.msra.mxu0 %v1359
    %1974 = vmatprep.subr.bf16.mxu0 %v1364
    %1975 = vmatpush1.bf16.msra.mxu0 %v1363
    %1976 = vmatprep.subr.bf16.mxu0 %v1368
    %1977 = vmatpush1.bf16.msra.mxu0 %v1367
    %1978 = vmatprep.subr.bf16.mxu0 %v1372
    %1979 = vmatpush1.bf16.msra.mxu0 %v1371
    %1980 = vmatprep.subr.bf16.mxu0 %v1376
    %1981 = vmatpush1.bf16.msra.mxu0 %v1375
    %1982 = vmatprep.subr.bf16.mxu0 %v1380
    %1983 = vmatpush1.bf16.msra.mxu0 %v1379
    %1984 = vmatprep.subr.bf16.mxu0 %v1384
    %1985 = vmatpush1.bf16.msra.mxu0 %v1383
    %1986 = vmatprep.subr.bf16.mxu0 %v1388
    %1987 = vmatpush1.bf16.msra.mxu0 %v1387
    %1988 = vmatprep.subr.bf16.mxu0 %v1392
    %1989 = vmatpush1.bf16.msra.mxu0 %v1391
    %1990 = vmatprep.subr.bf16.mxu0 %v1396
    %1991 = vmatpush1.bf16.msra.mxu0 %v1395
    %1992 = vmatprep.subr.bf16.mxu0 %v1400
    %1993 = vmatpush1.bf16.msra.mxu0 %v1399
    %1994 = vmatprep.subr.bf16.mxu0 %v1404
    %1995 = vmatpush1.bf16.msra.mxu0 %v1403
    %1996 = vmatprep.subr.bf16.mxu0 %v1408
    %1997 = vmatpush1.bf16.msra.mxu0 %v1407
    %1998 = vmatprep.mubr.bf16.mxu0 %v106
    %1999 = vmatmul.mubr.bf16.gmra.mrb[0].mxu0 %v105
    %v2000 = vpop.f32.mrb[0].mxu0
    %v2001 = vadd.f32 %v1958, %v2000
    %v2002 = vpop.f32.mrb[0].mxu0
    %v2003 = vadd.f32 %v1960, %v2002
    %v2004 = vpop.f32.mrb[0].mxu0
    %v2005 = vadd.f32 %v1962, %v2004
    %v2006 = vpop.f32.mrb[0].mxu0
    %v2007 = vadd.f32 %v1964, %v2006
    %2008 = vdwg.mxu0
    %v2009 = vmax.f32 %v1829, 0.0
    %v2010 = vmax.f32 %v1831, 0.0
    %v2011 = vmax.f32 %v2001, 0.0
    %v2012 = vmax.f32 %v2003, 0.0
    %v2013 = vmax.f32 %v1833, 0.0
    %v2014 = vmax.f32 %v1835, 0.0
    %v2015 = vmax.f32 %v2005, 0.0
    %v2016 = vmax.f32 %v2007, 0.0
    %v2017 = vpack.c.bf16 %v2013, %v2009
    %v2018 = vpack.c.bf16 %v2014, %v2010
    %v2019 = vpack.c.bf16 %v2015, %v2011
    %v2020 = vpack.c.bf16 %v2016, %v2012
    %v2021 = vld [vmem:[#allocation7] sm:$0xff]
    %v2022 = vld [vmem:[#allocation7 + $0x8] sm:$0xff]
    %v2023 = vld [vmem:[#allocation7 + $0x10] sm:$0xff]
    %v2024 = vld [vmem:[#allocation7 + $0x18] sm:$0xff]
    %v2025 = vld [vmem:[#allocation7 + $0x20] sm:$0xff]
    %v2026 = vld [vmem:[#allocation7 + $0x28] sm:$0xff]
    %v2027 = vld [vmem:[#allocation7 + $0x30] sm:$0xff]
    %v2028 = vld [vmem:[#allocation7 + $0x38] sm:$0xff]
    %v2029 = vld [vmem:[#allocation7 + $0x40] sm:$0xff]
    %v2030 = vld [vmem:[#allocation7 + $0x48] sm:$0xff]
    %v2031 = vld [vmem:[#allocation7 + $0x50] sm:$0xff]
    %v2032 = vld [vmem:[#allocation7 + $0x58] sm:$0xff]
    %v2033 = vld [vmem:[#allocation7 + $0x60] sm:$0xff]
    %v2034 = vld [vmem:[#allocation7 + $0x68] sm:$0xff]
    %v2035 = vld [vmem:[#allocation7 + $0x70] sm:$0xff]
    %v2036 = vld [vmem:[#allocation7 + $0x78] sm:$0xff]
    %v2037 = vld [vmem:[#allocation7 + $0x80] sm:$0xff]
    %v2038 = vld [vmem:[#allocation7 + $0x88] sm:$0xff]
    %v2039 = vld [vmem:[#allocation7 + $0x90] sm:$0xff]
    %v2040 = vld [vmem:[#allocation7 + $0x98] sm:$0xff]
    %v2041 = vld [vmem:[#allocation7 + $0xa0] sm:$0xff]
    %v2042 = vld [vmem:[#allocation7 + $0xa8] sm:$0xff]
    %v2043 = vld [vmem:[#allocation7 + $0xb0] sm:$0xff]
    %v2044 = vld [vmem:[#allocation7 + $0xb8] sm:$0xff]
    %v2045 = vld [vmem:[#allocation7 + $0xc0] sm:$0xff]
    %v2046 = vld [vmem:[#allocation7 + $0xc8] sm:$0xff]
    %v2047 = vld [vmem:[#allocation7 + $0xd0] sm:$0xff]
    %v2048 = vld [vmem:[#allocation7 + $0xd8] sm:$0xff]
    %v2049 = vld [vmem:[#allocation7 + $0xe0] sm:$0xff]
    %v2050 = vld [vmem:[#allocation7 + $0xe8] sm:$0xff]
    %v2051 = vld [vmem:[#allocation7 + $0xf0] sm:$0xff]
    %v2052 = vld [vmem:[#allocation7 + $0xf8] sm:$0xff]
    %v2053 = vld [vmem:[#allocation7 + $0x100] sm:$0xff]
    %v2054 = vld [vmem:[#allocation7 + $0x108] sm:$0xff]
    %v2055 = vld [vmem:[#allocation7 + $0x110] sm:$0xff]
    %v2056 = vld [vmem:[#allocation7 + $0x118] sm:$0xff]
    %v2057 = vld [vmem:[#allocation7 + $0x120] sm:$0xff]
    %v2058 = vld [vmem:[#allocation7 + $0x128] sm:$0xff]
    %v2059 = vld [vmem:[#allocation7 + $0x130] sm:$0xff]
    %v2060 = vld [vmem:[#allocation7 + $0x138] sm:$0xff]
    %v2061 = vld [vmem:[#allocation7 + $0x140] sm:$0xff]
    %v2062 = vld [vmem:[#allocation7 + $0x148] sm:$0xff]
    %v2063 = vld [vmem:[#allocation7 + $0x150] sm:$0xff]
    %v2064 = vld [vmem:[#allocation7 + $0x158] sm:$0xff]
    %v2065 = vld [vmem:[#allocation7 + $0x160] sm:$0xff]
    %v2066 = vld [vmem:[#allocation7 + $0x168] sm:$0xff]
    %v2067 = vld [vmem:[#allocation7 + $0x170] sm:$0xff]
    %v2068 = vld [vmem:[#allocation7 + $0x178] sm:$0xff]
    %v2069 = vld [vmem:[#allocation7 + $0x180] sm:$0xff]
    %v2070 = vld [vmem:[#allocation7 + $0x188] sm:$0xff]
    %v2071 = vld [vmem:[#allocation7 + $0x190] sm:$0xff]
    %v2072 = vld [vmem:[#allocation7 + $0x198] sm:$0xff]
    %v2073 = vld [vmem:[#allocation7 + $0x1a0] sm:$0xff]
    %v2074 = vld [vmem:[#allocation7 + $0x1a8] sm:$0xff]
    %v2075 = vld [vmem:[#allocation7 + $0x1b0] sm:$0xff]
    %v2076 = vld [vmem:[#allocation7 + $0x1b8] sm:$0xff]
    %v2077 = vld [vmem:[#allocation7 + $0x1c0] sm:$0xff]
    %v2078 = vld [vmem:[#allocation7 + $0x1c8] sm:$0xff]
    %v2079 = vld [vmem:[#allocation7 + $0x1d0] sm:$0xff]
    %v2080 = vld [vmem:[#allocation7 + $0x1d8] sm:$0xff]
    %v2081 = vld [vmem:[#allocation7 + $0x1e0] sm:$0xff]
    %v2082 = vld [vmem:[#allocation7 + $0x1e8] sm:$0xff]
    %v2083 = vld [vmem:[#allocation7 + $0x1f0] sm:$0xff]
    %v2084 = vld [vmem:[#allocation7 + $0x1f8] sm:$0xff]
    %v2085 = vld [vmem:[%s4] sm:$0x3]
    %v2087 = vlaneseq
    %v2088 = vshrl.u32 %v2087, 7
    %v2089 = vsub.s32 0, %v2088
    %v2090 = vrot.slane %v2085, %v2089
    %v2091 = vlaneseq
    %v2092 = vshrl.u32 %v2091, 7
    %v2093 = vsub.s32 1, %v2092
    %v2094 = vrot.slane %v2085, %v2093
    %v2161 = vunpack.c.l.b16 %v2021
    %v2162 = vunpack.c.h.b16 %v2021
    %v2163 = vunpack.c.l.b16 %v2022
    %v2164 = vunpack.c.h.b16 %v2022
    %v2165 = vunpack.c.l.b16 %v2023
    %v2166 = vunpack.c.h.b16 %v2023
    %v2167 = vunpack.c.l.b16 %v2024
    %v2168 = vunpack.c.h.b16 %v2024
    %v2169 = vunpack.c.l.b16 %v2025
    %v2170 = vunpack.c.h.b16 %v2025
    %v2171 = vunpack.c.l.b16 %v2026
    %v2172 = vunpack.c.h.b16 %v2026
    %v2173 = vunpack.c.l.b16 %v2027
    %v2174 = vunpack.c.h.b16 %v2027
    %v2175 = vunpack.c.l.b16 %v2028
    %v2176 = vunpack.c.h.b16 %v2028
    %v2177 = vunpack.c.l.b16 %v2029
    %v2178 = vunpack.c.h.b16 %v2029
    %v2179 = vunpack.c.l.b16 %v2030
    %v2180 = vunpack.c.h.b16 %v2030
    %v2181 = vunpack.c.l.b16 %v2031
    %v2182 = vunpack.c.h.b16 %v2031
    %v2183 = vunpack.c.l.b16 %v2032
    %v2184 = vunpack.c.h.b16 %v2032
    %v2185 = vunpack.c.l.b16 %v2033
    %v2186 = vunpack.c.h.b16 %v2033
    %v2187 = vunpack.c.l.b16 %v2034
    %v2188 = vunpack.c.h.b16 %v2034
    %v2189 = vunpack.c.l.b16 %v2035
    %v2190 = vunpack.c.h.b16 %v2035
    %v2191 = vunpack.c.l.b16 %v2036
    %v2192 = vunpack.c.h.b16 %v2036
    %v2193 = vunpack.c.l.b16 %v2037
    %v2194 = vunpack.c.h.b16 %v2037
    %v2195 = vunpack.c.l.b16 %v2038
    %v2196 = vunpack.c.h.b16 %v2038
    %v2197 = vunpack.c.l.b16 %v2039
    %v2198 = vunpack.c.h.b16 %v2039
    %v2199 = vunpack.c.l.b16 %v2040
    %v2200 = vunpack.c.h.b16 %v2040
    %v2201 = vunpack.c.l.b16 %v2041
    %v2202 = vunpack.c.h.b16 %v2041
    %v2203 = vunpack.c.l.b16 %v2042
    %v2204 = vunpack.c.h.b16 %v2042
    %v2205 = vunpack.c.l.b16 %v2043
    %v2206 = vunpack.c.h.b16 %v2043
    %v2207 = vunpack.c.l.b16 %v2044
    %v2208 = vunpack.c.h.b16 %v2044
    %v2209 = vunpack.c.l.b16 %v2045
    %v2210 = vunpack.c.h.b16 %v2045
    %v2211 = vunpack.c.l.b16 %v2046
    %v2212 = vunpack.c.h.b16 %v2046
    %v2213 = vunpack.c.l.b16 %v2047
    %v2214 = vunpack.c.h.b16 %v2047
    %v2215 = vunpack.c.l.b16 %v2048
    %v2216 = vunpack.c.h.b16 %v2048
    %v2217 = vunpack.c.l.b16 %v2049
    %v2218 = vunpack.c.h.b16 %v2049
    %v2219 = vunpack.c.l.b16 %v2050
    %v2220 = vunpack.c.h.b16 %v2050
    %v2221 = vunpack.c.l.b16 %v2051
    %v2222 = vunpack.c.h.b16 %v2051
    %v2223 = vunpack.c.l.b16 %v2052
    %v2224 = vunpack.c.h.b16 %v2052
    %v2225 = vunpack.c.l.b16 %v2053
    %v2226 = vunpack.c.h.b16 %v2053
    %v2227 = vunpack.c.l.b16 %v2054
    %v2228 = vunpack.c.h.b16 %v2054
    %v2229 = vunpack.c.l.b16 %v2055
    %v2230 = vunpack.c.h.b16 %v2055
    %v2231 = vunpack.c.l.b16 %v2056
    %v2232 = vunpack.c.h.b16 %v2056
    %v2233 = vunpack.c.l.b16 %v2057
    %v2234 = vunpack.c.h.b16 %v2057
    %v2235 = vunpack.c.l.b16 %v2058
    %v2236 = vunpack.c.h.b16 %v2058
    %v2237 = vunpack.c.l.b16 %v2059
    %v2238 = vunpack.c.h.b16 %v2059
    %v2239 = vunpack.c.l.b16 %v2060
    %v2240 = vunpack.c.h.b16 %v2060
    %v2241 = vunpack.c.l.b16 %v2061
    %v2242 = vunpack.c.h.b16 %v2061
    %v2243 = vunpack.c.l.b16 %v2062
    %v2244 = vunpack.c.h.b16 %v2062
    %v2245 = vunpack.c.l.b16 %v2063
    %v2246 = vunpack.c.h.b16 %v2063
    %v2247 = vunpack.c.l.b16 %v2064
    %v2248 = vunpack.c.h.b16 %v2064
    %v2249 = vunpack.c.l.b16 %v2065
    %v2250 = vunpack.c.h.b16 %v2065
    %v2251 = vunpack.c.l.b16 %v2066
    %v2252 = vunpack.c.h.b16 %v2066
    %v2253 = vunpack.c.l.b16 %v2067
    %v2254 = vunpack.c.h.b16 %v2067
    %v2255 = vunpack.c.l.b16 %v2068
    %v2256 = vunpack.c.h.b16 %v2068
    %v2257 = vunpack.c.l.b16 %v2069
    %v2258 = vunpack.c.h.b16 %v2069
    %v2259 = vunpack.c.l.b16 %v2070
    %v2260 = vunpack.c.h.b16 %v2070
    %v2261 = vunpack.c.l.b16 %v2071
    %v2262 = vunpack.c.h.b16 %v2071
    %v2263 = vunpack.c.l.b16 %v2072
    %v2264 = vunpack.c.h.b16 %v2072
    %v2265 = vunpack.c.l.b16 %v2073
    %v2266 = vunpack.c.h.b16 %v2073
    %v2267 = vunpack.c.l.b16 %v2074
    %v2268 = vunpack.c.h.b16 %v2074
    %v2269 = vunpack.c.l.b16 %v2075
    %v2270 = vunpack.c.h.b16 %v2075
    %v2271 = vunpack.c.l.b16 %v2076
    %v2272 = vunpack.c.h.b16 %v2076
    %v2273 = vunpack.c.l.b16 %v2077
    %v2274 = vunpack.c.h.b16 %v2077
    %v2275 = vunpack.c.l.b16 %v2078
    %v2276 = vunpack.c.h.b16 %v2078
    %v2277 = vunpack.c.l.b16 %v2079
    %v2278 = vunpack.c.h.b16 %v2079
    %v2279 = vunpack.c.l.b16 %v2080
    %v2280 = vunpack.c.h.b16 %v2080
    %v2281 = vunpack.c.l.b16 %v2081
    %v2282 = vunpack.c.h.b16 %v2081
    %v2283 = vunpack.c.l.b16 %v2082
    %v2284 = vunpack.c.h.b16 %v2082
    %v2285 = vunpack.c.l.b16 %v2083
    %v2286 = vunpack.c.h.b16 %v2083
    %v2287 = vunpack.c.l.b16 %v2084
    %v2288 = vunpack.c.h.b16 %v2084
    %v2289 = vpack.c.b16 %v2163, %v2161
    %v2290 = vpack.c.b16 %v2164, %v2162
    %v2291 = vpack.c.b16 %v2167, %v2165
    %v2292 = vpack.c.b16 %v2168, %v2166
    %v2293 = vpack.c.b16 %v2171, %v2169
    %v2294 = vpack.c.b16 %v2172, %v2170
    %v2295 = vpack.c.b16 %v2175, %v2173
    %v2296 = vpack.c.b16 %v2176, %v2174
    %v2297 = vpack.c.b16 %v2179, %v2177
    %v2298 = vpack.c.b16 %v2180, %v2178
    %v2299 = vpack.c.b16 %v2183, %v2181
    %v2300 = vpack.c.b16 %v2184, %v2182
    %v2301 = vpack.c.b16 %v2187, %v2185
    %v2302 = vpack.c.b16 %v2188, %v2186
    %v2303 = vpack.c.b16 %v2191, %v2189
    %v2304 = vpack.c.b16 %v2192, %v2190
    %v2305 = vpack.c.b16 %v2195, %v2193
    %v2306 = vpack.c.b16 %v2196, %v2194
    %v2307 = vpack.c.b16 %v2199, %v2197
    %v2308 = vpack.c.b16 %v2200, %v2198
    %v2309 = vpack.c.b16 %v2203, %v2201
    %v2310 = vpack.c.b16 %v2204, %v2202
    %v2311 = vpack.c.b16 %v2207, %v2205
    %v2312 = vpack.c.b16 %v2208, %v2206
    %v2313 = vpack.c.b16 %v2211, %v2209
    %v2314 = vpack.c.b16 %v2212, %v2210
    %v2315 = vpack.c.b16 %v2215, %v2213
    %v2316 = vpack.c.b16 %v2216, %v2214
    %v2317 = vpack.c.b16 %v2219, %v2217
    %v2318 = vpack.c.b16 %v2220, %v2218
    %v2319 = vpack.c.b16 %v2223, %v2221
    %v2320 = vpack.c.b16 %v2224, %v2222
    %v2321 = vpack.c.b16 %v2227, %v2225
    %v2322 = vpack.c.b16 %v2228, %v2226
    %v2323 = vpack.c.b16 %v2231, %v2229
    %v2324 = vpack.c.b16 %v2232, %v2230
    %v2325 = vpack.c.b16 %v2235, %v2233
    %v2326 = vpack.c.b16 %v2236, %v2234
    %v2327 = vpack.c.b16 %v2239, %v2237
    %v2328 = vpack.c.b16 %v2240, %v2238
    %v2329 = vpack.c.b16 %v2243, %v2241
    %v2330 = vpack.c.b16 %v2244, %v2242
    %v2331 = vpack.c.b16 %v2247, %v2245
    %v2332 = vpack.c.b16 %v2248, %v2246
    %v2333 = vpack.c.b16 %v2251, %v2249
    %v2334 = vpack.c.b16 %v2252, %v2250
    %v2335 = vpack.c.b16 %v2255, %v2253
    %v2336 = vpack.c.b16 %v2256, %v2254
    %v2337 = vpack.c.b16 %v2259, %v2257
    %v2338 = vpack.c.b16 %v2260, %v2258
    %v2339 = vpack.c.b16 %v2263, %v2261
    %v2340 = vpack.c.b16 %v2264, %v2262
    %v2341 = vpack.c.b16 %v2267, %v2265
    %v2342 = vpack.c.b16 %v2268, %v2266
    %v2343 = vpack.c.b16 %v2271, %v2269
    %v2344 = vpack.c.b16 %v2272, %v2270
    %v2345 = vpack.c.b16 %v2275, %v2273
    %v2346 = vpack.c.b16 %v2276, %v2274
    %v2347 = vpack.c.b16 %v2279, %v2277
    %v2348 = vpack.c.b16 %v2280, %v2278
    %v2349 = vpack.c.b16 %v2283, %v2281
    %v2350 = vpack.c.b16 %v2284, %v2282
    %v2351 = vpack.c.b16 %v2287, %v2285
    %v2352 = vpack.c.b16 %v2288, %v2286
    %2417 = vmatprep.subr.bf16.mxu0 %v2290
    %2418 = vmatpush1.bf16.msra.mxu0 %v2289
    %2419 = vmatprep.subr.bf16.mxu0 %v2292
    %2420 = vmatpush1.bf16.msra.mxu0 %v2291
    %2421 = vmatprep.subr.bf16.mxu0 %v2294
    %2422 = vmatpush1.bf16.msra.mxu0 %v2293
    %2423 = vmatprep.subr.bf16.mxu0 %v2296
    %2424 = vmatpush1.bf16.msra.mxu0 %v2295
    %2425 = vmatprep.subr.bf16.mxu0 %v2298
    %2426 = vmatpush1.bf16.msra.mxu0 %v2297
    %2427 = vmatprep.subr.bf16.mxu0 %v2300
    %2428 = vmatpush1.bf16.msra.mxu0 %v2299
    %2429 = vmatprep.subr.bf16.mxu0 %v2302
    %2430 = vmatpush1.bf16.msra.mxu0 %v2301
    %2431 = vmatprep.subr.bf16.mxu0 %v2304
    %2432 = vmatpush1.bf16.msra.mxu0 %v2303
    %2433 = vmatprep.subr.bf16.mxu0 %v2306
    %2434 = vmatpush1.bf16.msra.mxu0 %v2305
    %2435 = vmatprep.subr.bf16.mxu0 %v2308
    %2436 = vmatpush1.bf16.msra.mxu0 %v2307
    %2437 = vmatprep.subr.bf16.mxu0 %v2310
    %2438 = vmatpush1.bf16.msra.mxu0 %v2309
    %2439 = vmatprep.subr.bf16.mxu0 %v2312
    %2440 = vmatpush1.bf16.msra.mxu0 %v2311
    %2441 = vmatprep.subr.bf16.mxu0 %v2314
    %2442 = vmatpush1.bf16.msra.mxu0 %v2313
    %2443 = vmatprep.subr.bf16.mxu0 %v2316
    %2444 = vmatpush1.bf16.msra.mxu0 %v2315
    %2445 = vmatprep.subr.bf16.mxu0 %v2318
    %2446 = vmatpush1.bf16.msra.mxu0 %v2317
    %2447 = vmatprep.subr.bf16.mxu0 %v2320
    %2448 = vmatpush1.bf16.msra.mxu0 %v2319
    %2449 = vmatprep.mubr.bf16.mxu0 %v2018
    %2450 = vmatmul.mubr.bf16.gmra.mrb[0].mxu0 %v2017
    %v2451 = vpop.f32.mrb[0].mxu0
    %v2452 = vadd.f32 %v2090, %v2451
    %v2453 = vpop.f32.mrb[0].mxu0
    %v2454 = vadd.f32 %v2094, %v2453
    %v2455 = vpop.f32.mrb[0].mxu0
    %v2456 = vadd.f32 %v2090, %v2455
    %v2457 = vpop.f32.mrb[0].mxu0
    %v2458 = vadd.f32 %v2094, %v2457
    %2459 = vdwg.mxu0
    %2460 = vmatprep.subr.bf16.mxu0 %v2322
    %2461 = vmatpush1.bf16.msra.mxu0 %v2321
    %2462 = vmatprep.subr.bf16.mxu0 %v2324
    %2463 = vmatpush1.bf16.msra.mxu0 %v2323
    %2464 = vmatprep.subr.bf16.mxu0 %v2326
    %2465 = vmatpush1.bf16.msra.mxu0 %v2325
    %2466 = vmatprep.subr.bf16.mxu0 %v2328
    %2467 = vmatpush1.bf16.msra.mxu0 %v2327
    %2468 = vmatprep.subr.bf16.mxu0 %v2330
    %2469 = vmatpush1.bf16.msra.mxu0 %v2329
    %2470 = vmatprep.subr.bf16.mxu0 %v2332
    %2471 = vmatpush1.bf16.msra.mxu0 %v2331
    %2472 = vmatprep.subr.bf16.mxu0 %v2334
    %2473 = vmatpush1.bf16.msra.mxu0 %v2333
    %2474 = vmatprep.subr.bf16.mxu0 %v2336
    %2475 = vmatpush1.bf16.msra.mxu0 %v2335
    %2476 = vmatprep.subr.bf16.mxu0 %v2338
    %2477 = vmatpush1.bf16.msra.mxu0 %v2337
    %2478 = vmatprep.subr.bf16.mxu0 %v2340
    %2479 = vmatpush1.bf16.msra.mxu0 %v2339
    %2480 = vmatprep.subr.bf16.mxu0 %v2342
    %2481 = vmatpush1.bf16.msra.mxu0 %v2341
    %2482 = vmatprep.subr.bf16.mxu0 %v2344
    %2483 = vmatpush1.bf16.msra.mxu0 %v2343
    %2484 = vmatprep.subr.bf16.mxu0 %v2346
    %2485 = vmatpush1.bf16.msra.mxu0 %v2345
    %2486 = vmatprep.subr.bf16.mxu0 %v2348
    %2487 = vmatpush1.bf16.msra.mxu0 %v2347
    %2488 = vmatprep.subr.bf16.mxu0 %v2350
    %2489 = vmatpush1.bf16.msra.mxu0 %v2349
    %2490 = vmatprep.subr.bf16.mxu0 %v2352
    %2491 = vmatpush1.bf16.msra.mxu0 %v2351
    %2492 = vmatprep.mubr.bf16.mxu0 %v2020
    %2493 = vmatmul.mubr.bf16.gmra.mrb[0].mxu0 %v2019
    %v2494 = vpop.f32.mrb[0].mxu0
    %v2495 = vadd.f32 %v2452, %v2494
    %v2496 = vpop.f32.mrb[0].mxu0
    %v2497 = vadd.f32 %v2454, %v2496
    %v2498 = vpop.f32.mrb[0].mxu0
    %v2499 = vadd.f32 %v2456, %v2498
    %v2500 = vpop.f32.mrb[0].mxu0
    %v2501 = vadd.f32 %v2458, %v2500
    %2502 = vdwg.mxu0
    %v2503 = vmax.f32 %v2495, 0.0
    %v2504 = vmax.f32 %v2497, 0.0
    %v2505 = vmax.f32 %v2499, 0.0
    %v2506 = vmax.f32 %v2501, 0.0
    %v2507 = vpack.c.bf16 %v2505, %v2503
    %v2508 = vpack.c.bf16 %v2506, %v2504
    %v2509 = vld [vmem:[#allocation8] sm:$0xf]
    %v2510 = vld [vmem:[#allocation8 + $0x4] sm:$0xf]
    %v2511 = vld [vmem:[#allocation8 + $0x8] sm:$0xf]
    %v2512 = vld [vmem:[#allocation8 + $0xc] sm:$0xf]
    %v2513 = vld [vmem:[#allocation8 + $0x10] sm:$0xf]
    %v2514 = vld [vmem:[#allocation8 + $0x14] sm:$0xf]
    %v2515 = vld [vmem:[#allocation8 + $0x18] sm:$0xf]
    %v2516 = vld [vmem:[#allocation8 + $0x1c] sm:$0xf]
    %v2517 = vld [vmem:[#allocation8 + $0x20] sm:$0xf]
    %v2518 = vld [vmem:[#allocation8 + $0x24] sm:$0xf]
    %v2519 = vld [vmem:[#allocation8 + $0x28] sm:$0xf]
    %v2520 = vld [vmem:[#allocation8 + $0x2c] sm:$0xf]
    %v2521 = vld [vmem:[#allocation8 + $0x30] sm:$0xf]
    %v2522 = vld [vmem:[#allocation8 + $0x34] sm:$0xf]
    %v2523 = vld [vmem:[#allocation8 + $0x38] sm:$0xf]
    %v2524 = vld [vmem:[#allocation8 + $0x3c] sm:$0xf]
    %v2525 = vld [vmem:[#allocation8 + $0x40] sm:$0xf]
    %v2526 = vld [vmem:[#allocation8 + $0x44] sm:$0xf]
    %v2527 = vld [vmem:[#allocation8 + $0x48] sm:$0xf]
    %v2528 = vld [vmem:[#allocation8 + $0x4c] sm:$0xf]
    %v2529 = vld [vmem:[#allocation8 + $0x50] sm:$0xf]
    %v2530 = vld [vmem:[#allocation8 + $0x54] sm:$0xf]
    %v2531 = vld [vmem:[#allocation8 + $0x58] sm:$0xf]
    %v2532 = vld [vmem:[#allocation8 + $0x5c] sm:$0xf]
    %v2533 = vld [vmem:[#allocation8 + $0x60] sm:$0xf]
    %v2534 = vld [vmem:[#allocation8 + $0x64] sm:$0xf]
    %v2535 = vld [vmem:[#allocation8 + $0x68] sm:$0xf]
    %v2536 = vld [vmem:[#allocation8 + $0x6c] sm:$0xf]
    %v2537 = vld [vmem:[#allocation8 + $0x70] sm:$0xf]
    %v2538 = vld [vmem:[#allocation8 + $0x74] sm:$0xf]
    %v2539 = vld [vmem:[#allocation8 + $0x78] sm:$0xf]
    %v2540 = vld [vmem:[#allocation8 + $0x7c] sm:$0xf]
    %v2541 = vld [vmem:[%s6] sm:$0x1]
    %v2543 = vlaneseq
    %v2544 = vshrl.u32 %v2543, 7
    %v2545 = vsub.s32 0, %v2544
    %v2546 = vrot.slane %v2541, %v2545
    %v2580 = vunpack.c.l.b16 %v2509
    %v2581 = vunpack.c.l.b16 %v2510
    %v2582 = vunpack.c.l.b16 %v2511
    %v2583 = vunpack.c.l.b16 %v2512
    %v2584 = vunpack.c.l.b16 %v2513
    %v2585 = vunpack.c.l.b16 %v2514
    %v2586 = vunpack.c.l.b16 %v2515
    %v2587 = vunpack.c.l.b16 %v2516
    %v2588 = vunpack.c.l.b16 %v2517
    %v2589 = vunpack.c.l.b16 %v2518
    %v2590 = vunpack.c.l.b16 %v2519
    %v2591 = vunpack.c.l.b16 %v2520
    %v2592 = vunpack.c.l.b16 %v2521
    %v2593 = vunpack.c.l.b16 %v2522
    %v2594 = vunpack.c.l.b16 %v2523
    %v2595 = vunpack.c.l.b16 %v2524
    %v2596 = vunpack.c.l.b16 %v2525
    %v2597 = vunpack.c.l.b16 %v2526
    %v2598 = vunpack.c.l.b16 %v2527
    %v2599 = vunpack.c.l.b16 %v2528
    %v2600 = vunpack.c.l.b16 %v2529
    %v2601 = vunpack.c.l.b16 %v2530
    %v2602 = vunpack.c.l.b16 %v2531
    %v2603 = vunpack.c.l.b16 %v2532
    %v2604 = vunpack.c.l.b16 %v2533
    %v2605 = vunpack.c.l.b16 %v2534
    %v2606 = vunpack.c.l.b16 %v2535
    %v2607 = vunpack.c.l.b16 %v2536
    %v2608 = vunpack.c.l.b16 %v2537
    %v2609 = vunpack.c.l.b16 %v2538
    %v2610 = vunpack.c.l.b16 %v2539
    %v2611 = vunpack.c.l.b16 %v2540
    %v2612 = vpack.c.b16 %v2581, %v2580
    %v2613 = vpack.c.b16 %v2583, %v2582
    %v2614 = vpack.c.b16 %v2585, %v2584
    %v2615 = vpack.c.b16 %v2587, %v2586
    %v2616 = vpack.c.b16 %v2589, %v2588
    %v2617 = vpack.c.b16 %v2591, %v2590
    %v2618 = vpack.c.b16 %v2593, %v2592
    %v2619 = vpack.c.b16 %v2595, %v2594
    %v2620 = vpack.c.b16 %v2597, %v2596
    %v2621 = vpack.c.b16 %v2599, %v2598
    %v2622 = vpack.c.b16 %v2601, %v2600
    %v2623 = vpack.c.b16 %v2603, %v2602
    %v2624 = vpack.c.b16 %v2605, %v2604
    %v2625 = vpack.c.b16 %v2607, %v2606
    %v2626 = vpack.c.b16 %v2609, %v2608
    %v2627 = vpack.c.b16 %v2611, %v2610
    %2644 = vmatprep.subr.bf16.mxu0 0
    %2645 = vmatpush1.bf16.msra.mxu0 %v2612
    %2646 = vmatprep.subr.bf16.mxu0 0
    %2647 = vmatpush1.bf16.msra.mxu0 %v2613
    %2648 = vmatprep.subr.bf16.mxu0 0
    %2649 = vmatpush1.bf16.msra.mxu0 %v2614
    %2650 = vmatprep.subr.bf16.mxu0 0
    %2651 = vmatpush1.bf16.msra.mxu0 %v2615
    %2652 = vmatprep.subr.bf16.mxu0 0
    %2653 = vmatpush1.bf16.msra.mxu0 %v2616
    %2654 = vmatprep.subr.bf16.mxu0 0
    %2655 = vmatpush1.bf16.msra.mxu0 %v2617
    %2656 = vmatprep.subr.bf16.mxu0 0
    %2657 = vmatpush1.bf16.msra.mxu0 %v2618
    %2658 = vmatprep.subr.bf16.mxu0 0
    %2659 = vmatpush1.bf16.msra.mxu0 %v2619
    %2660 = vmatprep.subr.bf16.mxu0 0
    %2661 = vmatpush1.bf16.msra.mxu0 %v2620
    %2662 = vmatprep.subr.bf16.mxu0 0
    %2663 = vmatpush1.bf16.msra.mxu0 %v2621
    %2664 = vmatprep.subr.bf16.mxu0 0
    %2665 = vmatpush1.bf16.msra.mxu0 %v2622
    %2666 = vmatprep.subr.bf16.mxu0 0
    %2667 = vmatpush1.bf16.msra.mxu0 %v2623
    %2668 = vmatprep.subr.bf16.mxu0 0
    %2669 = vmatpush1.bf16.msra.mxu0 %v2624
    %2670 = vmatprep.subr.bf16.mxu0 0
    %2671 = vmatpush1.bf16.msra.mxu0 %v2625
    %2672 = vmatprep.subr.bf16.mxu0 0
    %2673 = vmatpush1.bf16.msra.mxu0 %v2626
    %2674 = vmatprep.subr.bf16.mxu0 0
    %2675 = vmatpush1.bf16.msra.mxu0 %v2627
    %2676 = vmatprep.mubr.bf16.mxu0 %v2508
    %2677 = vmatmul.mubr.bf16.gmra.mrb[0].mxu0 %v2507
    %v2678 = vpop.f32.mrb[0].mxu0
    %v2679 = vadd.f32 %v2546, %v2678
    %v2680 = vpop.f32.mrb[0].mxu0
    %v2681 = vpop.f32.mrb[0].mxu0
    %v2682 = vadd.f32 %v2546, %v2681
    %v2683 = vpop.f32.mrb[0].mxu0
    %2684 = vdwg.mxu0
    %2685 = vst [vmem:[#allocation10] sm:$0xff] %v2679
    %2686 = vst [vmem:[#allocation10 + $0x8] sm:$0xff] %v2682
    // Predicated region
    $region46: #{tpu_custom_call.1} parent=1 // pred_check
      _
    $region47: #{tpu_custom_call.1} parent=1 // pred_check_branch
      %2688 = sbr.rel (0) target = $region49
    $region48: #{tpu_custom_call.1} parent=1 // pred_region
      %s2690 = ssub.s32 256, 256
      %2691 = vsyncadd [#allocation4], %s2690
      %s2692 = sshll.u32 [#allocation10], 4
      %s2693 = int_to_ptr.vmem [resolvable:$true] %s2692
      %2698 = dma.vmem_to_hbm [thread:$0]  %s2693, 256, %s7, [#allocation4], 128, 128, 8
    $region49: #{tpu_custom_call.1} parent=1 // pred_fallthru
      _
    // Predicated region
    $region50: #{tpu_custom_call.1} parent=1 // pred_check
      _
    $region51: #{tpu_custom_call.1} parent=1 // pred_check_branch
      %2700 = sbr.rel (0) target = $region53
    $region52: #{tpu_custom_call.1} parent=1 // pred_region
      %2701 = dma.done [#allocation4], 256
    $region53: #{tpu_custom_call.1} parent=1 // pred_fallthru
      _
    %2702 = vsyncpa [#allocation3], 1
    %2703 = vsyncpa [#allocation6], 1
    %2704 = vsyncpa [#allocation9], 1
    %2705 = vsyncpa [#allocation4], 1

</llo_original>
